<compile_context>
chip_gen: v7x
topology: tpu7x:2x2x1
jax: 0.10.0
libtpu: 0.0.40
codegen_flags: <defaults>
</compile_context>

<pallas_src>
import functools

import jax
import jax.numpy as jnp
from jax import lax
from jax.experimental import pallas as pl
from jax.experimental.pallas import tpu as pltpu

TEXT_DIM = 768
H1 = 512
H2 = 256
NUM_STEPS = 20
OUT_PAD = 128          # lane-dense padded output width; real data lives in cols [:NUM_STEPS]
MAX_TILE_B = 512       # batch-tile cap (working set ~10-15 MiB at TB=512; VMEM-safe on all gens)

DEFAULT_BETA_START = 1e-4
DEFAULT_BETA_END = 0.02
DEFAULT_GUIDANCE = 7.5

_GELU_C = 0.7978845608028654  # sqrt(2/pi)


def _act_dtype():
    """bf16 activations on chips with bf16 VPU/EUP (v6e/v7x); f32 on older (v2-v5) chips."""
    try:
        kind = jax.devices()[0].device_kind.lower()
    except Exception:  # pragma: no cover
        return jnp.bfloat16
    if any(t in kind for t in ("v2", "v3", "v4", "v5")):
        return jnp.float32
    return jnp.bfloat16


ACT_DTYPE = _act_dtype()


def _gelu_tanh(x):
    # tanh-approximation GELU (EUP tanh instead of a VALU erf polynomial).
    # TODO(synk): numerics differ from torch.nn.GELU() default (exact erf) at the ~1e-3 level.
    return 0.5 * x * (1.0 + jnp.tanh(_GELU_C * (x + 0.044715 * x * x * x)))


def _round_up(n, m):
    return ((n + m - 1) // m) * m


def _choose_tiling(batch):
    """Balanced row tiling: minimal padding, tile <= MAX_TILE_B, >=2 tiles when B > 8 (megacore)."""
    min_tiles = 2 if batch > 8 else 1
    num_tiles = max(min_tiles, pl.cdiv(batch, MAX_TILE_B))
    tile_b = _round_up(pl.cdiv(batch, num_tiles), 8)
    num_tiles = pl.cdiv(batch, tile_b)
    return tile_b, num_tiles


def scheduler_policy_kernel(
    # inputs
    x_ref,                      # (TB, TEXT_DIM) f32 batch tile
    w1c_ref, b1c_ref,           # (TEXT_DIM, 2*H1) bf16 , (1, 2*H1) f32  (beta||guid layer-1 fused)
    bw2_ref, bb2_ref,           # (H1, H2) bf16 , (1, H2) f32
    bw3_ref, bb3_ref,           # (H2, OUT_PAD) bf16 , (1, OUT_PAD) f32  (cols >= NUM_STEPS zero)
    gw2_ref, gb2_ref,
    gw3_ref, gb3_ref,
    defbetas_ref,               # (1, OUT_PAD) f32 resident default-betas linspace (padded cols 0)
    scales_ref,                 # (1, 2) f32 in SMEM: [beta_scale, guid_scale]
    # outputs
    out_ref,                    # (TB, 2*OUT_PAD) f32: [:, :128]=betas, [:, 128:]=guidance
    lp_ref,                     # (1, 1) f32 in SMEM: per-tile log-prob partial sum
    *, batch, tile_b, has_pad, act_dtype,
):
    i = pl.program_id(0)

    x = x_ref[...].astype(jnp.bfloat16)

    # Fused layer 1: a single MXU pass produces both streams' hidden-512 activations.
    h1 = jnp.dot(x, w1c_ref[...], preferred_element_type=jnp.float32) + b1c_ref[...]
    h1 = _gelu_tanh(h1.astype(act_dtype))

    def tail(h_bf16, w2_ref, b2_ref, w3_ref, b3_ref):
        h2 = jnp.dot(h_bf16, w2_ref[...], preferred_element_type=jnp.float32) + b2_ref[...]
        h2 = _gelu_tanh(h2.astype(act_dtype)).astype(jnp.bfloat16)
        o = jnp.dot(h2, w3_ref[...], preferred_element_type=jnp.float32) + b3_ref[...]
        return jnp.tanh(o)                      # f32 final tanh, lane-dense [TB, OUT_PAD]

    beta_mod = tail(h1[:, :H1].astype(jnp.bfloat16), bw2_ref, bb2_ref, bw3_ref, bb3_ref)
    guid_mod = tail(h1[:, H1:].astype(jnp.bfloat16), gw2_ref, gb2_ref, gw3_ref, gb3_ref)

    beta_scale = scales_ref[0, 0]
    guid_scale = scales_ref[0, 1]

    # single concatenated lane-dense output block
    out_ref[:, :OUT_PAD] = jnp.clip(defbetas_ref[...] + beta_scale * beta_mod, 5e-5, 0.05)
    out_ref[:, OUT_PAD:] = jnp.clip(DEFAULT_GUIDANCE + guid_scale * guid_mod, 3.0, 15.0)

    # fused log-prob partial sum: one combined log term, one column-masked reduction.
    log_term = jnp.log(jnp.abs(beta_mod) + 1e-8) + jnp.log(jnp.abs(guid_mod) + 1e-8)
    col = lax.broadcasted_iota(jnp.int32, (tile_b, OUT_PAD), 1)
    col_masked = jnp.where(col < NUM_STEPS, log_term, 0.0)
    lp_ref[0, 0] = jnp.sum(col_masked)

    if has_pad:  # static: padded rows only ever exist in the last tile
        @pl.when(i == pl.num_programs(0) - 1)
        def _():
            row = lax.broadcasted_iota(jnp.int32, (tile_b, OUT_PAD), 0) + i * tile_b
            lp_ref[0, 0] = jnp.sum(jnp.where(row < batch, col_masked, 0.0))


@jax.jit
def scheduler_policy_forward(x, params):
    """Returns (custom_betas [B, NUM_STEPS], custom_guidance [B, NUM_STEPS], log_prob scalar)."""
    B = x.shape[0]
    TB, num_tiles = _choose_tiling(B)
    B_pad = num_tiles * TB
    if B_pad != B:
        x = jnp.pad(x, ((0, B_pad - B), (0, 0)))

    resident = lambda i: (0, 0)
    kernel = functools.partial(
        scheduler_policy_kernel,
        batch=B, tile_b=TB, has_pad=(B_pad != B), act_dtype=ACT_DTYPE,
    )

    # advisory cost estimate so XLA schedules around the call
    flops = 2 * B_pad * (TEXT_DIM * 2 * H1 + 2 * H1 * H2 + 2 * H2 * OUT_PAD)
    weight_bytes = 2 * (TEXT_DIM * 2 * H1 + 2 * H1 * H2 + 2 * H2 * OUT_PAD)  # bf16
    cost = pl.CostEstimate(
        flops=flops,
        transcendentals=B_pad * (2 * H1 + 2 * H2 + 2 * OUT_PAD),
        bytes_accessed=weight_bytes + B_pad * TEXT_DIM * 4 + B_pad * 2 * OUT_PAD * 4,
    )

    grid_spec = pltpu.PrefetchScalarGridSpec(
        num_scalar_prefetch=0,
        grid=(num_tiles,),
        in_specs=[
            pl.BlockSpec((TB, TEXT_DIM), lambda i: (i, 0)),     # x: tiled on rows
            pl.BlockSpec((TEXT_DIM, 2 * H1), resident),         # fused W1 (bf16), resident
            pl.BlockSpec((1, 2 * H1), resident),
            pl.BlockSpec((H1, H2), resident),
            pl.BlockSpec((1, H2), resident),
            pl.BlockSpec((H2, OUT_PAD), resident),
            pl.BlockSpec((1, OUT_PAD), resident),
            pl.BlockSpec((H1, H2), resident),
            pl.BlockSpec((1, H2), resident),
            pl.BlockSpec((H2, OUT_PAD), resident),
            pl.BlockSpec((1, OUT_PAD), resident),
            pl.BlockSpec((1, OUT_PAD), resident),               # default betas (resident)
            pl.BlockSpec(memory_space=pltpu.MemorySpace.SMEM),  # merged scales (1, 2)
        ],
        out_specs=(
            pl.BlockSpec((TB, 2 * OUT_PAD), lambda i: (i, 0)),  # betas || guidance
            pl.BlockSpec((1, 1), lambda i: (i, 0), memory_space=pltpu.MemorySpace.SMEM),
        ),
    )

    out_shapes = (
        jax.ShapeDtypeStruct((B_pad, 2 * OUT_PAD), jnp.float32),
        jax.ShapeDtypeStruct((num_tiles, 1), jnp.float32),
    )

    out_p, lp_tiles = pl.pallas_call(
        kernel,
        out_shape=out_shapes,
        grid_spec=grid_spec,
        compiler_params=pltpu.CompilerParams(
            dimension_semantics=("parallel",),
            vmem_limit_bytes=48 * 1024 * 1024,
        ),
        cost_estimate=cost,
    )(
        x,
        params["w1c"], params["b1c"],
        params["bw2"], params["bb2"], params["bw3"], params["bb3"],
        params["gw2"], params["gb2"], params["gw3"], params["gb3"],
        params["default_betas"], params["scales"],
    )

    betas = out_p[:B, :NUM_STEPS]
    guidance = out_p[:B, OUT_PAD:OUT_PAD + NUM_STEPS]
    return betas, guidance, jnp.sum(lp_tiles)


def _xavier_normal(key, fan_in, fan_out, gain=0.5):
    std = gain * (2.0 / (fan_in + fan_out)) ** 0.5
    return std * jax.random.normal(key, (fan_in, fan_out), dtype=jnp.float32)


def init_params(key):
    """Pre-fused / pre-padded / bf16-cast parameter layout consumed by the kernel."""
    ks = jax.random.split(key, 12)

    def lin(kw, kb, fi, fo):
        w = _xavier_normal(kw, fi, fo)
        b = jax.random.uniform(kb, (1, fo), jnp.float32, -0.1, 0.1)
        return w, b

    bw1, bb1 = lin(ks[0], ks[1], TEXT_DIM, H1)
    bw2, bb2 = lin(ks[2], ks[3], H1, H2)
    bw3, bb3 = lin(ks[4], ks[5], H2, NUM_STEPS)
    gw1, gb1 = lin(ks[6], ks[7], TEXT_DIM, H1)
    gw2, gb2 = lin(ks[8], ks[9], H1, H2)
    gw3, gb3 = lin(ks[10], ks[11], H2, NUM_STEPS)

    pad3 = ((0, 0), (0, OUT_PAD - NUM_STEPS))
    default_betas = jnp.pad(
        jnp.linspace(DEFAULT_BETA_START, DEFAULT_BETA_END, NUM_STEPS,
                     dtype=jnp.float32)[None, :], pad3)
    return dict(
        # layer-1 fused (beta || guidance), weights in bf16, biases in f32
        w1c=jnp.concatenate([bw1, gw1], axis=1).astype(jnp.bfloat16),
        b1c=jnp.concatenate([bb1, gb1], axis=1),
        bw2=bw2.astype(jnp.bfloat16), bb2=bb2,
        gw2=gw2.astype(jnp.bfloat16), gb2=gb2,
        # layer-3 zero-padded to lane width 128
        bw3=jnp.pad(bw3, pad3).astype(jnp.bfloat16), bb3=jnp.pad(bb3, pad3),
        gw3=jnp.pad(gw3, pad3).astype(jnp.bfloat16), gb3=jnp.pad(gb3, pad3),
        # precomputed default-betas linspace (lane-dense, padded cols zero)
        default_betas=default_betas,
        # merged modification scales [beta_scale, guidance_scale]
        scales=jnp.array([[0.5, 2.0]], dtype=jnp.float32),
    )


def _reference_forward(x, p):
    # Pure-JAX reference (eval mode) with the same bf16-weight / act-dtype / f32-accumulate
    # discipline as the kernel.
    h1 = _gelu_tanh(
        (jnp.dot(x.astype(jnp.bfloat16), p["w1c"],
                 preferred_element_type=jnp.float32) + p["b1c"]).astype(ACT_DTYPE))

    def tail(h, w2, b2, w3, b3):
        h2 = _gelu_tanh(
            (jnp.dot(h.astype(jnp.bfloat16), w2,
                     preferred_element_type=jnp.float32) + b2).astype(ACT_DTYPE))
        o = jnp.dot(h2.astype(jnp.bfloat16), w3,
                    preferred_element_type=jnp.float32) + b3
        return jnp.tanh(o.astype(jnp.float32))[:, :NUM_STEPS]

    bm = tail(h1[:, :H1], p["bw2"], p["bb2"], p["bw3"], p["bb3"])
    gm = tail(h1[:, H1:], p["gw2"], p["gb2"], p["gw3"], p["gb3"])
    db = p["default_betas"][:, :NUM_STEPS]
    cb = jnp.clip(db + p["scales"][0, 0] * bm, 5e-5, 0.05)
    cg = jnp.clip(DEFAULT_GUIDANCE + p["scales"][0, 1] * gm, 3.0, 15.0)
    lp = jnp.sum(jnp.log(jnp.abs(bm) + 1e-8)) + jnp.sum(jnp.log(jnp.abs(gm) + 1e-8))
    return cb, cg, lp


if __name__ == "__main__":
    # TODO(synk): training-mode dropout / Gaussian noise injection and the 5%-probability debug
    # print are stochastic training-only behaviors; this deterministic eval kernel omits them.
    key = jax.random.PRNGKey(0)
    k_param, k_x = jax.random.split(key)

    params = init_params(k_param)
    batch = 2
    x = jax.random.normal(k_x, (batch, TEXT_DIM), dtype=jnp.float32)

    betas, guidance, log_prob = scheduler_policy_forward(x, params)
    jax.block_until_ready((betas, guidance, log_prob))

    # sanity check against pure-JAX reference (same bf16-weight / act-dtype numerics).
    # Tolerances account for bf16 activation math + tanh-approx GELU (~1e-3 level).
    rb, rg, rlp = _reference_forward(x, params)
    assert betas.shape == (batch, NUM_STEPS)
    assert guidance.shape == (batch, NUM_STEPS)
    assert jnp.allclose(betas, rb, atol=2e-3), "betas mismatch"
    assert jnp.allclose(guidance, rg, atol=2e-2), "guidance mismatch"
    assert jnp.allclose(log_prob, rlp, rtol=5e-3, atol=0.5), "log_prob mismatch"

    print("KERNEL_OK")
</pallas_src>

<mosaic_0001>
module attributes {stable_mosaic.version = 11 : i64} {
  func.func @scheduler_policy_kernel(%arg0: i32, %arg1: memref<8x768xf32, #tpu.memory_space<vmem>>, %arg2: memref<768x1024xbf16, #tpu.memory_space<vmem>>, %arg3: memref<1x1024xf32, #tpu.memory_space<vmem>>, %arg4: memref<512x256xbf16, #tpu.memory_space<vmem>>, %arg5: memref<1x256xf32, #tpu.memory_space<vmem>>, %arg6: memref<256x128xbf16, #tpu.memory_space<vmem>>, %arg7: memref<1x128xf32, #tpu.memory_space<vmem>>, %arg8: memref<512x256xbf16, #tpu.memory_space<vmem>>, %arg9: memref<1x256xf32, #tpu.memory_space<vmem>>, %arg10: memref<256x128xbf16, #tpu.memory_space<vmem>>, %arg11: memref<1x128xf32, #tpu.memory_space<vmem>>, %arg12: memref<1x128xf32, #tpu.memory_space<vmem>>, %arg13: memref<1x2xf32, #tpu.memory_space<smem>>, %arg14: memref<8x256xf32, #tpu.memory_space<vmem>>, %arg15: memref<1x1xf32, #tpu.memory_space<smem>>) attributes {dimension_semantics = [#tpu.dimension_semantics<parallel>], iteration_bounds = array<i64: 1>, scalar_prefetch = 0 : i64, scratch_operands = 0 : i64, tpu.core_type = #tpu.core_type<tc>, window_params = [{transform_indices = @transform_0, window_bounds = array<i64: 8, 768>}, {pipeline_mode = #tpu.pipeline_mode<synchronous>, transform_indices = @transform_1, window_bounds = array<i64: 768, 1024>}, {pipeline_mode = #tpu.pipeline_mode<synchronous>, transform_indices = @transform_2, window_bounds = array<i64: 1, 1024>}, {pipeline_mode = #tpu.pipeline_mode<synchronous>, transform_indices = @transform_3, window_bounds = array<i64: 512, 256>}, {pipeline_mode = #tpu.pipeline_mode<synchronous>, transform_indices = @transform_4, window_bounds = array<i64: 1, 256>}, {pipeline_mode = #tpu.pipeline_mode<synchronous>, transform_indices = @transform_5, window_bounds = array<i64: 256, 128>}, {pipeline_mode = #tpu.pipeline_mode<synchronous>, transform_indices = @transform_6, window_bounds = array<i64: 1, 128>}, {pipeline_mode = #tpu.pipeline_mode<synchronous>, transform_indices = @transform_7, window_bounds = array<i64: 512, 256>}, {pipeline_mode = #tpu.pipeline_mode<synchronous>, transform_indices = @transform_8, window_bounds = array<i64: 1, 256>}, {pipeline_mode = #tpu.pipeline_mode<synchronous>, transform_indices = @transform_9, window_bounds = array<i64: 256, 128>}, {pipeline_mode = #tpu.pipeline_mode<synchronous>, transform_indices = @transform_10, window_bounds = array<i64: 1, 128>}, {pipeline_mode = #tpu.pipeline_mode<synchronous>, transform_indices = @transform_11, window_bounds = array<i64: 1, 128>}, {transform_indices = @transform_12, window_bounds = array<i64: 1, 2>}, {transform_indices = @transform_13, window_bounds = array<i64: 8, 256>}, {transform_indices = @transform_14, window_bounds = array<i64: 1, 1>}]} {
    %c0 = arith.constant 0 : index
    %c0_0 = arith.constant 0 : index
    %0 = vector.load %arg1[%c0, %c0_0] : memref<8x768xf32, #tpu.memory_space<vmem>>, vector<8x768xf32>
    %1 = arith.truncf %0 : vector<8x768xf32> to vector<8x768xbf16>
    %c0_1 = arith.constant 0 : index
    %c0_2 = arith.constant 0 : index
    %2 = vector.load %arg2[%c0_1, %c0_2] : memref<768x1024xbf16, #tpu.memory_space<vmem>>, vector<768x1024xbf16>
    %cst = arith.constant dense<0.000000e+00> : vector<8x1024xf32>
    %3 = tpu.matmul %1, %2, %cst {dimension_numbers = #tpu.dot_dimension_numbers<[1], [0], [0], [1], [0, 0, 1, 1], [], []>} : vector<8x768xbf16>, vector<768x1024xbf16>, vector<8x1024xf32> -> vector<8x1024xf32>
    %c0_3 = arith.constant 0 : index
    %c0_4 = arith.constant 0 : index
    %4 = vector.load %arg3[%c0_3, %c0_4] : memref<1x1024xf32, #tpu.memory_space<vmem>>, vector<1x1024xf32>
    %5 = vector.broadcast %4 : vector<1x1024xf32> to vector<8x1024xf32>
    %6 = arith.addf %3, %5 : vector<8x1024xf32>
    %7 = arith.truncf %6 : vector<8x1024xf32> to vector<8x1024xbf16>
    %cst_5 = arith.constant 5.000000e-01 : bf16
    %8 = vector.broadcast %cst_5 : bf16 to vector<8x1024xbf16>
    %9 = arith.mulf %8, %7 : vector<8x1024xbf16>
    %cst_6 = arith.constant 4.467770e-02 : bf16
    %10 = vector.broadcast %cst_6 : bf16 to vector<8x1024xbf16>
    %11 = arith.mulf %10, %7 : vector<8x1024xbf16>
    %12 = arith.mulf %11, %7 : vector<8x1024xbf16>
    %13 = arith.mulf %12, %7 : vector<8x1024xbf16>
    %14 = arith.addf %7, %13 : vector<8x1024xbf16>
    %cst_7 = arith.constant 7.968750e-01 : bf16
    %15 = vector.broadcast %cst_7 : bf16 to vector<8x1024xbf16>
    %16 = arith.mulf %15, %14 : vector<8x1024xbf16>
    %17 = math.tanh %16 : vector<8x1024xbf16>
    %cst_8 = arith.constant 1.000000e+00 : bf16
    %18 = vector.broadcast %cst_8 : bf16 to vector<8x1024xbf16>
    %19 = arith.addf %18, %17 : vector<8x1024xbf16>
    %20 = arith.mulf %9, %19 : vector<8x1024xbf16>
    %21 = vector.extract_strided_slice %20 {offsets = [0, 0], sizes = [8, 512], strides = [1, 1]} : vector<8x1024xbf16> to vector<8x512xbf16>
    %c0_9 = arith.constant 0 : index
    %c0_10 = arith.constant 0 : index
    %22 = vector.load %arg4[%c0_9, %c0_10] : memref<512x256xbf16, #tpu.memory_space<vmem>>, vector<512x256xbf16>
    %cst_11 = arith.constant dense<0.000000e+00> : vector<8x256xf32>
    %23 = tpu.matmul %21, %22, %cst_11 {dimension_numbers = #tpu.dot_dimension_numbers<[1], [0], [0], [1], [0, 0, 1, 1], [], []>} : vector<8x512xbf16>, vector<512x256xbf16>, vector<8x256xf32> -> vector<8x256xf32>
    %c0_12 = arith.constant 0 : index
    %c0_13 = arith.constant 0 : index
    %24 = vector.load %arg5[%c0_12, %c0_13] : memref<1x256xf32, #tpu.memory_space<vmem>>, vector<1x256xf32>
    %25 = vector.broadcast %24 : vector<1x256xf32> to vector<8x256xf32>
    %26 = arith.addf %23, %25 : vector<8x256xf32>
    %27 = arith.truncf %26 : vector<8x256xf32> to vector<8x256xbf16>
    %cst_14 = arith.constant 5.000000e-01 : bf16
    %28 = vector.broadcast %cst_14 : bf16 to vector<8x256xbf16>
    %29 = arith.mulf %28, %27 : vector<8x256xbf16>
    %cst_15 = arith.constant 4.467770e-02 : bf16
    %30 = vector.broadcast %cst_15 : bf16 to vector<8x256xbf16>
    %31 = arith.mulf %30, %27 : vector<8x256xbf16>
    %32 = arith.mulf %31, %27 : vector<8x256xbf16>
    %33 = arith.mulf %32, %27 : vector<8x256xbf16>
    %34 = arith.addf %27, %33 : vector<8x256xbf16>
    %cst_16 = arith.constant 7.968750e-01 : bf16
    %35 = vector.broadcast %cst_16 : bf16 to vector<8x256xbf16>
    %36 = arith.mulf %35, %34 : vector<8x256xbf16>
    %37 = math.tanh %36 : vector<8x256xbf16>
    %cst_17 = arith.constant 1.000000e+00 : bf16
    %38 = vector.broadcast %cst_17 : bf16 to vector<8x256xbf16>
    %39 = arith.addf %38, %37 : vector<8x256xbf16>
    %40 = arith.mulf %29, %39 : vector<8x256xbf16>
    %c0_18 = arith.constant 0 : index
    %c0_19 = arith.constant 0 : index
    %41 = vector.load %arg6[%c0_18, %c0_19] : memref<256x128xbf16, #tpu.memory_space<vmem>>, vector<256x128xbf16>
    %cst_20 = arith.constant dense<0.000000e+00> : vector<8x128xf32>
    %42 = tpu.matmul %40, %41, %cst_20 {dimension_numbers = #tpu.dot_dimension_numbers<[1], [0], [0], [1], [0, 0, 1, 1], [], []>} : vector<8x256xbf16>, vector<256x128xbf16>, vector<8x128xf32> -> vector<8x128xf32>
    %c0_21 = arith.constant 0 : index
    %c0_22 = arith.constant 0 : index
    %43 = vector.load %arg7[%c0_21, %c0_22] : memref<1x128xf32, #tpu.memory_space<vmem>>, vector<1x128xf32>
    %44 = vector.broadcast %43 : vector<1x128xf32> to vector<8x128xf32>
    %45 = arith.addf %42, %44 : vector<8x128xf32>
    %46 = math.tanh %45 : vector<8x128xf32>
    %47 = vector.extract_strided_slice %20 {offsets = [0, 512], sizes = [8, 512], strides = [1, 1]} : vector<8x1024xbf16> to vector<8x512xbf16>
    %c0_23 = arith.constant 0 : index
    %c0_24 = arith.constant 0 : index
    %48 = vector.load %arg8[%c0_23, %c0_24] : memref<512x256xbf16, #tpu.memory_space<vmem>>, vector<512x256xbf16>
    %cst_25 = arith.constant dense<0.000000e+00> : vector<8x256xf32>
    %49 = tpu.matmul %47, %48, %cst_25 {dimension_numbers = #tpu.dot_dimension_numbers<[1], [0], [0], [1], [0, 0, 1, 1], [], []>} : vector<8x512xbf16>, vector<512x256xbf16>, vector<8x256xf32> -> vector<8x256xf32>
    %c0_26 = arith.constant 0 : index
    %c0_27 = arith.constant 0 : index
    %50 = vector.load %arg9[%c0_26, %c0_27] : memref<1x256xf32, #tpu.memory_space<vmem>>, vector<1x256xf32>
    %51 = vector.broadcast %50 : vector<1x256xf32> to vector<8x256xf32>
    %52 = arith.addf %49, %51 : vector<8x256xf32>
    %53 = arith.truncf %52 : vector<8x256xf32> to vector<8x256xbf16>
    %cst_28 = arith.constant 5.000000e-01 : bf16
    %54 = vector.broadcast %cst_28 : bf16 to vector<8x256xbf16>
    %55 = arith.mulf %54, %53 : vector<8x256xbf16>
    %cst_29 = arith.constant 4.467770e-02 : bf16
    %56 = vector.broadcast %cst_29 : bf16 to vector<8x256xbf16>
    %57 = arith.mulf %56, %53 : vector<8x256xbf16>
    %58 = arith.mulf %57, %53 : vector<8x256xbf16>
    %59 = arith.mulf %58, %53 : vector<8x256xbf16>
    %60 = arith.addf %53, %59 : vector<8x256xbf16>
    %cst_30 = arith.constant 7.968750e-01 : bf16
    %61 = vector.broadcast %cst_30 : bf16 to vector<8x256xbf16>
    %62 = arith.mulf %61, %60 : vector<8x256xbf16>
    %63 = math.tanh %62 : vector<8x256xbf16>
    %cst_31 = arith.constant 1.000000e+00 : bf16
    %64 = vector.broadcast %cst_31 : bf16 to vector<8x256xbf16>
    %65 = arith.addf %64, %63 : vector<8x256xbf16>
    %66 = arith.mulf %55, %65 : vector<8x256xbf16>
    %c0_32 = arith.constant 0 : index
    %c0_33 = arith.constant 0 : index
    %67 = vector.load %arg10[%c0_32, %c0_33] : memref<256x128xbf16, #tpu.memory_space<vmem>>, vector<256x128xbf16>
    %cst_34 = arith.constant dense<0.000000e+00> : vector<8x128xf32>
    %68 = tpu.matmul %66, %67, %cst_34 {dimension_numbers = #tpu.dot_dimension_numbers<[1], [0], [0], [1], [0, 0, 1, 1], [], []>} : vector<8x256xbf16>, vector<256x128xbf16>, vector<8x128xf32> -> vector<8x128xf32>
    %c0_35 = arith.constant 0 : index
    %c0_36 = arith.constant 0 : index
    %69 = vector.load %arg11[%c0_35, %c0_36] : memref<1x128xf32, #tpu.memory_space<vmem>>, vector<1x128xf32>
    %70 = vector.broadcast %69 : vector<1x128xf32> to vector<8x128xf32>
    %71 = arith.addf %68, %70 : vector<8x128xf32>
    %72 = math.tanh %71 : vector<8x128xf32>
    %c0_37 = arith.constant 0 : index
    %c0_38 = arith.constant 0 : index
    %73 = memref.load %arg13[%c0_37, %c0_38] : memref<1x2xf32, #tpu.memory_space<smem>>
    %c0_39 = arith.constant 0 : index
    %c1 = arith.constant 1 : index
    %74 = memref.load %arg13[%c0_39, %c1] : memref<1x2xf32, #tpu.memory_space<smem>>
    %c0_40 = arith.constant 0 : index
    %c0_41 = arith.constant 0 : index
    %75 = vector.load %arg12[%c0_40, %c0_41] : memref<1x128xf32, #tpu.memory_space<vmem>>, vector<1x128xf32>
    %76 = vector.broadcast %73 : f32 to vector<8x128xf32>
    %77 = arith.mulf %76, %46 : vector<8x128xf32>
    %78 = vector.broadcast %75 : vector<1x128xf32> to vector<8x128xf32>
    %79 = arith.addf %78, %77 : vector<8x128xf32>
    %cst_42 = arith.constant 5.000000e-05 : f32
    %cst_43 = arith.constant 5.000000e-02 : f32
    %80 = vector.broadcast %cst_42 : f32 to vector<8x128xf32>
    %81 = arith.maximumf %80, %79 : vector<8x128xf32>
    %82 = vector.broadcast %cst_43 : f32 to vector<8x128xf32>
    %83 = arith.minimumf %82, %81 : vector<8x128xf32>
    %c0_44 = arith.constant 0 : index
    %c0_45 = arith.constant 0 : index
    %84 = vector.load %arg14[%c0_44, %c0_45] : memref<8x256xf32, #tpu.memory_space<vmem>>, vector<8x128xf32>
    tpu.vector_store %arg14[%c0_44, %c0_45], %83 {strides = array<i32>} : memref<8x256xf32, #tpu.memory_space<vmem>>, vector<8x128xf32>,
    %85 = vector.broadcast %74 : f32 to vector<8x128xf32>
    %86 = arith.mulf %85, %72 : vector<8x128xf32>
    %cst_46 = arith.constant 7.500000e+00 : f32
    %87 = vector.broadcast %cst_46 : f32 to vector<8x128xf32>
    %88 = arith.addf %87, %86 : vector<8x128xf32>
    %cst_47 = arith.constant 3.000000e+00 : f32
    %cst_48 = arith.constant 1.500000e+01 : f32
    %89 = vector.broadcast %cst_47 : f32 to vector<8x128xf32>
    %90 = arith.maximumf %89, %88 : vector<8x128xf32>
    %91 = vector.broadcast %cst_48 : f32 to vector<8x128xf32>
    %92 = arith.minimumf %91, %90 : vector<8x128xf32>
    %c0_49 = arith.constant 0 : index
    %c128 = arith.constant 128 : index
    %93 = vector.load %arg14[%c0_49, %c128] : memref<8x256xf32, #tpu.memory_space<vmem>>, vector<8x128xf32>
    tpu.vector_store %arg14[%c0_49, %c128], %92 {strides = array<i32>} : memref<8x256xf32, #tpu.memory_space<vmem>>, vector<8x128xf32>,
    %94 = math.absf %46 : vector<8x128xf32>
    %cst_50 = arith.constant 9.99999993E-9 : f32
    %95 = vector.broadcast %cst_50 : f32 to vector<8x128xf32>
    %96 = arith.addf %94, %95 : vector<8x128xf32>
    %97 = math.log %96 : vector<8x128xf32>
    %98 = math.absf %72 : vector<8x128xf32>
    %cst_51 = arith.constant 9.99999993E-9 : f32
    %99 = vector.broadcast %cst_51 : f32 to vector<8x128xf32>
    %100 = arith.addf %98, %99 : vector<8x128xf32>
    %101 = math.log %100 : vector<8x128xf32>
    %102 = arith.addf %97, %101 : vector<8x128xf32>
    %103 = tpu.iota {dimensions = array<i32: 1>} : vector<8x128xi32>
    %c20_i32 = arith.constant 20 : i32
    %104 = vector.broadcast %c20_i32 : i32 to vector<8x128xi32>
    %105 = arith.cmpi slt, %103, %104 : vector<8x128xi32>
    %cst_52 = arith.constant 0.000000e+00 : f32
    %106 = vector.broadcast %cst_52 : f32 to vector<8x128xf32>
    %107 = arith.select %105, %102, %106 : vector<8x128xi1>, vector<8x128xf32>
    %108 = vector.shape_cast %107 : vector<8x128xf32> to vector<1x8x128xf32>
    %cst_53 = arith.constant dense<0.000000e+00> : vector<1xf32>
    %109 = vector.multi_reduction <add>, %108, %cst_53 [1, 2] : vector<1x8x128xf32> to vector<1xf32>
    %110 = vector.shape_cast %109 : vector<1xf32> to vector<1x1x1xf32>
    %111 = vector.extract %110[0, 0, 0] : f32 from vector<1x1x1xf32>
    %c0_54 = arith.constant 0 : index
    %c0_55 = arith.constant 0 : index
    %112 = memref.load %arg15[%c0_54, %c0_55] : memref<1x1xf32, #tpu.memory_space<smem>>
    memref.store %111, %arg15[%c0_54, %c0_55] : memref<1x1xf32, #tpu.memory_space<smem>>
    %c0_i32 = arith.constant 0 : i32
    %113 = arith.cmpi eq, %arg0, %c0_i32 : i32
    %114 = arith.extui %113 : i1 to i32
    %c0_i32_56 = arith.constant 0 : i32
    %115 = arith.cmpi ne, %114, %c0_i32_56 : i32
    scf.if %115 {
      %116 = tpu.iota {dimensions = array<i32: 0>} : vector<8x128xi32>
      %c8_i32 = arith.constant 8 : i32
      %117 = arith.muli %arg0, %c8_i32 : i32
      %118 = vector.broadcast %117 : i32 to vector<8x128xi32>
      %119 = arith.addi %116, %118 : vector<8x128xi32>
      %c2_i32 = arith.constant 2 : i32
      %120 = vector.broadcast %c2_i32 : i32 to vector<8x128xi32>
      %121 = arith.cmpi slt, %119, %120 : vector<8x128xi32>
      %cst_57 = arith.constant 0.000000e+00 : f32
      %122 = vector.broadcast %cst_57 : f32 to vector<8x128xf32>
      %123 = arith.select %121, %107, %122 : vector<8x128xi1>, vector<8x128xf32>
      %124 = vector.shape_cast %123 : vector<8x128xf32> to vector<1x8x128xf32>
      %cst_58 = arith.constant dense<0.000000e+00> : vector<1xf32>
      %125 = vector.multi_reduction <add>, %124, %cst_58 [1, 2] : vector<1x8x128xf32> to vector<1xf32>
      %126 = vector.shape_cast %125 : vector<1xf32> to vector<1x1x1xf32>
      %127 = vector.extract %126[0, 0, 0] : f32 from vector<1x1x1xf32>
      %c0_59 = arith.constant 0 : index
      %c0_60 = arith.constant 0 : index
      %128 = memref.load %arg15[%c0_59, %c0_60] : memref<1x1xf32, #tpu.memory_space<smem>>
      memref.store %127, %arg15[%c0_59, %c0_60] : memref<1x1xf32, #tpu.memory_space<smem>>
    } else {
    }
    return
  }
  func.func @transform_0(%arg0: i32) -> (i32, i32) {
    %c0_i32 = arith.constant 0 : i32
    %c0_i32_0 = arith.constant 0 : i32
    return %arg0, %c0_i32 : i32, i32
  }
  func.func @transform_1(%arg0: i32) -> (i32, i32) {
    %c0_i32 = arith.constant 0 : i32
    %c0_i32_0 = arith.constant 0 : i32
    %c0_i32_1 = arith.constant 0 : i32
    return %c0_i32, %c0_i32_0 : i32, i32
  }
  func.func @transform_2(%arg0: i32) -> (i32, i32) {
    %c0_i32 = arith.constant 0 : i32
    %c0_i32_0 = arith.constant 0 : i32
    %c0_i32_1 = arith.constant 0 : i32
    return %c0_i32, %c0_i32_0 : i32, i32
  }
  func.func @transform_3(%arg0: i32) -> (i32, i32) {
    %c0_i32 = arith.constant 0 : i32
    %c0_i32_0 = arith.constant 0 : i32
    %c0_i32_1 = arith.constant 0 : i32
    return %c0_i32, %c0_i32_0 : i32, i32
  }
  func.func @transform_4(%arg0: i32) -> (i32, i32) {
    %c0_i32 = arith.constant 0 : i32
    %c0_i32_0 = arith.constant 0 : i32
    %c0_i32_1 = arith.constant 0 : i32
    return %c0_i32, %c0_i32_0 : i32, i32
  }
  func.func @transform_5(%arg0: i32) -> (i32, i32) {
    %c0_i32 = arith.constant 0 : i32
    %c0_i32_0 = arith.constant 0 : i32
    %c0_i32_1 = arith.constant 0 : i32
    return %c0_i32, %c0_i32_0 : i32, i32
  }
  func.func @transform_6(%arg0: i32) -> (i32, i32) {
    %c0_i32 = arith.constant 0 : i32
    %c0_i32_0 = arith.constant 0 : i32
    %c0_i32_1 = arith.constant 0 : i32
    return %c0_i32, %c0_i32_0 : i32, i32
  }
  func.func @transform_7(%arg0: i32) -> (i32, i32) {
    %c0_i32 = arith.constant 0 : i32
    %c0_i32_0 = arith.constant 0 : i32
    %c0_i32_1 = arith.constant 0 : i32
    return %c0_i32, %c0_i32_0 : i32, i32
  }
  func.func @transform_8(%arg0: i32) -> (i32, i32) {
    %c0_i32 = arith.constant 0 : i32
    %c0_i32_0 = arith.constant 0 : i32
    %c0_i32_1 = arith.constant 0 : i32
    return %c0_i32, %c0_i32_0 : i32, i32
  }
  func.func @transform_9(%arg0: i32) -> (i32, i32) {
    %c0_i32 = arith.constant 0 : i32
    %c0_i32_0 = arith.constant 0 : i32
    %c0_i32_1 = arith.constant 0 : i32
    return %c0_i32, %c0_i32_0 : i32, i32
  }
  func.func @transform_10(%arg0: i32) -> (i32, i32) {
    %c0_i32 = arith.constant 0 : i32
    %c0_i32_0 = arith.constant 0 : i32
    %c0_i32_1 = arith.constant 0 : i32
    return %c0_i32, %c0_i32_0 : i32, i32
  }
  func.func @transform_11(%arg0: i32) -> (i32, i32) {
    %c0_i32 = arith.constant 0 : i32
    %c0_i32_0 = arith.constant 0 : i32
    %c0_i32_1 = arith.constant 0 : i32
    return %c0_i32, %c0_i32_0 : i32, i32
  }
  func.func @transform_12(%arg0: i32) -> (i32, i32) {
    %c0_i32 = arith.constant 0 : i32
    %c0_i32_0 = arith.constant 0 : i32
    %c0_i32_1 = arith.constant 0 : i32
    return %c0_i32, %c0_i32_0 : i32, i32
  }
  func.func @transform_13(%arg0: i32) -> (i32, i32) {
    %c0_i32 = arith.constant 0 : i32
    %c0_i32_0 = arith.constant 0 : i32
    return %arg0, %c0_i32 : i32, i32
  }
  func.func @transform_14(%arg0: i32) -> (i32, i32) {
    %c0_i32 = arith.constant 0 : i32
    %c0_i32_0 = arith.constant 0 : i32
    return %arg0, %c0_i32 : i32, i32
  }
}

</mosaic_0001>

<llo_original>
// kernel: scheduler_policy_forward.1
$region0: #{scheduler_policy_forward.1}
  #allocation0 [shape = 'u32[]', space=smem, size = 0x4, offset = 0x4, fixed_abs, tag = 'smem constant byte address 0x4 - core index']
  #allocation1 [shape = 'u32[144,128]{1,0:T(1,128)}', space=vmem, size = 0x12000, scoped, tag = 'internal scratch']
  %s0 = inlined_call_operand.vmem [shape: f32[8,768], index: 0, kind: input, shape index: {}]
  %s1 = inlined_call_operand.hbm [shape: bf16[768,1024], index: 1, kind: input, shape index: {}]
  %s2 = inlined_call_operand.hbm [shape: f32[1,1024], index: 2, kind: input, shape index: {}]
  %s3 = inlined_call_operand.hbm [shape: bf16[512,256], index: 3, kind: input, shape index: {}]
  %s4 = inlined_call_operand.hbm [shape: f32[1,256], index: 4, kind: input, shape index: {}]
  %s5 = inlined_call_operand.hbm [shape: bf16[256,128], index: 5, kind: input, shape index: {}]
  %s6 = inlined_call_operand.hbm [shape: f32[1,128], index: 6, kind: input, shape index: {}]
  %s7 = inlined_call_operand.hbm [shape: bf16[512,256], index: 7, kind: input, shape index: {}]
  %s8 = inlined_call_operand.hbm [shape: f32[1,256], index: 8, kind: input, shape index: {}]
  %s9 = inlined_call_operand.hbm [shape: bf16[256,128], index: 9, kind: input, shape index: {}]
  %s10 = inlined_call_operand.hbm [shape: f32[1,128], index: 10, kind: input, shape index: {}]
  %s11 = inlined_call_operand.hbm [shape: f32[1,128], index: 11, kind: input, shape index: {}]
  %s12 = inlined_call_operand.hbm [shape: f32[1,2], index: 12, kind: input, shape index: {}]
  %s13 = inlined_call_operand.vmem [shape: f32[8,256], index: 13, kind: output, shape index: {0}]
  %s14 = inlined_call_operand.hbm [shape: f32[1,1], index: 14, kind: output, shape index: {1}]
  %15 = xla_tuple %s13, %s14
  %s16 = sld [smem:[#allocation0]]
  $region122: #{scheduler_policy_forward.1} parent=0
    _
  %s18 = ssub.s32 1, %s16
  %s19 = scalar_select 0, %s18, %s16
  $region1: #{scheduler_policy_forward.1} parent=0
    #allocation2 [shape = 'u8[1572864]{0}', space=vmem, size = 0x180000, scoped, tag = 'input window, operand 1, single buffered']
    #allocation3 [shape = 's32[1]{0}', space=sflag, size = 0x4, scoped, tag = 'scoped memory for scheduler_policy_forward.1']
    #allocation4 [shape = 's32[1]{0}', space=sflag, size = 0x4, scoped, tag = 'scoped memory for scheduler_policy_forward.1']
    #allocation5 [shape = 's32[1]{0}', space=sflag, size = 0x4, scoped, tag = 'scoped memory for scheduler_policy_forward.1']
    #allocation6 [shape = 'u8[4096]{0}', space=vmem, size = 0x1000, scoped, tag = 'input window, operand 2, single buffered']
    #allocation7 [shape = 's32[1]{0}', space=sflag, size = 0x4, scoped, tag = 'scoped memory for scheduler_policy_forward.1']
    #allocation8 [shape = 'u8[262144]{0}', space=vmem, size = 0x40000, scoped, tag = 'input window, operand 3, single buffered']
    #allocation9 [shape = 'u8[1024]{0}', space=vmem, size = 0x400, scoped, tag = 'input window, operand 4, single buffered']
    #allocation10 [shape = 's32[1]{0}', space=sflag, size = 0x4, scoped, tag = 'scoped memory for scheduler_policy_forward.1']
    #allocation11 [shape = 'u8[65536]{0}', space=vmem, size = 0x10000, scoped, tag = 'input window, operand 5, single buffered']
    #allocation12 [shape = 'u8[512]{0}', space=vmem, size = 0x400, scoped, tag = 'input window, operand 6, single buffered']
    #allocation13 [shape = 's32[1]{0}', space=sflag, size = 0x4, scoped, tag = 'scoped memory for scheduler_policy_forward.1']
    #allocation14 [shape = 'u8[262144]{0}', space=vmem, size = 0x40000, scoped, tag = 'input window, operand 7, single buffered']
    #allocation15 [shape = 'u8[1024]{0}', space=vmem, size = 0x400, scoped, tag = 'input window, operand 8, single buffered']
    #allocation16 [shape = 's32[1]{0}', space=sflag, size = 0x4, scoped, tag = 'scoped memory for scheduler_policy_forward.1']
    #allocation17 [shape = 'u8[65536]{0}', space=vmem, size = 0x10000, scoped, tag = 'input window, operand 9, single buffered']
    #allocation18 [shape = 'u8[512]{0}', space=vmem, size = 0x400, scoped, tag = 'input window, operand 10, single buffered']
    #allocation19 [shape = 's32[1]{0}', space=sflag, size = 0x4, scoped, tag = 'scoped memory for scheduler_policy_forward.1']
    #allocation20 [shape = 'u8[512]{0}', space=vmem, size = 0x400, scoped, tag = 'input window, operand 11, single buffered']
    #allocation21 [shape = 'u8[512]{0}', space=smem, size = 0x200, scoped, tag = 'input window, operand 12, single buffered']
    #allocation22 [shape = 'u8[512]{0}', space=smem, size = 0x200, scoped, tag = 'output window, operand 1, single buffered']
    %20 = vsyncpa [#allocation3], 0
    %21 = vsyncpa [#allocation7], 0
    %22 = vsyncpa [#allocation10], 0
    %23 = vsyncpa [#allocation13], 0
    %24 = vsyncpa [#allocation16], 0
    %25 = vsyncpa [#allocation19], 0
    %26 = vsyncpa [#allocation4], 0
    %27 = vsyncpa [#allocation5], 0
    // Predicated region
    $region2: #{scheduler_policy_forward.1} parent=1 // pred_check
      _
    $region3: #{scheduler_policy_forward.1} parent=1 // pred_check_branch
      %29 = sbr.rel (0) target = $region5
    $region4: #{scheduler_policy_forward.1} parent=1 // pred_region
      _
    $region5: #{scheduler_policy_forward.1} parent=1 // pred_fallthru
      _
    // Predicated region
    $region6: #{scheduler_policy_forward.1} parent=1 // pred_check
      _
    $region7: #{scheduler_policy_forward.1} parent=1 // pred_check_branch
      %31 = sbr.rel (0) target = $region9
    $region8: #{scheduler_policy_forward.1} parent=1 // pred_region
      %s33 = ssub.s32 49152, 49152
      %34 = vsyncadd [#allocation3], %s33
      %s35 = sshll.u32 [#allocation2], 4
      %s36 = int_to_ptr.vmem [resolvable:$true] %s35
      %41 = dma.hbm_to_vmem [thread:$0]  %s1, 49152, %s36, [#allocation3], 512, 512, 32
    $region9: #{scheduler_policy_forward.1} parent=1 // pred_fallthru
      _
    // Predicated region
    $region10: #{scheduler_policy_forward.1} parent=1 // pred_check
      _
    $region11: #{scheduler_policy_forward.1} parent=1 // pred_check_branch
      %43 = sbr.rel (0) target = $region13
    $region12: #{scheduler_policy_forward.1} parent=1 // pred_region
      %s45 = ssub.s32 128, 128
      %46 = vsyncadd [#allocation7], %s45
      %s48 = sshll.u32 [#allocation6], 4
      %s49 = int_to_ptr.vmem [resolvable:$true] %s48
      %51 = dma.hbm_to_vmem [thread:$0]  %s2, 128, %s49, [#allocation7]
    $region13: #{scheduler_policy_forward.1} parent=1 // pred_fallthru
      _
    // Predicated region
    $region14: #{scheduler_policy_forward.1} parent=1 // pred_check
      _
    $region15: #{scheduler_policy_forward.1} parent=1 // pred_check_branch
      %53 = sbr.rel (0) target = $region17
    $region16: #{scheduler_policy_forward.1} parent=1 // pred_region
      %s55 = ssub.s32 8192, 8192
      %56 = vsyncadd [#allocation7], %s55
      %s57 = sshll.u32 [#allocation8], 4
      %s58 = int_to_ptr.vmem [resolvable:$true] %s57
      %63 = dma.hbm_to_vmem [thread:$0]  %s3, 8192, %s58, [#allocation7], 128, 128, 8
    $region17: #{scheduler_policy_forward.1} parent=1 // pred_fallthru
      _
    // Predicated region
    $region18: #{scheduler_policy_forward.1} parent=1 // pred_check
      _
    $region19: #{scheduler_policy_forward.1} parent=1 // pred_check_branch
      %65 = sbr.rel (0) target = $region21
    $region20: #{scheduler_policy_forward.1} parent=1 // pred_region
      %s67 = ssub.s32 32, 32
      %68 = vsyncadd [#allocation10], %s67
      %s70 = sshll.u32 [#allocation9], 4
      %s71 = int_to_ptr.vmem [resolvable:$true] %s70
      %73 = dma.hbm_to_vmem [thread:$0]  %s4, 32, %s71, [#allocation10]
    $region21: #{scheduler_policy_forward.1} parent=1 // pred_fallthru
      _
    // Predicated region
    $region22: #{scheduler_policy_forward.1} parent=1 // pred_check
      _
    $region23: #{scheduler_policy_forward.1} parent=1 // pred_check_branch
      %75 = sbr.rel (0) target = $region25
    $region24: #{scheduler_policy_forward.1} parent=1 // pred_region
      %s77 = ssub.s32 2048, 2048
      %78 = vsyncadd [#allocation10], %s77
      %s79 = sshll.u32 [#allocation11], 4
      %s80 = int_to_ptr.vmem [resolvable:$true] %s79
      %85 = dma.hbm_to_vmem [thread:$0]  %s5, 2048, %s80, [#allocation10], 64, 64, 4
    $region25: #{scheduler_policy_forward.1} parent=1 // pred_fallthru
      _
    // Predicated region
    $region26: #{scheduler_policy_forward.1} parent=1 // pred_check
      _
    $region27: #{scheduler_policy_forward.1} parent=1 // pred_check_branch
      %87 = sbr.rel (0) target = $region29
    $region28: #{scheduler_policy_forward.1} parent=1 // pred_region
      %s89 = ssub.s32 16, 16
      %90 = vsyncadd [#allocation13], %s89
      %s92 = sshll.u32 [#allocation12], 4
      %s93 = int_to_ptr.vmem [resolvable:$true] %s92
      %95 = dma.hbm_to_vmem [thread:$0]  %s6, 16, %s93, [#allocation13]
    $region29: #{scheduler_policy_forward.1} parent=1 // pred_fallthru
      _
    // Predicated region
    $region30: #{scheduler_policy_forward.1} parent=1 // pred_check
      _
    $region31: #{scheduler_policy_forward.1} parent=1 // pred_check_branch
      %97 = sbr.rel (0) target = $region33
    $region32: #{scheduler_policy_forward.1} parent=1 // pred_region
      %s99 = ssub.s32 8192, 8192
      %100 = vsyncadd [#allocation13], %s99
      %s101 = sshll.u32 [#allocation14], 4
      %s102 = int_to_ptr.vmem [resolvable:$true] %s101
      %107 = dma.hbm_to_vmem [thread:$0]  %s7, 8192, %s102, [#allocation13], 128, 128, 8
    $region33: #{scheduler_policy_forward.1} parent=1 // pred_fallthru
      _
    // Predicated region
    $region34: #{scheduler_policy_forward.1} parent=1 // pred_check
      _
    $region35: #{scheduler_policy_forward.1} parent=1 // pred_check_branch
      %109 = sbr.rel (0) target = $region37
    $region36: #{scheduler_policy_forward.1} parent=1 // pred_region
      %s111 = ssub.s32 32, 32
      %112 = vsyncadd [#allocation16], %s111
      %s114 = sshll.u32 [#allocation15], 4
      %s115 = int_to_ptr.vmem [resolvable:$true] %s114
      %117 = dma.hbm_to_vmem [thread:$0]  %s8, 32, %s115, [#allocation16]
    $region37: #{scheduler_policy_forward.1} parent=1 // pred_fallthru
      _
    // Predicated region
    $region38: #{scheduler_policy_forward.1} parent=1 // pred_check
      _
    $region39: #{scheduler_policy_forward.1} parent=1 // pred_check_branch
      %119 = sbr.rel (0) target = $region41
    $region40: #{scheduler_policy_forward.1} parent=1 // pred_region
      %s121 = ssub.s32 2048, 2048
      %122 = vsyncadd [#allocation16], %s121
      %s123 = sshll.u32 [#allocation17], 4
      %s124 = int_to_ptr.vmem [resolvable:$true] %s123
      %129 = dma.hbm_to_vmem [thread:$0]  %s9, 2048, %s124, [#allocation16], 64, 64, 4
    $region41: #{scheduler_policy_forward.1} parent=1 // pred_fallthru
      _
    // Predicated region
    $region42: #{scheduler_policy_forward.1} parent=1 // pred_check
      _
    $region43: #{scheduler_policy_forward.1} parent=1 // pred_check_branch
      %131 = sbr.rel (0) target = $region45
    $region44: #{scheduler_policy_forward.1} parent=1 // pred_region
      %s133 = ssub.s32 16, 16
      %134 = vsyncadd [#allocation19], %s133
      %s136 = sshll.u32 [#allocation18], 4
      %s137 = int_to_ptr.vmem [resolvable:$true] %s136
      %139 = dma.hbm_to_vmem [thread:$0]  %s10, 16, %s137, [#allocation19]
    $region45: #{scheduler_policy_forward.1} parent=1 // pred_fallthru
      _
    // Predicated region
    $region46: #{scheduler_policy_forward.1} parent=1 // pred_check
      _
    $region47: #{scheduler_policy_forward.1} parent=1 // pred_check_branch
      %141 = sbr.rel (0) target = $region49
    $region48: #{scheduler_policy_forward.1} parent=1 // pred_region
      %s143 = ssub.s32 16, 16
      %144 = vsyncadd [#allocation19], %s143
      %s146 = sshll.u32 [#allocation20], 4
      %s147 = int_to_ptr.vmem [resolvable:$true] %s146
      %149 = dma.hbm_to_vmem [thread:$0]  %s11, 16, %s147, [#allocation19]
    $region49: #{scheduler_policy_forward.1} parent=1 // pred_fallthru
      _
    // Predicated region
    $region50: #{scheduler_policy_forward.1} parent=1 // pred_check
      _
    $region51: #{scheduler_policy_forward.1} parent=1 // pred_check_branch
      %151 = sbr.rel (0) target = $region53
    $region52: #{scheduler_policy_forward.1} parent=1 // pred_region
      %s153 = ssub.s32 16, 16
      %154 = vsyncadd [#allocation4], %s153
      %157 = dma.hbm_to_smem %s12, 16, [#allocation21], [#allocation4]
    $region53: #{scheduler_policy_forward.1} parent=1 // pred_fallthru
      _
    // Predicated region
    $region54: #{scheduler_policy_forward.1} parent=1 // pred_check
      _
    $region55: #{scheduler_policy_forward.1} parent=1 // pred_check_branch
      %159 = sbr.rel (0) target = $region57
    $region56: #{scheduler_policy_forward.1} parent=1 // pred_region
      %160 = dma.done [#allocation3], 49152
    $region57: #{scheduler_policy_forward.1} parent=1 // pred_fallthru
      _
    // Predicated region
    $region58: #{scheduler_policy_forward.1} parent=1 // pred_check
      _
    $region59: #{scheduler_policy_forward.1} parent=1 // pred_check_branch
      %162 = sbr.rel (0) target = $region61
    $region60: #{scheduler_policy_forward.1} parent=1 // pred_region
      %163 = dma.done [#allocation7], 128
    $region61: #{scheduler_policy_forward.1} parent=1 // pred_fallthru
      _
    // Predicated region
    $region62: #{scheduler_policy_forward.1} parent=1 // pred_check
      _
    $region63: #{scheduler_policy_forward.1} parent=1 // pred_check_branch
      %165 = sbr.rel (0) target = $region65
    $region64: #{scheduler_policy_forward.1} parent=1 // pred_region
      %166 = dma.done [#allocation7], 8192
    $region65: #{scheduler_policy_forward.1} parent=1 // pred_fallthru
      _
    // Predicated region
    $region66: #{scheduler_policy_forward.1} parent=1 // pred_check
      _
    $region67: #{scheduler_policy_forward.1} parent=1 // pred_check_branch
      %168 = sbr.rel (0) target = $region69
    $region68: #{scheduler_policy_forward.1} parent=1 // pred_region
      %169 = dma.done [#allocation10], 32
    $region69: #{scheduler_policy_forward.1} parent=1 // pred_fallthru
      _
    // Predicated region
    $region70: #{scheduler_policy_forward.1} parent=1 // pred_check
      _
    $region71: #{scheduler_policy_forward.1} parent=1 // pred_check_branch
      %171 = sbr.rel (0) target = $region73
    $region72: #{scheduler_policy_forward.1} parent=1 // pred_region
      %172 = dma.done [#allocation10], 2048
    $region73: #{scheduler_policy_forward.1} parent=1 // pred_fallthru
      _
    // Predicated region
    $region74: #{scheduler_policy_forward.1} parent=1 // pred_check
      _
    $region75: #{scheduler_policy_forward.1} parent=1 // pred_check_branch
      %174 = sbr.rel (0) target = $region77
    $region76: #{scheduler_policy_forward.1} parent=1 // pred_region
      %175 = dma.done [#allocation13], 16
    $region77: #{scheduler_policy_forward.1} parent=1 // pred_fallthru
      _
    // Predicated region
    $region78: #{scheduler_policy_forward.1} parent=1 // pred_check
      _
    $region79: #{scheduler_policy_forward.1} parent=1 // pred_check_branch
      %177 = sbr.rel (0) target = $region81
    $region80: #{scheduler_policy_forward.1} parent=1 // pred_region
      %178 = dma.done [#allocation13], 8192
    $region81: #{scheduler_policy_forward.1} parent=1 // pred_fallthru
      _
    // Predicated region
    $region82: #{scheduler_policy_forward.1} parent=1 // pred_check
      _
    $region83: #{scheduler_policy_forward.1} parent=1 // pred_check_branch
      %180 = sbr.rel (0) target = $region85
    $region84: #{scheduler_policy_forward.1} parent=1 // pred_region
      %181 = dma.done [#allocation16], 32
    $region85: #{scheduler_policy_forward.1} parent=1 // pred_fallthru
      _
    // Predicated region
    $region86: #{scheduler_policy_forward.1} parent=1 // pred_check
      _
    $region87: #{scheduler_policy_forward.1} parent=1 // pred_check_branch
      %183 = sbr.rel (0) target = $region89
    $region88: #{scheduler_policy_forward.1} parent=1 // pred_region
      %184 = dma.done [#allocation16], 2048
    $region89: #{scheduler_policy_forward.1} parent=1 // pred_fallthru
      _
    // Predicated region
    $region90: #{scheduler_policy_forward.1} parent=1 // pred_check
      _
    $region91: #{scheduler_policy_forward.1} parent=1 // pred_check_branch
      %186 = sbr.rel (0) target = $region93
    $region92: #{scheduler_policy_forward.1} parent=1 // pred_region
      %187 = dma.done [#allocation19], 16
    $region93: #{scheduler_policy_forward.1} parent=1 // pred_fallthru
      _
    // Predicated region
    $region94: #{scheduler_policy_forward.1} parent=1 // pred_check
      _
    $region95: #{scheduler_policy_forward.1} parent=1 // pred_check_branch
      %189 = sbr.rel (0) target = $region97
    $region96: #{scheduler_policy_forward.1} parent=1 // pred_region
      %190 = dma.done [#allocation19], 16
    $region97: #{scheduler_policy_forward.1} parent=1 // pred_fallthru
      _
    // Predicated region
    $region98: #{scheduler_policy_forward.1} parent=1 // pred_check
      _
    $region99: #{scheduler_policy_forward.1} parent=1 // pred_check_branch
      %192 = sbr.rel (0) target = $region101
    $region100: #{scheduler_policy_forward.1} parent=1 // pred_region
      %193 = dma.done [#allocation4], 16
    $region101: #{scheduler_policy_forward.1} parent=1 // pred_fallthru
      _
    %194 = sfence
    %v200 = vld [vmem:[%s0] sm:$0xff]
    %v201 = vld [vmem:[%s0 + $0x8] sm:$0xff]
    %v202 = vld [vmem:[%s0 + $0x10] sm:$0xff]
    %v203 = vld [vmem:[%s0 + $0x18] sm:$0xff]
    %v204 = vld [vmem:[%s0 + $0x20] sm:$0xff]
    %v205 = vld [vmem:[%s0 + $0x28] sm:$0xff]
    %v206 = vpack.c.bf16 %v200, %v200
    %v207 = vpack.c.bf16 %v201, %v201
    %v208 = vpack.c.bf16 %v202, %v202
    %v209 = vpack.c.bf16 %v203, %v203
    %v210 = vpack.c.bf16 %v204, %v204
    %v211 = vpack.c.bf16 %v205, %v205
    %v212 = vld [vmem:[#allocation2] sm:$0xff]
    %v213 = vld [vmem:[#allocation2 + $0x8] sm:$0xff]
    %v214 = vld [vmem:[#allocation2 + $0x10] sm:$0xff]
    %v215 = vld [vmem:[#allocation2 + $0x18] sm:$0xff]
    %v216 = vld [vmem:[#allocation2 + $0x20] sm:$0xff]
    %v217 = vld [vmem:[#allocation2 + $0x28] sm:$0xff]
    %v218 = vld [vmem:[#allocation2 + $0x30] sm:$0xff]
    %v219 = vld [vmem:[#allocation2 + $0x38] sm:$0xff]
    %v220 = vld [vmem:[#allocation2 + $0x40] sm:$0xff]
    %v221 = vld [vmem:[#allocation2 + $0x48] sm:$0xff]
    %v222 = vld [vmem:[#allocation2 + $0x50] sm:$0xff]
    %v223 = vld [vmem:[#allocation2 + $0x58] sm:$0xff]
    %v224 = vld [vmem:[#allocation2 + $0x60] sm:$0xff]
    %v225 = vld [vmem:[#allocation2 + $0x68] sm:$0xff]
    %v226 = vld [vmem:[#allocation2 + $0x70] sm:$0xff]
    %v227 = vld [vmem:[#allocation2 + $0x78] sm:$0xff]
    %v228 = vld [vmem:[#allocation2 + $0x80] sm:$0xff]
    %v229 = vld [vmem:[#allocation2 + $0x88] sm:$0xff]
    %v230 = vld [vmem:[#allocation2 + $0x90] sm:$0xff]
    %v231 = vld [vmem:[#allocation2 + $0x98] sm:$0xff]
    %v232 = vld [vmem:[#allocation2 + $0xa0] sm:$0xff]
    %v233 = vld [vmem:[#allocation2 + $0xa8] sm:$0xff]
    %v234 = vld [vmem:[#allocation2 + $0xb0] sm:$0xff]
    %v235 = vld [vmem:[#allocation2 + $0xb8] sm:$0xff]
    %v236 = vld [vmem:[#allocation2 + $0xc0] sm:$0xff]
    %v237 = vld [vmem:[#allocation2 + $0xc8] sm:$0xff]
    %v238 = vld [vmem:[#allocation2 + $0xd0] sm:$0xff]
    %v239 = vld [vmem:[#allocation2 + $0xd8] sm:$0xff]
    %v240 = vld [vmem:[#allocation2 + $0xe0] sm:$0xff]
    %v241 = vld [vmem:[#allocation2 + $0xe8] sm:$0xff]
    %v242 = vld [vmem:[#allocation2 + $0xf0] sm:$0xff]
    %v243 = vld [vmem:[#allocation2 + $0xf8] sm:$0xff]
    %v244 = vld [vmem:[#allocation2 + $0x100] sm:$0xff]
    %v245 = vld [vmem:[#allocation2 + $0x108] sm:$0xff]
    %v246 = vld [vmem:[#allocation2 + $0x110] sm:$0xff]
    %v247 = vld [vmem:[#allocation2 + $0x118] sm:$0xff]
    %v248 = vld [vmem:[#allocation2 + $0x120] sm:$0xff]
    %v249 = vld [vmem:[#allocation2 + $0x128] sm:$0xff]
    %v250 = vld [vmem:[#allocation2 + $0x130] sm:$0xff]
    %v251 = vld [vmem:[#allocation2 + $0x138] sm:$0xff]
    %v252 = vld [vmem:[#allocation2 + $0x140] sm:$0xff]
    %v253 = vld [vmem:[#allocation2 + $0x148] sm:$0xff]
    %v254 = vld [vmem:[#allocation2 + $0x150] sm:$0xff]
    %v255 = vld [vmem:[#allocation2 + $0x158] sm:$0xff]
    %v256 = vld [vmem:[#allocation2 + $0x160] sm:$0xff]
    %v257 = vld [vmem:[#allocation2 + $0x168] sm:$0xff]
    %v258 = vld [vmem:[#allocation2 + $0x170] sm:$0xff]
    %v259 = vld [vmem:[#allocation2 + $0x178] sm:$0xff]
    %v260 = vld [vmem:[#allocation2 + $0x180] sm:$0xff]
    %v261 = vld [vmem:[#allocation2 + $0x188] sm:$0xff]
    %v262 = vld [vmem:[#allocation2 + $0x190] sm:$0xff]
    %v263 = vld [vmem:[#allocation2 + $0x198] sm:$0xff]
    %v264 = vld [vmem:[#allocation2 + $0x1a0] sm:$0xff]
    %v265 = vld [vmem:[#allocation2 + $0x1a8] sm:$0xff]
    %v266 = vld [vmem:[#allocation2 + $0x1b0] sm:$0xff]
    %v267 = vld [vmem:[#allocation2 + $0x1b8] sm:$0xff]
    %v268 = vld [vmem:[#allocation2 + $0x1c0] sm:$0xff]
    %v269 = vld [vmem:[#allocation2 + $0x1c8] sm:$0xff]
    %v270 = vld [vmem:[#allocation2 + $0x1d0] sm:$0xff]
    %v271 = vld [vmem:[#allocation2 + $0x1d8] sm:$0xff]
    %v272 = vld [vmem:[#allocation2 + $0x1e0] sm:$0xff]
    %v273 = vld [vmem:[#allocation2 + $0x1e8] sm:$0xff]
    %v274 = vld [vmem:[#allocation2 + $0x1f0] sm:$0xff]
    %v275 = vld [vmem:[#allocation2 + $0x1f8] sm:$0xff]
    %v276 = vld [vmem:[#allocation2 + $0x200] sm:$0xff]
    %v277 = vld [vmem:[#allocation2 + $0x208] sm:$0xff]
    %v278 = vld [vmem:[#allocation2 + $0x210] sm:$0xff]
    %v279 = vld [vmem:[#allocation2 + $0x218] sm:$0xff]
    %v280 = vld [vmem:[#allocation2 + $0x220] sm:$0xff]
    %v281 = vld [vmem:[#allocation2 + $0x228] sm:$0xff]
    %v282 = vld [vmem:[#allocation2 + $0x230] sm:$0xff]
    %v283 = vld [vmem:[#allocation2 + $0x238] sm:$0xff]
    %v284 = vld [vmem:[#allocation2 + $0x240] sm:$0xff]
    %v285 = vld [vmem:[#allocation2 + $0x248] sm:$0xff]
    %v286 = vld [vmem:[#allocation2 + $0x250] sm:$0xff]
    %v287 = vld [vmem:[#allocation2 + $0x258] sm:$0xff]
    %v288 = vld [vmem:[#allocation2 + $0x260] sm:$0xff]
    %v289 = vld [vmem:[#allocation2 + $0x268] sm:$0xff]
    %v290 = vld [vmem:[#allocation2 + $0x270] sm:$0xff]
    %v291 = vld [vmem:[#allocation2 + $0x278] sm:$0xff]
    %v292 = vld [vmem:[#allocation2 + $0x280] sm:$0xff]
    %v293 = vld [vmem:[#allocation2 + $0x288] sm:$0xff]
    %v294 = vld [vmem:[#allocation2 + $0x290] sm:$0xff]
    %v295 = vld [vmem:[#allocation2 + $0x298] sm:$0xff]
    %v296 = vld [vmem:[#allocation2 + $0x2a0] sm:$0xff]
    %v297 = vld [vmem:[#allocation2 + $0x2a8] sm:$0xff]
    %v298 = vld [vmem:[#allocation2 + $0x2b0] sm:$0xff]
    %v299 = vld [vmem:[#allocation2 + $0x2b8] sm:$0xff]
    %v300 = vld [vmem:[#allocation2 + $0x2c0] sm:$0xff]
    %v301 = vld [vmem:[#allocation2 + $0x2c8] sm:$0xff]
    %v302 = vld [vmem:[#allocation2 + $0x2d0] sm:$0xff]
    %v303 = vld [vmem:[#allocation2 + $0x2d8] sm:$0xff]
    %v304 = vld [vmem:[#allocation2 + $0x2e0] sm:$0xff]
    %v305 = vld [vmem:[#allocation2 + $0x2e8] sm:$0xff]
    %v306 = vld [vmem:[#allocation2 + $0x2f0] sm:$0xff]
    %v307 = vld [vmem:[#allocation2 + $0x2f8] sm:$0xff]
    %v308 = vld [vmem:[#allocation2 + $0x300] sm:$0xff]
    %v309 = vld [vmem:[#allocation2 + $0x308] sm:$0xff]
    %v310 = vld [vmem:[#allocation2 + $0x310] sm:$0xff]
    %v311 = vld [vmem:[#allocation2 + $0x318] sm:$0xff]
    %v312 = vld [vmem:[#allocation2 + $0x320] sm:$0xff]
    %v313 = vld [vmem:[#allocation2 + $0x328] sm:$0xff]
    %v314 = vld [vmem:[#allocation2 + $0x330] sm:$0xff]
    %v315 = vld [vmem:[#allocation2 + $0x338] sm:$0xff]
    %v316 = vld [vmem:[#allocation2 + $0x340] sm:$0xff]
    %v317 = vld [vmem:[#allocation2 + $0x348] sm:$0xff]
    %v318 = vld [vmem:[#allocation2 + $0x350] sm:$0xff]
    %v319 = vld [vmem:[#allocation2 + $0x358] sm:$0xff]
    %v320 = vld [vmem:[#allocation2 + $0x360] sm:$0xff]
    %v321 = vld [vmem:[#allocation2 + $0x368] sm:$0xff]
    %v322 = vld [vmem:[#allocation2 + $0x370] sm:$0xff]
    %v323 = vld [vmem:[#allocation2 + $0x378] sm:$0xff]
    %v324 = vld [vmem:[#allocation2 + $0x380] sm:$0xff]
    %v325 = vld [vmem:[#allocation2 + $0x388] sm:$0xff]
    %v326 = vld [vmem:[#allocation2 + $0x390] sm:$0xff]
    %v327 = vld [vmem:[#allocation2 + $0x398] sm:$0xff]
    %v328 = vld [vmem:[#allocation2 + $0x3a0] sm:$0xff]
    %v329 = vld [vmem:[#allocation2 + $0x3a8] sm:$0xff]
    %v330 = vld [vmem:[#allocation2 + $0x3b0] sm:$0xff]
    %v331 = vld [vmem:[#allocation2 + $0x3b8] sm:$0xff]
    %v332 = vld [vmem:[#allocation2 + $0x3c0] sm:$0xff]
    %v333 = vld [vmem:[#allocation2 + $0x3c8] sm:$0xff]
    %v334 = vld [vmem:[#allocation2 + $0x3d0] sm:$0xff]
    %v335 = vld [vmem:[#allocation2 + $0x3d8] sm:$0xff]
    %v336 = vld [vmem:[#allocation2 + $0x3e0] sm:$0xff]
    %v337 = vld [vmem:[#allocation2 + $0x3e8] sm:$0xff]
    %v338 = vld [vmem:[#allocation2 + $0x3f0] sm:$0xff]
    %v339 = vld [vmem:[#allocation2 + $0x3f8] sm:$0xff]
    %v340 = vld [vmem:[#allocation2 + $0x400] sm:$0xff]
    %v341 = vld [vmem:[#allocation2 + $0x408] sm:$0xff]
    %v342 = vld [vmem:[#allocation2 + $0x410] sm:$0xff]
    %v343 = vld [vmem:[#allocation2 + $0x418] sm:$0xff]
    %v344 = vld [vmem:[#allocation2 + $0x420] sm:$0xff]
    %v345 = vld [vmem:[#allocation2 + $0x428] sm:$0xff]
    %v346 = vld [vmem:[#allocation2 + $0x430] sm:$0xff]
    %v347 = vld [vmem:[#allocation2 + $0x438] sm:$0xff]
    %v348 = vld [vmem:[#allocation2 + $0x440] sm:$0xff]
    %v349 = vld [vmem:[#allocation2 + $0x448] sm:$0xff]
    %v350 = vld [vmem:[#allocation2 + $0x450] sm:$0xff]
    %v351 = vld [vmem:[#allocation2 + $0x458] sm:$0xff]
    %v352 = vld [vmem:[#allocation2 + $0x460] sm:$0xff]
    %v353 = vld [vmem:[#allocation2 + $0x468] sm:$0xff]
    %v354 = vld [vmem:[#allocation2 + $0x470] sm:$0xff]
    %v355 = vld [vmem:[#allocation2 + $0x478] sm:$0xff]
    %v356 = vld [vmem:[#allocation2 + $0x480] sm:$0xff]
    %v357 = vld [vmem:[#allocation2 + $0x488] sm:$0xff]
    %v358 = vld [vmem:[#allocation2 + $0x490] sm:$0xff]
    %v359 = vld [vmem:[#allocation2 + $0x498] sm:$0xff]
    %v360 = vld [vmem:[#allocation2 + $0x4a0] sm:$0xff]
    %v361 = vld [vmem:[#allocation2 + $0x4a8] sm:$0xff]
    %v362 = vld [vmem:[#allocation2 + $0x4b0] sm:$0xff]
    %v363 = vld [vmem:[#allocation2 + $0x4b8] sm:$0xff]
    %v364 = vld [vmem:[#allocation2 + $0x4c0] sm:$0xff]
    %v365 = vld [vmem:[#allocation2 + $0x4c8] sm:$0xff]
    %v366 = vld [vmem:[#allocation2 + $0x4d0] sm:$0xff]
    %v367 = vld [vmem:[#allocation2 + $0x4d8] sm:$0xff]
    %v368 = vld [vmem:[#allocation2 + $0x4e0] sm:$0xff]
    %v369 = vld [vmem:[#allocation2 + $0x4e8] sm:$0xff]
    %v370 = vld [vmem:[#allocation2 + $0x4f0] sm:$0xff]
    %v371 = vld [vmem:[#allocation2 + $0x4f8] sm:$0xff]
    %v372 = vld [vmem:[#allocation2 + $0x500] sm:$0xff]
    %v373 = vld [vmem:[#allocation2 + $0x508] sm:$0xff]
    %v374 = vld [vmem:[#allocation2 + $0x510] sm:$0xff]
    %v375 = vld [vmem:[#allocation2 + $0x518] sm:$0xff]
    %v376 = vld [vmem:[#allocation2 + $0x520] sm:$0xff]
    %v377 = vld [vmem:[#allocation2 + $0x528] sm:$0xff]
    %v378 = vld [vmem:[#allocation2 + $0x530] sm:$0xff]
    %v379 = vld [vmem:[#allocation2 + $0x538] sm:$0xff]
    %v380 = vld [vmem:[#allocation2 + $0x540] sm:$0xff]
    %v381 = vld [vmem:[#allocation2 + $0x548] sm:$0xff]
    %v382 = vld [vmem:[#allocation2 + $0x550] sm:$0xff]
    %v383 = vld [vmem:[#allocation2 + $0x558] sm:$0xff]
    %v384 = vld [vmem:[#allocation2 + $0x560] sm:$0xff]
    %v385 = vld [vmem:[#allocation2 + $0x568] sm:$0xff]
    %v386 = vld [vmem:[#allocation2 + $0x570] sm:$0xff]
    %v387 = vld [vmem:[#allocation2 + $0x578] sm:$0xff]
    %v388 = vld [vmem:[#allocation2 + $0x580] sm:$0xff]
    %v389 = vld [vmem:[#allocation2 + $0x588] sm:$0xff]
    %v390 = vld [vmem:[#allocation2 + $0x590] sm:$0xff]
    %v391 = vld [vmem:[#allocation2 + $0x598] sm:$0xff]
    %v392 = vld [vmem:[#allocation2 + $0x5a0] sm:$0xff]
    %v393 = vld [vmem:[#allocation2 + $0x5a8] sm:$0xff]
    %v394 = vld [vmem:[#allocation2 + $0x5b0] sm:$0xff]
    %v395 = vld [vmem:[#allocation2 + $0x5b8] sm:$0xff]
    %v396 = vld [vmem:[#allocation2 + $0x5c0] sm:$0xff]
    %v397 = vld [vmem:[#allocation2 + $0x5c8] sm:$0xff]
    %v398 = vld [vmem:[#allocation2 + $0x5d0] sm:$0xff]
    %v399 = vld [vmem:[#allocation2 + $0x5d8] sm:$0xff]
    %v400 = vld [vmem:[#allocation2 + $0x5e0] sm:$0xff]
    %v401 = vld [vmem:[#allocation2 + $0x5e8] sm:$0xff]
    %v402 = vld [vmem:[#allocation2 + $0x5f0] sm:$0xff]
    %v403 = vld [vmem:[#allocation2 + $0x5f8] sm:$0xff]
    %v404 = vld [vmem:[#allocation2 + $0x600] sm:$0xff]
    %v405 = vld [vmem:[#allocation2 + $0x608] sm:$0xff]
    %v406 = vld [vmem:[#allocation2 + $0x610] sm:$0xff]
    %v407 = vld [vmem:[#allocation2 + $0x618] sm:$0xff]
    %v408 = vld [vmem:[#allocation2 + $0x620] sm:$0xff]
    %v409 = vld [vmem:[#allocation2 + $0x628] sm:$0xff]
    %v410 = vld [vmem:[#allocation2 + $0x630] sm:$0xff]
    %v411 = vld [vmem:[#allocation2 + $0x638] sm:$0xff]
    %v412 = vld [vmem:[#allocation2 + $0x640] sm:$0xff]
    %v413 = vld [vmem:[#allocation2 + $0x648] sm:$0xff]
    %v414 = vld [vmem:[#allocation2 + $0x650] sm:$0xff]
    %v415 = vld [vmem:[#allocation2 + $0x658] sm:$0xff]
    %v416 = vld [vmem:[#allocation2 + $0x660] sm:$0xff]
    %v417 = vld [vmem:[#allocation2 + $0x668] sm:$0xff]
    %v418 = vld [vmem:[#allocation2 + $0x670] sm:$0xff]
    %v419 = vld [vmem:[#allocation2 + $0x678] sm:$0xff]
    %v420 = vld [vmem:[#allocation2 + $0x680] sm:$0xff]
    %v421 = vld [vmem:[#allocation2 + $0x688] sm:$0xff]
    %v422 = vld [vmem:[#allocation2 + $0x690] sm:$0xff]
    %v423 = vld [vmem:[#allocation2 + $0x698] sm:$0xff]
    %v424 = vld [vmem:[#allocation2 + $0x6a0] sm:$0xff]
    %v425 = vld [vmem:[#allocation2 + $0x6a8] sm:$0xff]
    %v426 = vld [vmem:[#allocation2 + $0x6b0] sm:$0xff]
    %v427 = vld [vmem:[#allocation2 + $0x6b8] sm:$0xff]
    %v428 = vld [vmem:[#allocation2 + $0x6c0] sm:$0xff]
    %v429 = vld [vmem:[#allocation2 + $0x6c8] sm:$0xff]
    %v430 = vld [vmem:[#allocation2 + $0x6d0] sm:$0xff]
    %v431 = vld [vmem:[#allocation2 + $0x6d8] sm:$0xff]
    %v432 = vld [vmem:[#allocation2 + $0x6e0] sm:$0xff]
    %v433 = vld [vmem:[#allocation2 + $0x6e8] sm:$0xff]
    %v434 = vld [vmem:[#allocation2 + $0x6f0] sm:$0xff]
    %v435 = vld [vmem:[#allocation2 + $0x6f8] sm:$0xff]
    %v436 = vld [vmem:[#allocation2 + $0x700] sm:$0xff]
    %v437 = vld [vmem:[#allocation2 + $0x708] sm:$0xff]
    %v438 = vld [vmem:[#allocation2 + $0x710] sm:$0xff]
    %v439 = vld [vmem:[#allocation2 + $0x718] sm:$0xff]
    %v440 = vld [vmem:[#allocation2 + $0x720] sm:$0xff]
    %v441 = vld [vmem:[#allocation2 + $0x728] sm:$0xff]
    %v442 = vld [vmem:[#allocation2 + $0x730] sm:$0xff]
    %v443 = vld [vmem:[#allocation2 + $0x738] sm:$0xff]
    %v444 = vld [vmem:[#allocation2 + $0x740] sm:$0xff]
    %v445 = vld [vmem:[#allocation2 + $0x748] sm:$0xff]
    %v446 = vld [vmem:[#allocation2 + $0x750] sm:$0xff]
    %v447 = vld [vmem:[#allocation2 + $0x758] sm:$0xff]
    %v448 = vld [vmem:[#allocation2 + $0x760] sm:$0xff]
    %v449 = vld [vmem:[#allocation2 + $0x768] sm:$0xff]
    %v450 = vld [vmem:[#allocation2 + $0x770] sm:$0xff]
    %v451 = vld [vmem:[#allocation2 + $0x778] sm:$0xff]
    %v452 = vld [vmem:[#allocation2 + $0x780] sm:$0xff]
    %v453 = vld [vmem:[#allocation2 + $0x788] sm:$0xff]
    %v454 = vld [vmem:[#allocation2 + $0x790] sm:$0xff]
    %v455 = vld [vmem:[#allocation2 + $0x798] sm:$0xff]
    %v456 = vld [vmem:[#allocation2 + $0x7a0] sm:$0xff]
    %v457 = vld [vmem:[#allocation2 + $0x7a8] sm:$0xff]
    %v458 = vld [vmem:[#allocation2 + $0x7b0] sm:$0xff]
    %v459 = vld [vmem:[#allocation2 + $0x7b8] sm:$0xff]
    %v460 = vld [vmem:[#allocation2 + $0x7c0] sm:$0xff]
    %v461 = vld [vmem:[#allocation2 + $0x7c8] sm:$0xff]
    %v462 = vld [vmem:[#allocation2 + $0x7d0] sm:$0xff]
    %v463 = vld [vmem:[#allocation2 + $0x7d8] sm:$0xff]
    %v464 = vld [vmem:[#allocation2 + $0x7e0] sm:$0xff]
    %v465 = vld [vmem:[#allocation2 + $0x7e8] sm:$0xff]
    %v466 = vld [vmem:[#allocation2 + $0x7f0] sm:$0xff]
    %v467 = vld [vmem:[#allocation2 + $0x7f8] sm:$0xff]
    %v468 = vld [vmem:[#allocation2 + $0x800] sm:$0xff]
    %v469 = vld [vmem:[#allocation2 + $0x808] sm:$0xff]
    %v470 = vld [vmem:[#allocation2 + $0x810] sm:$0xff]
    %v471 = vld [vmem:[#allocation2 + $0x818] sm:$0xff]
    %v472 = vld [vmem:[#allocation2 + $0x820] sm:$0xff]
    %v473 = vld [vmem:[#allocation2 + $0x828] sm:$0xff]
    %v474 = vld [vmem:[#allocation2 + $0x830] sm:$0xff]
    %v475 = vld [vmem:[#allocation2 + $0x838] sm:$0xff]
    %v476 = vld [vmem:[#allocation2 + $0x840] sm:$0xff]
    %v477 = vld [vmem:[#allocation2 + $0x848] sm:$0xff]
    %v478 = vld [vmem:[#allocation2 + $0x850] sm:$0xff]
    %v479 = vld [vmem:[#allocation2 + $0x858] sm:$0xff]
    %v480 = vld [vmem:[#allocation2 + $0x860] sm:$0xff]
    %v481 = vld [vmem:[#allocation2 + $0x868] sm:$0xff]
    %v482 = vld [vmem:[#allocation2 + $0x870] sm:$0xff]
    %v483 = vld [vmem:[#allocation2 + $0x878] sm:$0xff]
    %v484 = vld [vmem:[#allocation2 + $0x880] sm:$0xff]
    %v485 = vld [vmem:[#allocation2 + $0x888] sm:$0xff]
    %v486 = vld [vmem:[#allocation2 + $0x890] sm:$0xff]
    %v487 = vld [vmem:[#allocation2 + $0x898] sm:$0xff]
    %v488 = vld [vmem:[#allocation2 + $0x8a0] sm:$0xff]
    %v489 = vld [vmem:[#allocation2 + $0x8a8] sm:$0xff]
    %v490 = vld [vmem:[#allocation2 + $0x8b0] sm:$0xff]
    %v491 = vld [vmem:[#allocation2 + $0x8b8] sm:$0xff]
    %v492 = vld [vmem:[#allocation2 + $0x8c0] sm:$0xff]
    %v493 = vld [vmem:[#allocation2 + $0x8c8] sm:$0xff]
    %v494 = vld [vmem:[#allocation2 + $0x8d0] sm:$0xff]
    %v495 = vld [vmem:[#allocation2 + $0x8d8] sm:$0xff]
    %v496 = vld [vmem:[#allocation2 + $0x8e0] sm:$0xff]
    %v497 = vld [vmem:[#allocation2 + $0x8e8] sm:$0xff]
    %v498 = vld [vmem:[#allocation2 + $0x8f0] sm:$0xff]
    %v499 = vld [vmem:[#allocation2 + $0x8f8] sm:$0xff]
    %v500 = vld [vmem:[#allocation2 + $0x900] sm:$0xff]
    %v501 = vld [vmem:[#allocation2 + $0x908] sm:$0xff]
    %v502 = vld [vmem:[#allocation2 + $0x910] sm:$0xff]
    %v503 = vld [vmem:[#allocation2 + $0x918] sm:$0xff]
    %v504 = vld [vmem:[#allocation2 + $0x920] sm:$0xff]
    %v505 = vld [vmem:[#allocation2 + $0x928] sm:$0xff]
    %v506 = vld [vmem:[#allocation2 + $0x930] sm:$0xff]
    %v507 = vld [vmem:[#allocation2 + $0x938] sm:$0xff]
    %v508 = vld [vmem:[#allocation2 + $0x940] sm:$0xff]
    %v509 = vld [vmem:[#allocation2 + $0x948] sm:$0xff]
    %v510 = vld [vmem:[#allocation2 + $0x950] sm:$0xff]
    %v511 = vld [vmem:[#allocation2 + $0x958] sm:$0xff]
    %v512 = vld [vmem:[#allocation2 + $0x960] sm:$0xff]
    %v513 = vld [vmem:[#allocation2 + $0x968] sm:$0xff]
    %v514 = vld [vmem:[#allocation2 + $0x970] sm:$0xff]
    %v515 = vld [vmem:[#allocation2 + $0x978] sm:$0xff]
    %v516 = vld [vmem:[#allocation2 + $0x980] sm:$0xff]
    %v517 = vld [vmem:[#allocation2 + $0x988] sm:$0xff]
    %v518 = vld [vmem:[#allocation2 + $0x990] sm:$0xff]
    %v519 = vld [vmem:[#allocation2 + $0x998] sm:$0xff]
    %v520 = vld [vmem:[#allocation2 + $0x9a0] sm:$0xff]
    %v521 = vld [vmem:[#allocation2 + $0x9a8] sm:$0xff]
    %v522 = vld [vmem:[#allocation2 + $0x9b0] sm:$0xff]
    %v523 = vld [vmem:[#allocation2 + $0x9b8] sm:$0xff]
    %v524 = vld [vmem:[#allocation2 + $0x9c0] sm:$0xff]
    %v525 = vld [vmem:[#allocation2 + $0x9c8] sm:$0xff]
    %v526 = vld [vmem:[#allocation2 + $0x9d0] sm:$0xff]
    %v527 = vld [vmem:[#allocation2 + $0x9d8] sm:$0xff]
    %v528 = vld [vmem:[#allocation2 + $0x9e0] sm:$0xff]
    %v529 = vld [vmem:[#allocation2 + $0x9e8] sm:$0xff]
    %v530 = vld [vmem:[#allocation2 + $0x9f0] sm:$0xff]
    %v531 = vld [vmem:[#allocation2 + $0x9f8] sm:$0xff]
    %v532 = vld [vmem:[#allocation2 + $0xa00] sm:$0xff]
    %v533 = vld [vmem:[#allocation2 + $0xa08] sm:$0xff]
    %v534 = vld [vmem:[#allocation2 + $0xa10] sm:$0xff]
    %v535 = vld [vmem:[#allocation2 + $0xa18] sm:$0xff]
    %v536 = vld [vmem:[#allocation2 + $0xa20] sm:$0xff]
    %v537 = vld [vmem:[#allocation2 + $0xa28] sm:$0xff]
    %v538 = vld [vmem:[#allocation2 + $0xa30] sm:$0xff]
    %v539 = vld [vmem:[#allocation2 + $0xa38] sm:$0xff]
    %v540 = vld [vmem:[#allocation2 + $0xa40] sm:$0xff]
    %v541 = vld [vmem:[#allocation2 + $0xa48] sm:$0xff]
    %v542 = vld [vmem:[#allocation2 + $0xa50] sm:$0xff]
    %v543 = vld [vmem:[#allocation2 + $0xa58] sm:$0xff]
    %v544 = vld [vmem:[#allocation2 + $0xa60] sm:$0xff]
    %v545 = vld [vmem:[#allocation2 + $0xa68] sm:$0xff]
    %v546 = vld [vmem:[#allocation2 + $0xa70] sm:$0xff]
    %v547 = vld [vmem:[#allocation2 + $0xa78] sm:$0xff]
    %v548 = vld [vmem:[#allocation2 + $0xa80] sm:$0xff]
    %v549 = vld [vmem:[#allocation2 + $0xa88] sm:$0xff]
    %v550 = vld [vmem:[#allocation2 + $0xa90] sm:$0xff]
    %v551 = vld [vmem:[#allocation2 + $0xa98] sm:$0xff]
    %v552 = vld [vmem:[#allocation2 + $0xaa0] sm:$0xff]
    %v553 = vld [vmem:[#allocation2 + $0xaa8] sm:$0xff]
    %v554 = vld [vmem:[#allocation2 + $0xab0] sm:$0xff]
    %v555 = vld [vmem:[#allocation2 + $0xab8] sm:$0xff]
    %v556 = vld [vmem:[#allocation2 + $0xac0] sm:$0xff]
    %v557 = vld [vmem:[#allocation2 + $0xac8] sm:$0xff]
    %v558 = vld [vmem:[#allocation2 + $0xad0] sm:$0xff]
    %v559 = vld [vmem:[#allocation2 + $0xad8] sm:$0xff]
    %v560 = vld [vmem:[#allocation2 + $0xae0] sm:$0xff]
    %v561 = vld [vmem:[#allocation2 + $0xae8] sm:$0xff]
    %v562 = vld [vmem:[#allocation2 + $0xaf0] sm:$0xff]
    %v563 = vld [vmem:[#allocation2 + $0xaf8] sm:$0xff]
    %v564 = vld [vmem:[#allocation2 + $0xb00] sm:$0xff]
    %v565 = vld [vmem:[#allocation2 + $0xb08] sm:$0xff]
    %v566 = vld [vmem:[#allocation2 + $0xb10] sm:$0xff]
    %v567 = vld [vmem:[#allocation2 + $0xb18] sm:$0xff]
    %v568 = vld [vmem:[#allocation2 + $0xb20] sm:$0xff]
    %v569 = vld [vmem:[#allocation2 + $0xb28] sm:$0xff]
    %v570 = vld [vmem:[#allocation2 + $0xb30] sm:$0xff]
    %v571 = vld [vmem:[#allocation2 + $0xb38] sm:$0xff]
    %v572 = vld [vmem:[#allocation2 + $0xb40] sm:$0xff]
    %v573 = vld [vmem:[#allocation2 + $0xb48] sm:$0xff]
    %v574 = vld [vmem:[#allocation2 + $0xb50] sm:$0xff]
    %v575 = vld [vmem:[#allocation2 + $0xb58] sm:$0xff]
    %v576 = vld [vmem:[#allocation2 + $0xb60] sm:$0xff]
    %v577 = vld [vmem:[#allocation2 + $0xb68] sm:$0xff]
    %v578 = vld [vmem:[#allocation2 + $0xb70] sm:$0xff]
    %v579 = vld [vmem:[#allocation2 + $0xb78] sm:$0xff]
    %v580 = vld [vmem:[#allocation2 + $0xb80] sm:$0xff]
    %v581 = vld [vmem:[#allocation2 + $0xb88] sm:$0xff]
    %v582 = vld [vmem:[#allocation2 + $0xb90] sm:$0xff]
    %v583 = vld [vmem:[#allocation2 + $0xb98] sm:$0xff]
    %v584 = vld [vmem:[#allocation2 + $0xba0] sm:$0xff]
    %v585 = vld [vmem:[#allocation2 + $0xba8] sm:$0xff]
    %v586 = vld [vmem:[#allocation2 + $0xbb0] sm:$0xff]
    %v587 = vld [vmem:[#allocation2 + $0xbb8] sm:$0xff]
    %v588 = vld [vmem:[#allocation2 + $0xbc0] sm:$0xff]
    %v589 = vld [vmem:[#allocation2 + $0xbc8] sm:$0xff]
    %v590 = vld [vmem:[#allocation2 + $0xbd0] sm:$0xff]
    %v591 = vld [vmem:[#allocation2 + $0xbd8] sm:$0xff]
    %v592 = vld [vmem:[#allocation2 + $0xbe0] sm:$0xff]
    %v593 = vld [vmem:[#allocation2 + $0xbe8] sm:$0xff]
    %v594 = vld [vmem:[#allocation2 + $0xbf0] sm:$0xff]
    %v595 = vld [vmem:[#allocation2 + $0xbf8] sm:$0xff]
    %v596 = vld [vmem:[#allocation6] sm:$0xff]
    %v598 = vlaneseq
    %v599 = vshrl.u32 %v598, 7
    %v600 = vsub.s32 0, %v599
    %v601 = vrot.slane %v596, %v600
    %v602 = vlaneseq
    %v603 = vshrl.u32 %v602, 7
    %v604 = vsub.s32 1, %v603
    %v605 = vrot.slane %v596, %v604
    %v606 = vlaneseq
    %v607 = vshrl.u32 %v606, 7
    %v608 = vsub.s32 2, %v607
    %v609 = vrot.slane %v596, %v608
    %v610 = vlaneseq
    %v611 = vshrl.u32 %v610, 7
    %v612 = vsub.s32 3, %v611
    %v613 = vrot.slane %v596, %v612
    %v614 = vlaneseq
    %v615 = vshrl.u32 %v614, 7
    %v616 = vsub.s32 4, %v615
    %v617 = vrot.slane %v596, %v616
    %v618 = vlaneseq
    %v619 = vshrl.u32 %v618, 7
    %v620 = vsub.s32 5, %v619
    %v621 = vrot.slane %v596, %v620
    %v622 = vlaneseq
    %v623 = vshrl.u32 %v622, 7
    %v624 = vsub.s32 6, %v623
    %v625 = vrot.slane %v596, %v624
    %v626 = vlaneseq
    %v627 = vshrl.u32 %v626, 7
    %v628 = vsub.s32 7, %v627
    %v629 = vrot.slane %v596, %v628
    %v1022 = vunpack.c.l.b16 %v212
    %v1023 = vunpack.c.h.b16 %v212
    %v1024 = vunpack.c.l.b16 %v213
    %v1025 = vunpack.c.h.b16 %v213
    %v1026 = vunpack.c.l.b16 %v214
    %v1027 = vunpack.c.h.b16 %v214
    %v1028 = vunpack.c.l.b16 %v215
    %v1029 = vunpack.c.h.b16 %v215
    %v1030 = vunpack.c.l.b16 %v216
    %v1031 = vunpack.c.h.b16 %v216
    %v1032 = vunpack.c.l.b16 %v217
    %v1033 = vunpack.c.h.b16 %v217
    %v1034 = vunpack.c.l.b16 %v218
    %v1035 = vunpack.c.h.b16 %v218
    %v1036 = vunpack.c.l.b16 %v219
    %v1037 = vunpack.c.h.b16 %v219
    %v1038 = vunpack.c.l.b16 %v220
    %v1039 = vunpack.c.h.b16 %v220
    %v1040 = vunpack.c.l.b16 %v221
    %v1041 = vunpack.c.h.b16 %v221
    %v1042 = vunpack.c.l.b16 %v222
    %v1043 = vunpack.c.h.b16 %v222
    %v1044 = vunpack.c.l.b16 %v223
    %v1045 = vunpack.c.h.b16 %v223
    %v1046 = vunpack.c.l.b16 %v224
    %v1047 = vunpack.c.h.b16 %v224
    %v1048 = vunpack.c.l.b16 %v225
    %v1049 = vunpack.c.h.b16 %v225
    %v1050 = vunpack.c.l.b16 %v226
    %v1051 = vunpack.c.h.b16 %v226
    %v1052 = vunpack.c.l.b16 %v227
    %v1053 = vunpack.c.h.b16 %v227
    %v1054 = vunpack.c.l.b16 %v228
    %v1055 = vunpack.c.h.b16 %v228
    %v1056 = vunpack.c.l.b16 %v229
    %v1057 = vunpack.c.h.b16 %v229
    %v1058 = vunpack.c.l.b16 %v230
    %v1059 = vunpack.c.h.b16 %v230
    %v1060 = vunpack.c.l.b16 %v231
    %v1061 = vunpack.c.h.b16 %v231
    %v1062 = vunpack.c.l.b16 %v232
    %v1063 = vunpack.c.h.b16 %v232
    %v1064 = vunpack.c.l.b16 %v233
    %v1065 = vunpack.c.h.b16 %v233
    %v1066 = vunpack.c.l.b16 %v234
    %v1067 = vunpack.c.h.b16 %v234
    %v1068 = vunpack.c.l.b16 %v235
    %v1069 = vunpack.c.h.b16 %v235
    %v1070 = vunpack.c.l.b16 %v236
    %v1071 = vunpack.c.h.b16 %v236
    %v1072 = vunpack.c.l.b16 %v237
    %v1073 = vunpack.c.h.b16 %v237
    %v1074 = vunpack.c.l.b16 %v238
    %v1075 = vunpack.c.h.b16 %v238
    %v1076 = vunpack.c.l.b16 %v239
    %v1077 = vunpack.c.h.b16 %v239
    %v1078 = vunpack.c.l.b16 %v240
    %v1079 = vunpack.c.h.b16 %v240
    %v1080 = vunpack.c.l.b16 %v241
    %v1081 = vunpack.c.h.b16 %v241
    %v1082 = vunpack.c.l.b16 %v242
    %v1083 = vunpack.c.h.b16 %v242
    %v1084 = vunpack.c.l.b16 %v243
    %v1085 = vunpack.c.h.b16 %v243
    %v1086 = vunpack.c.l.b16 %v244
    %v1087 = vunpack.c.h.b16 %v244
    %v1088 = vunpack.c.l.b16 %v245
    %v1089 = vunpack.c.h.b16 %v245
    %v1090 = vunpack.c.l.b16 %v246
    %v1091 = vunpack.c.h.b16 %v246
    %v1092 = vunpack.c.l.b16 %v247
    %v1093 = vunpack.c.h.b16 %v247
    %v1094 = vunpack.c.l.b16 %v248
    %v1095 = vunpack.c.h.b16 %v248
    %v1096 = vunpack.c.l.b16 %v249
    %v1097 = vunpack.c.h.b16 %v249
    %v1098 = vunpack.c.l.b16 %v250
    %v1099 = vunpack.c.h.b16 %v250
    %v1100 = vunpack.c.l.b16 %v251
    %v1101 = vunpack.c.h.b16 %v251
    %v1102 = vunpack.c.l.b16 %v252
    %v1103 = vunpack.c.h.b16 %v252
    %v1104 = vunpack.c.l.b16 %v253
    %v1105 = vunpack.c.h.b16 %v253
    %v1106 = vunpack.c.l.b16 %v254
    %v1107 = vunpack.c.h.b16 %v254
    %v1108 = vunpack.c.l.b16 %v255
    %v1109 = vunpack.c.h.b16 %v255
    %v1110 = vunpack.c.l.b16 %v256
    %v1111 = vunpack.c.h.b16 %v256
    %v1112 = vunpack.c.l.b16 %v257
    %v1113 = vunpack.c.h.b16 %v257
    %v1114 = vunpack.c.l.b16 %v258
    %v1115 = vunpack.c.h.b16 %v258
    %v1116 = vunpack.c.l.b16 %v259
    %v1117 = vunpack.c.h.b16 %v259
    %v1118 = vunpack.c.l.b16 %v260
    %v1119 = vunpack.c.h.b16 %v260
    %v1120 = vunpack.c.l.b16 %v261
    %v1121 = vunpack.c.h.b16 %v261
    %v1122 = vunpack.c.l.b16 %v262
    %v1123 = vunpack.c.h.b16 %v262
    %v1124 = vunpack.c.l.b16 %v263
    %v1125 = vunpack.c.h.b16 %v263
    %v1126 = vunpack.c.l.b16 %v264
    %v1127 = vunpack.c.h.b16 %v264
    %v1128 = vunpack.c.l.b16 %v265
    %v1129 = vunpack.c.h.b16 %v265
    %v1130 = vunpack.c.l.b16 %v266
    %v1131 = vunpack.c.h.b16 %v266
    %v1132 = vunpack.c.l.b16 %v267
    %v1133 = vunpack.c.h.b16 %v267
    %v1134 = vunpack.c.l.b16 %v268
    %v1135 = vunpack.c.h.b16 %v268
    %v1136 = vunpack.c.l.b16 %v269
    %v1137 = vunpack.c.h.b16 %v269
    %v1138 = vunpack.c.l.b16 %v270
    %v1139 = vunpack.c.h.b16 %v270
    %v1140 = vunpack.c.l.b16 %v271
    %v1141 = vunpack.c.h.b16 %v271
    %v1142 = vunpack.c.l.b16 %v272
    %v1143 = vunpack.c.h.b16 %v272
    %v1144 = vunpack.c.l.b16 %v273
    %v1145 = vunpack.c.h.b16 %v273
    %v1146 = vunpack.c.l.b16 %v274
    %v1147 = vunpack.c.h.b16 %v274
    %v1148 = vunpack.c.l.b16 %v275
    %v1149 = vunpack.c.h.b16 %v275
    %v1150 = vunpack.c.l.b16 %v276
    %v1151 = vunpack.c.h.b16 %v276
    %v1152 = vunpack.c.l.b16 %v277
    %v1153 = vunpack.c.h.b16 %v277
    %v1154 = vunpack.c.l.b16 %v278
    %v1155 = vunpack.c.h.b16 %v278
    %v1156 = vunpack.c.l.b16 %v279
    %v1157 = vunpack.c.h.b16 %v279
    %v1158 = vunpack.c.l.b16 %v280
    %v1159 = vunpack.c.h.b16 %v280
    %v1160 = vunpack.c.l.b16 %v281
    %v1161 = vunpack.c.h.b16 %v281
    %v1162 = vunpack.c.l.b16 %v282
    %v1163 = vunpack.c.h.b16 %v282
    %v1164 = vunpack.c.l.b16 %v283
    %v1165 = vunpack.c.h.b16 %v283
    %v1166 = vunpack.c.l.b16 %v284
    %v1167 = vunpack.c.h.b16 %v284
    %v1168 = vunpack.c.l.b16 %v285
    %v1169 = vunpack.c.h.b16 %v285
    %v1170 = vunpack.c.l.b16 %v286
    %v1171 = vunpack.c.h.b16 %v286
    %v1172 = vunpack.c.l.b16 %v287
    %v1173 = vunpack.c.h.b16 %v287
    %v1174 = vunpack.c.l.b16 %v288
    %v1175 = vunpack.c.h.b16 %v288
    %v1176 = vunpack.c.l.b16 %v289
    %v1177 = vunpack.c.h.b16 %v289
    %v1178 = vunpack.c.l.b16 %v290
    %v1179 = vunpack.c.h.b16 %v290
    %v1180 = vunpack.c.l.b16 %v291
    %v1181 = vunpack.c.h.b16 %v291
    %v1182 = vunpack.c.l.b16 %v292
    %v1183 = vunpack.c.h.b16 %v292
    %v1184 = vunpack.c.l.b16 %v293
    %v1185 = vunpack.c.h.b16 %v293
    %v1186 = vunpack.c.l.b16 %v294
    %v1187 = vunpack.c.h.b16 %v294
    %v1188 = vunpack.c.l.b16 %v295
    %v1189 = vunpack.c.h.b16 %v295
    %v1190 = vunpack.c.l.b16 %v296
    %v1191 = vunpack.c.h.b16 %v296
    %v1192 = vunpack.c.l.b16 %v297
    %v1193 = vunpack.c.h.b16 %v297
    %v1194 = vunpack.c.l.b16 %v298
    %v1195 = vunpack.c.h.b16 %v298
    %v1196 = vunpack.c.l.b16 %v299
    %v1197 = vunpack.c.h.b16 %v299
    %v1198 = vunpack.c.l.b16 %v300
    %v1199 = vunpack.c.h.b16 %v300
    %v1200 = vunpack.c.l.b16 %v301
    %v1201 = vunpack.c.h.b16 %v301
    %v1202 = vunpack.c.l.b16 %v302
    %v1203 = vunpack.c.h.b16 %v302
    %v1204 = vunpack.c.l.b16 %v303
    %v1205 = vunpack.c.h.b16 %v303
    %v1206 = vunpack.c.l.b16 %v304
    %v1207 = vunpack.c.h.b16 %v304
    %v1208 = vunpack.c.l.b16 %v305
    %v1209 = vunpack.c.h.b16 %v305
    %v1210 = vunpack.c.l.b16 %v306
    %v1211 = vunpack.c.h.b16 %v306
    %v1212 = vunpack.c.l.b16 %v307
    %v1213 = vunpack.c.h.b16 %v307
    %v1214 = vunpack.c.l.b16 %v308
    %v1215 = vunpack.c.h.b16 %v308
    %v1216 = vunpack.c.l.b16 %v309
    %v1217 = vunpack.c.h.b16 %v309
    %v1218 = vunpack.c.l.b16 %v310
    %v1219 = vunpack.c.h.b16 %v310
    %v1220 = vunpack.c.l.b16 %v311
    %v1221 = vunpack.c.h.b16 %v311
    %v1222 = vunpack.c.l.b16 %v312
    %v1223 = vunpack.c.h.b16 %v312
    %v1224 = vunpack.c.l.b16 %v313
    %v1225 = vunpack.c.h.b16 %v313
    %v1226 = vunpack.c.l.b16 %v314
    %v1227 = vunpack.c.h.b16 %v314
    %v1228 = vunpack.c.l.b16 %v315
    %v1229 = vunpack.c.h.b16 %v315
    %v1230 = vunpack.c.l.b16 %v316
    %v1231 = vunpack.c.h.b16 %v316
    %v1232 = vunpack.c.l.b16 %v317
    %v1233 = vunpack.c.h.b16 %v317
    %v1234 = vunpack.c.l.b16 %v318
    %v1235 = vunpack.c.h.b16 %v318
    %v1236 = vunpack.c.l.b16 %v319
    %v1237 = vunpack.c.h.b16 %v319
    %v1238 = vunpack.c.l.b16 %v320
    %v1239 = vunpack.c.h.b16 %v320
    %v1240 = vunpack.c.l.b16 %v321
    %v1241 = vunpack.c.h.b16 %v321
    %v1242 = vunpack.c.l.b16 %v322
    %v1243 = vunpack.c.h.b16 %v322
    %v1244 = vunpack.c.l.b16 %v323
    %v1245 = vunpack.c.h.b16 %v323
    %v1246 = vunpack.c.l.b16 %v324
    %v1247 = vunpack.c.h.b16 %v324
    %v1248 = vunpack.c.l.b16 %v325
    %v1249 = vunpack.c.h.b16 %v325
    %v1250 = vunpack.c.l.b16 %v326
    %v1251 = vunpack.c.h.b16 %v326
    %v1252 = vunpack.c.l.b16 %v327
    %v1253 = vunpack.c.h.b16 %v327
    %v1254 = vunpack.c.l.b16 %v328
    %v1255 = vunpack.c.h.b16 %v328
    %v1256 = vunpack.c.l.b16 %v329
    %v1257 = vunpack.c.h.b16 %v329
    %v1258 = vunpack.c.l.b16 %v330
    %v1259 = vunpack.c.h.b16 %v330
    %v1260 = vunpack.c.l.b16 %v331
    %v1261 = vunpack.c.h.b16 %v331
    %v1262 = vunpack.c.l.b16 %v332
    %v1263 = vunpack.c.h.b16 %v332
    %v1264 = vunpack.c.l.b16 %v333
    %v1265 = vunpack.c.h.b16 %v333
    %v1266 = vunpack.c.l.b16 %v334
    %v1267 = vunpack.c.h.b16 %v334
    %v1268 = vunpack.c.l.b16 %v335
    %v1269 = vunpack.c.h.b16 %v335
    %v1270 = vunpack.c.l.b16 %v336
    %v1271 = vunpack.c.h.b16 %v336
    %v1272 = vunpack.c.l.b16 %v337
    %v1273 = vunpack.c.h.b16 %v337
    %v1274 = vunpack.c.l.b16 %v338
    %v1275 = vunpack.c.h.b16 %v338
    %v1276 = vunpack.c.l.b16 %v339
    %v1277 = vunpack.c.h.b16 %v339
    %v1278 = vunpack.c.l.b16 %v340
    %v1279 = vunpack.c.h.b16 %v340
    %v1280 = vunpack.c.l.b16 %v341
    %v1281 = vunpack.c.h.b16 %v341
    %v1282 = vunpack.c.l.b16 %v342
    %v1283 = vunpack.c.h.b16 %v342
    %v1284 = vunpack.c.l.b16 %v343
    %v1285 = vunpack.c.h.b16 %v343
    %v1286 = vunpack.c.l.b16 %v344
    %v1287 = vunpack.c.h.b16 %v344
    %v1288 = vunpack.c.l.b16 %v345
    %v1289 = vunpack.c.h.b16 %v345
    %v1290 = vunpack.c.l.b16 %v346
    %v1291 = vunpack.c.h.b16 %v346
    %v1292 = vunpack.c.l.b16 %v347
    %v1293 = vunpack.c.h.b16 %v347
    %v1294 = vunpack.c.l.b16 %v348
    %v1295 = vunpack.c.h.b16 %v348
    %v1296 = vunpack.c.l.b16 %v349
    %v1297 = vunpack.c.h.b16 %v349
    %v1298 = vunpack.c.l.b16 %v350
    %v1299 = vunpack.c.h.b16 %v350
    %v1300 = vunpack.c.l.b16 %v351
    %v1301 = vunpack.c.h.b16 %v351
    %v1302 = vunpack.c.l.b16 %v352
    %v1303 = vunpack.c.h.b16 %v352
    %v1304 = vunpack.c.l.b16 %v353
    %v1305 = vunpack.c.h.b16 %v353
    %v1306 = vunpack.c.l.b16 %v354
    %v1307 = vunpack.c.h.b16 %v354
    %v1308 = vunpack.c.l.b16 %v355
    %v1309 = vunpack.c.h.b16 %v355
    %v1310 = vunpack.c.l.b16 %v356
    %v1311 = vunpack.c.h.b16 %v356
    %v1312 = vunpack.c.l.b16 %v357
    %v1313 = vunpack.c.h.b16 %v357
    %v1314 = vunpack.c.l.b16 %v358
    %v1315 = vunpack.c.h.b16 %v358
    %v1316 = vunpack.c.l.b16 %v359
    %v1317 = vunpack.c.h.b16 %v359
    %v1318 = vunpack.c.l.b16 %v360
    %v1319 = vunpack.c.h.b16 %v360
    %v1320 = vunpack.c.l.b16 %v361
    %v1321 = vunpack.c.h.b16 %v361
    %v1322 = vunpack.c.l.b16 %v362
    %v1323 = vunpack.c.h.b16 %v362
    %v1324 = vunpack.c.l.b16 %v363
    %v1325 = vunpack.c.h.b16 %v363
    %v1326 = vunpack.c.l.b16 %v364
    %v1327 = vunpack.c.h.b16 %v364
    %v1328 = vunpack.c.l.b16 %v365
    %v1329 = vunpack.c.h.b16 %v365
    %v1330 = vunpack.c.l.b16 %v366
    %v1331 = vunpack.c.h.b16 %v366
    %v1332 = vunpack.c.l.b16 %v367
    %v1333 = vunpack.c.h.b16 %v367
    %v1334 = vunpack.c.l.b16 %v368
    %v1335 = vunpack.c.h.b16 %v368
    %v1336 = vunpack.c.l.b16 %v369
    %v1337 = vunpack.c.h.b16 %v369
    %v1338 = vunpack.c.l.b16 %v370
    %v1339 = vunpack.c.h.b16 %v370
    %v1340 = vunpack.c.l.b16 %v371
    %v1341 = vunpack.c.h.b16 %v371
    %v1342 = vunpack.c.l.b16 %v372
    %v1343 = vunpack.c.h.b16 %v372
    %v1344 = vunpack.c.l.b16 %v373
    %v1345 = vunpack.c.h.b16 %v373
    %v1346 = vunpack.c.l.b16 %v374
    %v1347 = vunpack.c.h.b16 %v374
    %v1348 = vunpack.c.l.b16 %v375
    %v1349 = vunpack.c.h.b16 %v375
    %v1350 = vunpack.c.l.b16 %v376
    %v1351 = vunpack.c.h.b16 %v376
    %v1352 = vunpack.c.l.b16 %v377
    %v1353 = vunpack.c.h.b16 %v377
    %v1354 = vunpack.c.l.b16 %v378
    %v1355 = vunpack.c.h.b16 %v378
    %v1356 = vunpack.c.l.b16 %v379
    %v1357 = vunpack.c.h.b16 %v379
    %v1358 = vunpack.c.l.b16 %v380
    %v1359 = vunpack.c.h.b16 %v380
    %v1360 = vunpack.c.l.b16 %v381
    %v1361 = vunpack.c.h.b16 %v381
    %v1362 = vunpack.c.l.b16 %v382
    %v1363 = vunpack.c.h.b16 %v382
    %v1364 = vunpack.c.l.b16 %v383
    %v1365 = vunpack.c.h.b16 %v383
    %v1366 = vunpack.c.l.b16 %v384
    %v1367 = vunpack.c.h.b16 %v384
    %v1368 = vunpack.c.l.b16 %v385
    %v1369 = vunpack.c.h.b16 %v385
    %v1370 = vunpack.c.l.b16 %v386
    %v1371 = vunpack.c.h.b16 %v386
    %v1372 = vunpack.c.l.b16 %v387
    %v1373 = vunpack.c.h.b16 %v387
    %v1374 = vunpack.c.l.b16 %v388
    %v1375 = vunpack.c.h.b16 %v388
    %v1376 = vunpack.c.l.b16 %v389
    %v1377 = vunpack.c.h.b16 %v389
    %v1378 = vunpack.c.l.b16 %v390
    %v1379 = vunpack.c.h.b16 %v390
    %v1380 = vunpack.c.l.b16 %v391
    %v1381 = vunpack.c.h.b16 %v391
    %v1382 = vunpack.c.l.b16 %v392
    %v1383 = vunpack.c.h.b16 %v392
    %v1384 = vunpack.c.l.b16 %v393
    %v1385 = vunpack.c.h.b16 %v393
    %v1386 = vunpack.c.l.b16 %v394
    %v1387 = vunpack.c.h.b16 %v394
    %v1388 = vunpack.c.l.b16 %v395
    %v1389 = vunpack.c.h.b16 %v395
    %v1390 = vunpack.c.l.b16 %v396
    %v1391 = vunpack.c.h.b16 %v396
    %v1392 = vunpack.c.l.b16 %v397
    %v1393 = vunpack.c.h.b16 %v397
    %v1394 = vunpack.c.l.b16 %v398
    %v1395 = vunpack.c.h.b16 %v398
    %v1396 = vunpack.c.l.b16 %v399
    %v1397 = vunpack.c.h.b16 %v399
    %v1398 = vunpack.c.l.b16 %v400
    %v1399 = vunpack.c.h.b16 %v400
    %v1400 = vunpack.c.l.b16 %v401
    %v1401 = vunpack.c.h.b16 %v401
    %v1402 = vunpack.c.l.b16 %v402
    %v1403 = vunpack.c.h.b16 %v402
    %v1404 = vunpack.c.l.b16 %v403
    %v1405 = vunpack.c.h.b16 %v403
    %v1406 = vunpack.c.l.b16 %v404
    %v1407 = vunpack.c.h.b16 %v404
    %v1408 = vunpack.c.l.b16 %v405
    %v1409 = vunpack.c.h.b16 %v405
    %v1410 = vunpack.c.l.b16 %v406
    %v1411 = vunpack.c.h.b16 %v406
    %v1412 = vunpack.c.l.b16 %v407
    %v1413 = vunpack.c.h.b16 %v407
    %v1414 = vunpack.c.l.b16 %v408
    %v1415 = vunpack.c.h.b16 %v408
    %v1416 = vunpack.c.l.b16 %v409
    %v1417 = vunpack.c.h.b16 %v409
    %v1418 = vunpack.c.l.b16 %v410
    %v1419 = vunpack.c.h.b16 %v410
    %v1420 = vunpack.c.l.b16 %v411
    %v1421 = vunpack.c.h.b16 %v411
    %v1422 = vunpack.c.l.b16 %v412
    %v1423 = vunpack.c.h.b16 %v412
    %v1424 = vunpack.c.l.b16 %v413
    %v1425 = vunpack.c.h.b16 %v413
    %v1426 = vunpack.c.l.b16 %v414
    %v1427 = vunpack.c.h.b16 %v414
    %v1428 = vunpack.c.l.b16 %v415
    %v1429 = vunpack.c.h.b16 %v415
    %v1430 = vunpack.c.l.b16 %v416
    %v1431 = vunpack.c.h.b16 %v416
    %v1432 = vunpack.c.l.b16 %v417
    %v1433 = vunpack.c.h.b16 %v417
    %v1434 = vunpack.c.l.b16 %v418
    %v1435 = vunpack.c.h.b16 %v418
    %v1436 = vunpack.c.l.b16 %v419
    %v1437 = vunpack.c.h.b16 %v419
    %v1438 = vunpack.c.l.b16 %v420
    %v1439 = vunpack.c.h.b16 %v420
    %v1440 = vunpack.c.l.b16 %v421
    %v1441 = vunpack.c.h.b16 %v421
    %v1442 = vunpack.c.l.b16 %v422
    %v1443 = vunpack.c.h.b16 %v422
    %v1444 = vunpack.c.l.b16 %v423
    %v1445 = vunpack.c.h.b16 %v423
    %v1446 = vunpack.c.l.b16 %v424
    %v1447 = vunpack.c.h.b16 %v424
    %v1448 = vunpack.c.l.b16 %v425
    %v1449 = vunpack.c.h.b16 %v425
    %v1450 = vunpack.c.l.b16 %v426
    %v1451 = vunpack.c.h.b16 %v426
    %v1452 = vunpack.c.l.b16 %v427
    %v1453 = vunpack.c.h.b16 %v427
    %v1454 = vunpack.c.l.b16 %v428
    %v1455 = vunpack.c.h.b16 %v428
    %v1456 = vunpack.c.l.b16 %v429
    %v1457 = vunpack.c.h.b16 %v429
    %v1458 = vunpack.c.l.b16 %v430
    %v1459 = vunpack.c.h.b16 %v430
    %v1460 = vunpack.c.l.b16 %v431
    %v1461 = vunpack.c.h.b16 %v431
    %v1462 = vunpack.c.l.b16 %v432
    %v1463 = vunpack.c.h.b16 %v432
    %v1464 = vunpack.c.l.b16 %v433
    %v1465 = vunpack.c.h.b16 %v433
    %v1466 = vunpack.c.l.b16 %v434
    %v1467 = vunpack.c.h.b16 %v434
    %v1468 = vunpack.c.l.b16 %v435
    %v1469 = vunpack.c.h.b16 %v435
    %v1470 = vunpack.c.l.b16 %v436
    %v1471 = vunpack.c.h.b16 %v436
    %v1472 = vunpack.c.l.b16 %v437
    %v1473 = vunpack.c.h.b16 %v437
    %v1474 = vunpack.c.l.b16 %v438
    %v1475 = vunpack.c.h.b16 %v438
    %v1476 = vunpack.c.l.b16 %v439
    %v1477 = vunpack.c.h.b16 %v439
    %v1478 = vunpack.c.l.b16 %v440
    %v1479 = vunpack.c.h.b16 %v440
    %v1480 = vunpack.c.l.b16 %v441
    %v1481 = vunpack.c.h.b16 %v441
    %v1482 = vunpack.c.l.b16 %v442
    %v1483 = vunpack.c.h.b16 %v442
    %v1484 = vunpack.c.l.b16 %v443
    %v1485 = vunpack.c.h.b16 %v443
    %v1486 = vunpack.c.l.b16 %v444
    %v1487 = vunpack.c.h.b16 %v444
    %v1488 = vunpack.c.l.b16 %v445
    %v1489 = vunpack.c.h.b16 %v445
    %v1490 = vunpack.c.l.b16 %v446
    %v1491 = vunpack.c.h.b16 %v446
    %v1492 = vunpack.c.l.b16 %v447
    %v1493 = vunpack.c.h.b16 %v447
    %v1494 = vunpack.c.l.b16 %v448
    %v1495 = vunpack.c.h.b16 %v448
    %v1496 = vunpack.c.l.b16 %v449
    %v1497 = vunpack.c.h.b16 %v449
    %v1498 = vunpack.c.l.b16 %v450
    %v1499 = vunpack.c.h.b16 %v450
    %v1500 = vunpack.c.l.b16 %v451
    %v1501 = vunpack.c.h.b16 %v451
    %v1502 = vunpack.c.l.b16 %v452
    %v1503 = vunpack.c.h.b16 %v452
    %v1504 = vunpack.c.l.b16 %v453
    %v1505 = vunpack.c.h.b16 %v453
    %v1506 = vunpack.c.l.b16 %v454
    %v1507 = vunpack.c.h.b16 %v454
    %v1508 = vunpack.c.l.b16 %v455
    %v1509 = vunpack.c.h.b16 %v455
    %v1510 = vunpack.c.l.b16 %v456
    %v1511 = vunpack.c.h.b16 %v456
    %v1512 = vunpack.c.l.b16 %v457
    %v1513 = vunpack.c.h.b16 %v457
    %v1514 = vunpack.c.l.b16 %v458
    %v1515 = vunpack.c.h.b16 %v458
    %v1516 = vunpack.c.l.b16 %v459
    %v1517 = vunpack.c.h.b16 %v459
    %v1518 = vunpack.c.l.b16 %v460
    %v1519 = vunpack.c.h.b16 %v460
    %v1520 = vunpack.c.l.b16 %v461
    %v1521 = vunpack.c.h.b16 %v461
    %v1522 = vunpack.c.l.b16 %v462
    %v1523 = vunpack.c.h.b16 %v462
    %v1524 = vunpack.c.l.b16 %v463
    %v1525 = vunpack.c.h.b16 %v463
    %v1526 = vunpack.c.l.b16 %v464
    %v1527 = vunpack.c.h.b16 %v464
    %v1528 = vunpack.c.l.b16 %v465
    %v1529 = vunpack.c.h.b16 %v465
    %v1530 = vunpack.c.l.b16 %v466
    %v1531 = vunpack.c.h.b16 %v466
    %v1532 = vunpack.c.l.b16 %v467
    %v1533 = vunpack.c.h.b16 %v467
    %v1534 = vunpack.c.l.b16 %v468
    %v1535 = vunpack.c.h.b16 %v468
    %v1536 = vunpack.c.l.b16 %v469
    %v1537 = vunpack.c.h.b16 %v469
    %v1538 = vunpack.c.l.b16 %v470
    %v1539 = vunpack.c.h.b16 %v470
    %v1540 = vunpack.c.l.b16 %v471
    %v1541 = vunpack.c.h.b16 %v471
    %v1542 = vunpack.c.l.b16 %v472
    %v1543 = vunpack.c.h.b16 %v472
    %v1544 = vunpack.c.l.b16 %v473
    %v1545 = vunpack.c.h.b16 %v473
    %v1546 = vunpack.c.l.b16 %v474
    %v1547 = vunpack.c.h.b16 %v474
    %v1548 = vunpack.c.l.b16 %v475
    %v1549 = vunpack.c.h.b16 %v475
    %v1550 = vunpack.c.l.b16 %v476
    %v1551 = vunpack.c.h.b16 %v476
    %v1552 = vunpack.c.l.b16 %v477
    %v1553 = vunpack.c.h.b16 %v477
    %v1554 = vunpack.c.l.b16 %v478
    %v1555 = vunpack.c.h.b16 %v478
    %v1556 = vunpack.c.l.b16 %v479
    %v1557 = vunpack.c.h.b16 %v479
    %v1558 = vunpack.c.l.b16 %v480
    %v1559 = vunpack.c.h.b16 %v480
    %v1560 = vunpack.c.l.b16 %v481
    %v1561 = vunpack.c.h.b16 %v481
    %v1562 = vunpack.c.l.b16 %v482
    %v1563 = vunpack.c.h.b16 %v482
    %v1564 = vunpack.c.l.b16 %v483
    %v1565 = vunpack.c.h.b16 %v483
    %v1566 = vunpack.c.l.b16 %v484
    %v1567 = vunpack.c.h.b16 %v484
    %v1568 = vunpack.c.l.b16 %v485
    %v1569 = vunpack.c.h.b16 %v485
    %v1570 = vunpack.c.l.b16 %v486
    %v1571 = vunpack.c.h.b16 %v486
    %v1572 = vunpack.c.l.b16 %v487
    %v1573 = vunpack.c.h.b16 %v487
    %v1574 = vunpack.c.l.b16 %v488
    %v1575 = vunpack.c.h.b16 %v488
    %v1576 = vunpack.c.l.b16 %v489
    %v1577 = vunpack.c.h.b16 %v489
    %v1578 = vunpack.c.l.b16 %v490
    %v1579 = vunpack.c.h.b16 %v490
    %v1580 = vunpack.c.l.b16 %v491
    %v1581 = vunpack.c.h.b16 %v491
    %v1582 = vunpack.c.l.b16 %v492
    %v1583 = vunpack.c.h.b16 %v492
    %v1584 = vunpack.c.l.b16 %v493
    %v1585 = vunpack.c.h.b16 %v493
    %v1586 = vunpack.c.l.b16 %v494
    %v1587 = vunpack.c.h.b16 %v494
    %v1588 = vunpack.c.l.b16 %v495
    %v1589 = vunpack.c.h.b16 %v495
    %v1590 = vunpack.c.l.b16 %v496
    %v1591 = vunpack.c.h.b16 %v496
    %v1592 = vunpack.c.l.b16 %v497
    %v1593 = vunpack.c.h.b16 %v497
    %v1594 = vunpack.c.l.b16 %v498
    %v1595 = vunpack.c.h.b16 %v498
    %v1596 = vunpack.c.l.b16 %v499
    %v1597 = vunpack.c.h.b16 %v499
    %v1598 = vunpack.c.l.b16 %v500
    %v1599 = vunpack.c.h.b16 %v500
    %v1600 = vunpack.c.l.b16 %v501
    %v1601 = vunpack.c.h.b16 %v501
    %v1602 = vunpack.c.l.b16 %v502
    %v1603 = vunpack.c.h.b16 %v502
    %v1604 = vunpack.c.l.b16 %v503
    %v1605 = vunpack.c.h.b16 %v503
    %v1606 = vunpack.c.l.b16 %v504
    %v1607 = vunpack.c.h.b16 %v504
    %v1608 = vunpack.c.l.b16 %v505
    %v1609 = vunpack.c.h.b16 %v505
    %v1610 = vunpack.c.l.b16 %v506
    %v1611 = vunpack.c.h.b16 %v506
    %v1612 = vunpack.c.l.b16 %v507
    %v1613 = vunpack.c.h.b16 %v507
    %v1614 = vunpack.c.l.b16 %v508
    %v1615 = vunpack.c.h.b16 %v508
    %v1616 = vunpack.c.l.b16 %v509
    %v1617 = vunpack.c.h.b16 %v509
    %v1618 = vunpack.c.l.b16 %v510
    %v1619 = vunpack.c.h.b16 %v510
    %v1620 = vunpack.c.l.b16 %v511
    %v1621 = vunpack.c.h.b16 %v511
    %v1622 = vunpack.c.l.b16 %v512
    %v1623 = vunpack.c.h.b16 %v512
    %v1624 = vunpack.c.l.b16 %v513
    %v1625 = vunpack.c.h.b16 %v513
    %v1626 = vunpack.c.l.b16 %v514
    %v1627 = vunpack.c.h.b16 %v514
    %v1628 = vunpack.c.l.b16 %v515
    %v1629 = vunpack.c.h.b16 %v515
    %v1630 = vunpack.c.l.b16 %v516
    %v1631 = vunpack.c.h.b16 %v516
    %v1632 = vunpack.c.l.b16 %v517
    %v1633 = vunpack.c.h.b16 %v517
    %v1634 = vunpack.c.l.b16 %v518
    %v1635 = vunpack.c.h.b16 %v518
    %v1636 = vunpack.c.l.b16 %v519
    %v1637 = vunpack.c.h.b16 %v519
    %v1638 = vunpack.c.l.b16 %v520
    %v1639 = vunpack.c.h.b16 %v520
    %v1640 = vunpack.c.l.b16 %v521
    %v1641 = vunpack.c.h.b16 %v521
    %v1642 = vunpack.c.l.b16 %v522
    %v1643 = vunpack.c.h.b16 %v522
    %v1644 = vunpack.c.l.b16 %v523
    %v1645 = vunpack.c.h.b16 %v523
    %v1646 = vunpack.c.l.b16 %v524
    %v1647 = vunpack.c.h.b16 %v524
    %v1648 = vunpack.c.l.b16 %v525
    %v1649 = vunpack.c.h.b16 %v525
    %v1650 = vunpack.c.l.b16 %v526
    %v1651 = vunpack.c.h.b16 %v526
    %v1652 = vunpack.c.l.b16 %v527
    %v1653 = vunpack.c.h.b16 %v527
    %v1654 = vunpack.c.l.b16 %v528
    %v1655 = vunpack.c.h.b16 %v528
    %v1656 = vunpack.c.l.b16 %v529
    %v1657 = vunpack.c.h.b16 %v529
    %v1658 = vunpack.c.l.b16 %v530
    %v1659 = vunpack.c.h.b16 %v530
    %v1660 = vunpack.c.l.b16 %v531
    %v1661 = vunpack.c.h.b16 %v531
    %v1662 = vunpack.c.l.b16 %v532
    %v1663 = vunpack.c.h.b16 %v532
    %v1664 = vunpack.c.l.b16 %v533
    %v1665 = vunpack.c.h.b16 %v533
    %v1666 = vunpack.c.l.b16 %v534
    %v1667 = vunpack.c.h.b16 %v534
    %v1668 = vunpack.c.l.b16 %v535
    %v1669 = vunpack.c.h.b16 %v535
    %v1670 = vunpack.c.l.b16 %v536
    %v1671 = vunpack.c.h.b16 %v536
    %v1672 = vunpack.c.l.b16 %v537
    %v1673 = vunpack.c.h.b16 %v537
    %v1674 = vunpack.c.l.b16 %v538
    %v1675 = vunpack.c.h.b16 %v538
    %v1676 = vunpack.c.l.b16 %v539
    %v1677 = vunpack.c.h.b16 %v539
    %v1678 = vunpack.c.l.b16 %v540
    %v1679 = vunpack.c.h.b16 %v540
    %v1680 = vunpack.c.l.b16 %v541
    %v1681 = vunpack.c.h.b16 %v541
    %v1682 = vunpack.c.l.b16 %v542
    %v1683 = vunpack.c.h.b16 %v542
    %v1684 = vunpack.c.l.b16 %v543
    %v1685 = vunpack.c.h.b16 %v543
    %v1686 = vunpack.c.l.b16 %v544
    %v1687 = vunpack.c.h.b16 %v544
    %v1688 = vunpack.c.l.b16 %v545
    %v1689 = vunpack.c.h.b16 %v545
    %v1690 = vunpack.c.l.b16 %v546
    %v1691 = vunpack.c.h.b16 %v546
    %v1692 = vunpack.c.l.b16 %v547
    %v1693 = vunpack.c.h.b16 %v547
    %v1694 = vunpack.c.l.b16 %v548
    %v1695 = vunpack.c.h.b16 %v548
    %v1696 = vunpack.c.l.b16 %v549
    %v1697 = vunpack.c.h.b16 %v549
    %v1698 = vunpack.c.l.b16 %v550
    %v1699 = vunpack.c.h.b16 %v550
    %v1700 = vunpack.c.l.b16 %v551
    %v1701 = vunpack.c.h.b16 %v551
    %v1702 = vunpack.c.l.b16 %v552
    %v1703 = vunpack.c.h.b16 %v552
    %v1704 = vunpack.c.l.b16 %v553
    %v1705 = vunpack.c.h.b16 %v553
    %v1706 = vunpack.c.l.b16 %v554
    %v1707 = vunpack.c.h.b16 %v554
    %v1708 = vunpack.c.l.b16 %v555
    %v1709 = vunpack.c.h.b16 %v555
    %v1710 = vunpack.c.l.b16 %v556
    %v1711 = vunpack.c.h.b16 %v556
    %v1712 = vunpack.c.l.b16 %v557
    %v1713 = vunpack.c.h.b16 %v557
    %v1714 = vunpack.c.l.b16 %v558
    %v1715 = vunpack.c.h.b16 %v558
    %v1716 = vunpack.c.l.b16 %v559
    %v1717 = vunpack.c.h.b16 %v559
    %v1718 = vunpack.c.l.b16 %v560
    %v1719 = vunpack.c.h.b16 %v560
    %v1720 = vunpack.c.l.b16 %v561
    %v1721 = vunpack.c.h.b16 %v561
    %v1722 = vunpack.c.l.b16 %v562
    %v1723 = vunpack.c.h.b16 %v562
    %v1724 = vunpack.c.l.b16 %v563
    %v1725 = vunpack.c.h.b16 %v563
    %v1726 = vunpack.c.l.b16 %v564
    %v1727 = vunpack.c.h.b16 %v564
    %v1728 = vunpack.c.l.b16 %v565
    %v1729 = vunpack.c.h.b16 %v565
    %v1730 = vunpack.c.l.b16 %v566
    %v1731 = vunpack.c.h.b16 %v566
    %v1732 = vunpack.c.l.b16 %v567
    %v1733 = vunpack.c.h.b16 %v567
    %v1734 = vunpack.c.l.b16 %v568
    %v1735 = vunpack.c.h.b16 %v568
    %v1736 = vunpack.c.l.b16 %v569
    %v1737 = vunpack.c.h.b16 %v569
    %v1738 = vunpack.c.l.b16 %v570
    %v1739 = vunpack.c.h.b16 %v570
    %v1740 = vunpack.c.l.b16 %v571
    %v1741 = vunpack.c.h.b16 %v571
    %v1742 = vunpack.c.l.b16 %v572
    %v1743 = vunpack.c.h.b16 %v572
    %v1744 = vunpack.c.l.b16 %v573
    %v1745 = vunpack.c.h.b16 %v573
    %v1746 = vunpack.c.l.b16 %v574
    %v1747 = vunpack.c.h.b16 %v574
    %v1748 = vunpack.c.l.b16 %v575
    %v1749 = vunpack.c.h.b16 %v575
    %v1750 = vunpack.c.l.b16 %v576
    %v1751 = vunpack.c.h.b16 %v576
    %v1752 = vunpack.c.l.b16 %v577
    %v1753 = vunpack.c.h.b16 %v577
    %v1754 = vunpack.c.l.b16 %v578
    %v1755 = vunpack.c.h.b16 %v578
    %v1756 = vunpack.c.l.b16 %v579
    %v1757 = vunpack.c.h.b16 %v579
    %v1758 = vunpack.c.l.b16 %v580
    %v1759 = vunpack.c.h.b16 %v580
    %v1760 = vunpack.c.l.b16 %v581
    %v1761 = vunpack.c.h.b16 %v581
    %v1762 = vunpack.c.l.b16 %v582
    %v1763 = vunpack.c.h.b16 %v582
    %v1764 = vunpack.c.l.b16 %v583
    %v1765 = vunpack.c.h.b16 %v583
    %v1766 = vunpack.c.l.b16 %v584
    %v1767 = vunpack.c.h.b16 %v584
    %v1768 = vunpack.c.l.b16 %v585
    %v1769 = vunpack.c.h.b16 %v585
    %v1770 = vunpack.c.l.b16 %v586
    %v1771 = vunpack.c.h.b16 %v586
    %v1772 = vunpack.c.l.b16 %v587
    %v1773 = vunpack.c.h.b16 %v587
    %v1774 = vunpack.c.l.b16 %v588
    %v1775 = vunpack.c.h.b16 %v588
    %v1776 = vunpack.c.l.b16 %v589
    %v1777 = vunpack.c.h.b16 %v589
    %v1778 = vunpack.c.l.b16 %v590
    %v1779 = vunpack.c.h.b16 %v590
    %v1780 = vunpack.c.l.b16 %v591
    %v1781 = vunpack.c.h.b16 %v591
    %v1782 = vunpack.c.l.b16 %v592
    %v1783 = vunpack.c.h.b16 %v592
    %v1784 = vunpack.c.l.b16 %v593
    %v1785 = vunpack.c.h.b16 %v593
    %v1786 = vunpack.c.l.b16 %v594
    %v1787 = vunpack.c.h.b16 %v594
    %v1788 = vunpack.c.l.b16 %v595
    %v1789 = vunpack.c.h.b16 %v595
    %v1790 = vpack.c.b16 %v1030, %v1022
    %v1791 = vpack.c.b16 %v1031, %v1023
    %v1792 = vpack.c.b16 %v1032, %v1024
    %v1793 = vpack.c.b16 %v1033, %v1025
    %v1794 = vpack.c.b16 %v1034, %v1026
    %v1795 = vpack.c.b16 %v1035, %v1027
    %v1796 = vpack.c.b16 %v1036, %v1028
    %v1797 = vpack.c.b16 %v1037, %v1029
    %v1798 = vpack.c.b16 %v1046, %v1038
    %v1799 = vpack.c.b16 %v1047, %v1039
    %v1800 = vpack.c.b16 %v1048, %v1040
    %v1801 = vpack.c.b16 %v1049, %v1041
    %v1802 = vpack.c.b16 %v1050, %v1042
    %v1803 = vpack.c.b16 %v1051, %v1043
    %v1804 = vpack.c.b16 %v1052, %v1044
    %v1805 = vpack.c.b16 %v1053, %v1045
    %v1806 = vpack.c.b16 %v1062, %v1054
    %v1807 = vpack.c.b16 %v1063, %v1055
    %v1808 = vpack.c.b16 %v1064, %v1056
    %v1809 = vpack.c.b16 %v1065, %v1057
    %v1810 = vpack.c.b16 %v1066, %v1058
    %v1811 = vpack.c.b16 %v1067, %v1059
    %v1812 = vpack.c.b16 %v1068, %v1060
    %v1813 = vpack.c.b16 %v1069, %v1061
    %v1814 = vpack.c.b16 %v1078, %v1070
    %v1815 = vpack.c.b16 %v1079, %v1071
    %v1816 = vpack.c.b16 %v1080, %v1072
    %v1817 = vpack.c.b16 %v1081, %v1073
    %v1818 = vpack.c.b16 %v1082, %v1074
    %v1819 = vpack.c.b16 %v1083, %v1075
    %v1820 = vpack.c.b16 %v1084, %v1076
    %v1821 = vpack.c.b16 %v1085, %v1077
    %v1822 = vpack.c.b16 %v1094, %v1086
    %v1823 = vpack.c.b16 %v1095, %v1087
    %v1824 = vpack.c.b16 %v1096, %v1088
    %v1825 = vpack.c.b16 %v1097, %v1089
    %v1826 = vpack.c.b16 %v1098, %v1090
    %v1827 = vpack.c.b16 %v1099, %v1091
    %v1828 = vpack.c.b16 %v1100, %v1092
    %v1829 = vpack.c.b16 %v1101, %v1093
    %v1830 = vpack.c.b16 %v1110, %v1102
    %v1831 = vpack.c.b16 %v1111, %v1103
    %v1832 = vpack.c.b16 %v1112, %v1104
    %v1833 = vpack.c.b16 %v1113, %v1105
    %v1834 = vpack.c.b16 %v1114, %v1106
    %v1835 = vpack.c.b16 %v1115, %v1107
    %v1836 = vpack.c.b16 %v1116, %v1108
    %v1837 = vpack.c.b16 %v1117, %v1109
    %v1838 = vpack.c.b16 %v1126, %v1118
    %v1839 = vpack.c.b16 %v1127, %v1119
    %v1840 = vpack.c.b16 %v1128, %v1120
    %v1841 = vpack.c.b16 %v1129, %v1121
    %v1842 = vpack.c.b16 %v1130, %v1122
    %v1843 = vpack.c.b16 %v1131, %v1123
    %v1844 = vpack.c.b16 %v1132, %v1124
    %v1845 = vpack.c.b16 %v1133, %v1125
    %v1846 = vpack.c.b16 %v1142, %v1134
    %v1847 = vpack.c.b16 %v1143, %v1135
    %v1848 = vpack.c.b16 %v1144, %v1136
    %v1849 = vpack.c.b16 %v1145, %v1137
    %v1850 = vpack.c.b16 %v1146, %v1138
    %v1851 = vpack.c.b16 %v1147, %v1139
    %v1852 = vpack.c.b16 %v1148, %v1140
    %v1853 = vpack.c.b16 %v1149, %v1141
    %v1854 = vpack.c.b16 %v1158, %v1150
    %v1855 = vpack.c.b16 %v1159, %v1151
    %v1856 = vpack.c.b16 %v1160, %v1152
    %v1857 = vpack.c.b16 %v1161, %v1153
    %v1858 = vpack.c.b16 %v1162, %v1154
    %v1859 = vpack.c.b16 %v1163, %v1155
    %v1860 = vpack.c.b16 %v1164, %v1156
    %v1861 = vpack.c.b16 %v1165, %v1157
    %v1862 = vpack.c.b16 %v1174, %v1166
    %v1863 = vpack.c.b16 %v1175, %v1167
    %v1864 = vpack.c.b16 %v1176, %v1168
    %v1865 = vpack.c.b16 %v1177, %v1169
    %v1866 = vpack.c.b16 %v1178, %v1170
    %v1867 = vpack.c.b16 %v1179, %v1171
    %v1868 = vpack.c.b16 %v1180, %v1172
    %v1869 = vpack.c.b16 %v1181, %v1173
    %v1870 = vpack.c.b16 %v1190, %v1182
    %v1871 = vpack.c.b16 %v1191, %v1183
    %v1872 = vpack.c.b16 %v1192, %v1184
    %v1873 = vpack.c.b16 %v1193, %v1185
    %v1874 = vpack.c.b16 %v1194, %v1186
    %v1875 = vpack.c.b16 %v1195, %v1187
    %v1876 = vpack.c.b16 %v1196, %v1188
    %v1877 = vpack.c.b16 %v1197, %v1189
    %v1878 = vpack.c.b16 %v1206, %v1198
    %v1879 = vpack.c.b16 %v1207, %v1199
    %v1880 = vpack.c.b16 %v1208, %v1200
    %v1881 = vpack.c.b16 %v1209, %v1201
    %v1882 = vpack.c.b16 %v1210, %v1202
    %v1883 = vpack.c.b16 %v1211, %v1203
    %v1884 = vpack.c.b16 %v1212, %v1204
    %v1885 = vpack.c.b16 %v1213, %v1205
    %v1886 = vpack.c.b16 %v1222, %v1214
    %v1887 = vpack.c.b16 %v1223, %v1215
    %v1888 = vpack.c.b16 %v1224, %v1216
    %v1889 = vpack.c.b16 %v1225, %v1217
    %v1890 = vpack.c.b16 %v1226, %v1218
    %v1891 = vpack.c.b16 %v1227, %v1219
    %v1892 = vpack.c.b16 %v1228, %v1220
    %v1893 = vpack.c.b16 %v1229, %v1221
    %v1894 = vpack.c.b16 %v1238, %v1230
    %v1895 = vpack.c.b16 %v1239, %v1231
    %v1896 = vpack.c.b16 %v1240, %v1232
    %v1897 = vpack.c.b16 %v1241, %v1233
    %v1898 = vpack.c.b16 %v1242, %v1234
    %v1899 = vpack.c.b16 %v1243, %v1235
    %v1900 = vpack.c.b16 %v1244, %v1236
    %v1901 = vpack.c.b16 %v1245, %v1237
    %v1902 = vpack.c.b16 %v1254, %v1246
    %v1903 = vpack.c.b16 %v1255, %v1247
    %v1904 = vpack.c.b16 %v1256, %v1248
    %v1905 = vpack.c.b16 %v1257, %v1249
    %v1906 = vpack.c.b16 %v1258, %v1250
    %v1907 = vpack.c.b16 %v1259, %v1251
    %v1908 = vpack.c.b16 %v1260, %v1252
    %v1909 = vpack.c.b16 %v1261, %v1253
    %v1910 = vpack.c.b16 %v1270, %v1262
    %v1911 = vpack.c.b16 %v1271, %v1263
    %v1912 = vpack.c.b16 %v1272, %v1264
    %v1913 = vpack.c.b16 %v1273, %v1265
    %v1914 = vpack.c.b16 %v1274, %v1266
    %v1915 = vpack.c.b16 %v1275, %v1267
    %v1916 = vpack.c.b16 %v1276, %v1268
    %v1917 = vpack.c.b16 %v1277, %v1269
    %v1918 = vpack.c.b16 %v1286, %v1278
    %v1919 = vpack.c.b16 %v1287, %v1279
    %v1920 = vpack.c.b16 %v1288, %v1280
    %v1921 = vpack.c.b16 %v1289, %v1281
    %v1922 = vpack.c.b16 %v1290, %v1282
    %v1923 = vpack.c.b16 %v1291, %v1283
    %v1924 = vpack.c.b16 %v1292, %v1284
    %v1925 = vpack.c.b16 %v1293, %v1285
    %v1926 = vpack.c.b16 %v1302, %v1294
    %v1927 = vpack.c.b16 %v1303, %v1295
    %v1928 = vpack.c.b16 %v1304, %v1296
    %v1929 = vpack.c.b16 %v1305, %v1297
    %v1930 = vpack.c.b16 %v1306, %v1298
    %v1931 = vpack.c.b16 %v1307, %v1299
    %v1932 = vpack.c.b16 %v1308, %v1300
    %v1933 = vpack.c.b16 %v1309, %v1301
    %v1934 = vpack.c.b16 %v1318, %v1310
    %v1935 = vpack.c.b16 %v1319, %v1311
    %v1936 = vpack.c.b16 %v1320, %v1312
    %v1937 = vpack.c.b16 %v1321, %v1313
    %v1938 = vpack.c.b16 %v1322, %v1314
    %v1939 = vpack.c.b16 %v1323, %v1315
    %v1940 = vpack.c.b16 %v1324, %v1316
    %v1941 = vpack.c.b16 %v1325, %v1317
    %v1942 = vpack.c.b16 %v1334, %v1326
    %v1943 = vpack.c.b16 %v1335, %v1327
    %v1944 = vpack.c.b16 %v1336, %v1328
    %v1945 = vpack.c.b16 %v1337, %v1329
    %v1946 = vpack.c.b16 %v1338, %v1330
    %v1947 = vpack.c.b16 %v1339, %v1331
    %v1948 = vpack.c.b16 %v1340, %v1332
    %v1949 = vpack.c.b16 %v1341, %v1333
    %v1950 = vpack.c.b16 %v1350, %v1342
    %v1951 = vpack.c.b16 %v1351, %v1343
    %v1952 = vpack.c.b16 %v1352, %v1344
    %v1953 = vpack.c.b16 %v1353, %v1345
    %v1954 = vpack.c.b16 %v1354, %v1346
    %v1955 = vpack.c.b16 %v1355, %v1347
    %v1956 = vpack.c.b16 %v1356, %v1348
    %v1957 = vpack.c.b16 %v1357, %v1349
    %v1958 = vpack.c.b16 %v1366, %v1358
    %v1959 = vpack.c.b16 %v1367, %v1359
    %v1960 = vpack.c.b16 %v1368, %v1360
    %v1961 = vpack.c.b16 %v1369, %v1361
    %v1962 = vpack.c.b16 %v1370, %v1362
    %v1963 = vpack.c.b16 %v1371, %v1363
    %v1964 = vpack.c.b16 %v1372, %v1364
    %v1965 = vpack.c.b16 %v1373, %v1365
    %v1966 = vpack.c.b16 %v1382, %v1374
    %v1967 = vpack.c.b16 %v1383, %v1375
    %v1968 = vpack.c.b16 %v1384, %v1376
    %v1969 = vpack.c.b16 %v1385, %v1377
    %v1970 = vpack.c.b16 %v1386, %v1378
    %v1971 = vpack.c.b16 %v1387, %v1379
    %v1972 = vpack.c.b16 %v1388, %v1380
    %v1973 = vpack.c.b16 %v1389, %v1381
    %v1974 = vpack.c.b16 %v1398, %v1390
    %v1975 = vpack.c.b16 %v1399, %v1391
    %v1976 = vpack.c.b16 %v1400, %v1392
    %v1977 = vpack.c.b16 %v1401, %v1393
    %v1978 = vpack.c.b16 %v1402, %v1394
    %v1979 = vpack.c.b16 %v1403, %v1395
    %v1980 = vpack.c.b16 %v1404, %v1396
    %v1981 = vpack.c.b16 %v1405, %v1397
    %v1982 = vpack.c.b16 %v1414, %v1406
    %v1983 = vpack.c.b16 %v1415, %v1407
    %v1984 = vpack.c.b16 %v1416, %v1408
    %v1985 = vpack.c.b16 %v1417, %v1409
    %v1986 = vpack.c.b16 %v1418, %v1410
    %v1987 = vpack.c.b16 %v1419, %v1411
    %v1988 = vpack.c.b16 %v1420, %v1412
    %v1989 = vpack.c.b16 %v1421, %v1413
    %v1990 = vpack.c.b16 %v1430, %v1422
    %v1991 = vpack.c.b16 %v1431, %v1423
    %v1992 = vpack.c.b16 %v1432, %v1424
    %v1993 = vpack.c.b16 %v1433, %v1425
    %v1994 = vpack.c.b16 %v1434, %v1426
    %v1995 = vpack.c.b16 %v1435, %v1427
    %v1996 = vpack.c.b16 %v1436, %v1428
    %v1997 = vpack.c.b16 %v1437, %v1429
    %v1998 = vpack.c.b16 %v1446, %v1438
    %v1999 = vpack.c.b16 %v1447, %v1439
    %v2000 = vpack.c.b16 %v1448, %v1440
    %v2001 = vpack.c.b16 %v1449, %v1441
    %v2002 = vpack.c.b16 %v1450, %v1442
    %v2003 = vpack.c.b16 %v1451, %v1443
    %v2004 = vpack.c.b16 %v1452, %v1444
    %v2005 = vpack.c.b16 %v1453, %v1445
    %v2006 = vpack.c.b16 %v1462, %v1454
    %v2007 = vpack.c.b16 %v1463, %v1455
    %v2008 = vpack.c.b16 %v1464, %v1456
    %v2009 = vpack.c.b16 %v1465, %v1457
    %v2010 = vpack.c.b16 %v1466, %v1458
    %v2011 = vpack.c.b16 %v1467, %v1459
    %v2012 = vpack.c.b16 %v1468, %v1460
    %v2013 = vpack.c.b16 %v1469, %v1461
    %v2014 = vpack.c.b16 %v1478, %v1470
    %v2015 = vpack.c.b16 %v1479, %v1471
    %v2016 = vpack.c.b16 %v1480, %v1472
    %v2017 = vpack.c.b16 %v1481, %v1473
    %v2018 = vpack.c.b16 %v1482, %v1474
    %v2019 = vpack.c.b16 %v1483, %v1475
    %v2020 = vpack.c.b16 %v1484, %v1476
    %v2021 = vpack.c.b16 %v1485, %v1477
    %v2022 = vpack.c.b16 %v1494, %v1486
    %v2023 = vpack.c.b16 %v1495, %v1487
    %v2024 = vpack.c.b16 %v1496, %v1488
    %v2025 = vpack.c.b16 %v1497, %v1489
    %v2026 = vpack.c.b16 %v1498, %v1490
    %v2027 = vpack.c.b16 %v1499, %v1491
    %v2028 = vpack.c.b16 %v1500, %v1492
    %v2029 = vpack.c.b16 %v1501, %v1493
    %v2030 = vpack.c.b16 %v1510, %v1502
    %v2031 = vpack.c.b16 %v1511, %v1503
    %v2032 = vpack.c.b16 %v1512, %v1504
    %v2033 = vpack.c.b16 %v1513, %v1505
    %v2034 = vpack.c.b16 %v1514, %v1506
    %v2035 = vpack.c.b16 %v1515, %v1507
    %v2036 = vpack.c.b16 %v1516, %v1508
    %v2037 = vpack.c.b16 %v1517, %v1509
    %v2038 = vpack.c.b16 %v1526, %v1518
    %v2039 = vpack.c.b16 %v1527, %v1519
    %v2040 = vpack.c.b16 %v1528, %v1520
    %v2041 = vpack.c.b16 %v1529, %v1521
    %v2042 = vpack.c.b16 %v1530, %v1522
    %v2043 = vpack.c.b16 %v1531, %v1523
    %v2044 = vpack.c.b16 %v1532, %v1524
    %v2045 = vpack.c.b16 %v1533, %v1525
    %v2046 = vpack.c.b16 %v1542, %v1534
    %v2047 = vpack.c.b16 %v1543, %v1535
    %v2048 = vpack.c.b16 %v1544, %v1536
    %v2049 = vpack.c.b16 %v1545, %v1537
    %v2050 = vpack.c.b16 %v1546, %v1538
    %v2051 = vpack.c.b16 %v1547, %v1539
    %v2052 = vpack.c.b16 %v1548, %v1540
    %v2053 = vpack.c.b16 %v1549, %v1541
    %v2054 = vpack.c.b16 %v1558, %v1550
    %v2055 = vpack.c.b16 %v1559, %v1551
    %v2056 = vpack.c.b16 %v1560, %v1552
    %v2057 = vpack.c.b16 %v1561, %v1553
    %v2058 = vpack.c.b16 %v1562, %v1554
    %v2059 = vpack.c.b16 %v1563, %v1555
    %v2060 = vpack.c.b16 %v1564, %v1556
    %v2061 = vpack.c.b16 %v1565, %v1557
    %v2062 = vpack.c.b16 %v1574, %v1566
    %v2063 = vpack.c.b16 %v1575, %v1567
    %v2064 = vpack.c.b16 %v1576, %v1568
    %v2065 = vpack.c.b16 %v1577, %v1569
    %v2066 = vpack.c.b16 %v1578, %v1570
    %v2067 = vpack.c.b16 %v1579, %v1571
    %v2068 = vpack.c.b16 %v1580, %v1572
    %v2069 = vpack.c.b16 %v1581, %v1573
    %v2070 = vpack.c.b16 %v1590, %v1582
    %v2071 = vpack.c.b16 %v1591, %v1583
    %v2072 = vpack.c.b16 %v1592, %v1584
    %v2073 = vpack.c.b16 %v1593, %v1585
    %v2074 = vpack.c.b16 %v1594, %v1586
    %v2075 = vpack.c.b16 %v1595, %v1587
    %v2076 = vpack.c.b16 %v1596, %v1588
    %v2077 = vpack.c.b16 %v1597, %v1589
    %v2078 = vpack.c.b16 %v1606, %v1598
    %v2079 = vpack.c.b16 %v1607, %v1599
    %v2080 = vpack.c.b16 %v1608, %v1600
    %v2081 = vpack.c.b16 %v1609, %v1601
    %v2082 = vpack.c.b16 %v1610, %v1602
    %v2083 = vpack.c.b16 %v1611, %v1603
    %v2084 = vpack.c.b16 %v1612, %v1604
    %v2085 = vpack.c.b16 %v1613, %v1605
    %v2086 = vpack.c.b16 %v1622, %v1614
    %v2087 = vpack.c.b16 %v1623, %v1615
    %v2088 = vpack.c.b16 %v1624, %v1616
    %v2089 = vpack.c.b16 %v1625, %v1617
    %v2090 = vpack.c.b16 %v1626, %v1618
    %v2091 = vpack.c.b16 %v1627, %v1619
    %v2092 = vpack.c.b16 %v1628, %v1620
    %v2093 = vpack.c.b16 %v1629, %v1621
    %v2094 = vpack.c.b16 %v1638, %v1630
    %v2095 = vpack.c.b16 %v1639, %v1631
    %v2096 = vpack.c.b16 %v1640, %v1632
    %v2097 = vpack.c.b16 %v1641, %v1633
    %v2098 = vpack.c.b16 %v1642, %v1634
    %v2099 = vpack.c.b16 %v1643, %v1635
    %v2100 = vpack.c.b16 %v1644, %v1636
    %v2101 = vpack.c.b16 %v1645, %v1637
    %v2102 = vpack.c.b16 %v1654, %v1646
    %v2103 = vpack.c.b16 %v1655, %v1647
    %v2104 = vpack.c.b16 %v1656, %v1648
    %v2105 = vpack.c.b16 %v1657, %v1649
    %v2106 = vpack.c.b16 %v1658, %v1650
    %v2107 = vpack.c.b16 %v1659, %v1651
    %v2108 = vpack.c.b16 %v1660, %v1652
    %v2109 = vpack.c.b16 %v1661, %v1653
    %v2110 = vpack.c.b16 %v1670, %v1662
    %v2111 = vpack.c.b16 %v1671, %v1663
    %v2112 = vpack.c.b16 %v1672, %v1664
    %v2113 = vpack.c.b16 %v1673, %v1665
    %v2114 = vpack.c.b16 %v1674, %v1666
    %v2115 = vpack.c.b16 %v1675, %v1667
    %v2116 = vpack.c.b16 %v1676, %v1668
    %v2117 = vpack.c.b16 %v1677, %v1669
    %v2118 = vpack.c.b16 %v1686, %v1678
    %v2119 = vpack.c.b16 %v1687, %v1679
    %v2120 = vpack.c.b16 %v1688, %v1680
    %v2121 = vpack.c.b16 %v1689, %v1681
    %v2122 = vpack.c.b16 %v1690, %v1682
    %v2123 = vpack.c.b16 %v1691, %v1683
    %v2124 = vpack.c.b16 %v1692, %v1684
    %v2125 = vpack.c.b16 %v1693, %v1685
    %v2126 = vpack.c.b16 %v1702, %v1694
    %v2127 = vpack.c.b16 %v1703, %v1695
    %v2128 = vpack.c.b16 %v1704, %v1696
    %v2129 = vpack.c.b16 %v1705, %v1697
    %v2130 = vpack.c.b16 %v1706, %v1698
    %v2131 = vpack.c.b16 %v1707, %v1699
    %v2132 = vpack.c.b16 %v1708, %v1700
    %v2133 = vpack.c.b16 %v1709, %v1701
    %v2134 = vpack.c.b16 %v1718, %v1710
    %v2135 = vpack.c.b16 %v1719, %v1711
    %v2136 = vpack.c.b16 %v1720, %v1712
    %v2137 = vpack.c.b16 %v1721, %v1713
    %v2138 = vpack.c.b16 %v1722, %v1714
    %v2139 = vpack.c.b16 %v1723, %v1715
    %v2140 = vpack.c.b16 %v1724, %v1716
    %v2141 = vpack.c.b16 %v1725, %v1717
    %v2142 = vpack.c.b16 %v1734, %v1726
    %v2143 = vpack.c.b16 %v1735, %v1727
    %v2144 = vpack.c.b16 %v1736, %v1728
    %v2145 = vpack.c.b16 %v1737, %v1729
    %v2146 = vpack.c.b16 %v1738, %v1730
    %v2147 = vpack.c.b16 %v1739, %v1731
    %v2148 = vpack.c.b16 %v1740, %v1732
    %v2149 = vpack.c.b16 %v1741, %v1733
    %v2150 = vpack.c.b16 %v1750, %v1742
    %v2151 = vpack.c.b16 %v1751, %v1743
    %v2152 = vpack.c.b16 %v1752, %v1744
    %v2153 = vpack.c.b16 %v1753, %v1745
    %v2154 = vpack.c.b16 %v1754, %v1746
    %v2155 = vpack.c.b16 %v1755, %v1747
    %v2156 = vpack.c.b16 %v1756, %v1748
    %v2157 = vpack.c.b16 %v1757, %v1749
    %v2158 = vpack.c.b16 %v1766, %v1758
    %v2159 = vpack.c.b16 %v1767, %v1759
    %v2160 = vpack.c.b16 %v1768, %v1760
    %v2161 = vpack.c.b16 %v1769, %v1761
    %v2162 = vpack.c.b16 %v1770, %v1762
    %v2163 = vpack.c.b16 %v1771, %v1763
    %v2164 = vpack.c.b16 %v1772, %v1764
    %v2165 = vpack.c.b16 %v1773, %v1765
    %v2166 = vpack.c.b16 %v1782, %v1774
    %v2167 = vpack.c.b16 %v1783, %v1775
    %v2168 = vpack.c.b16 %v1784, %v1776
    %v2169 = vpack.c.b16 %v1785, %v1777
    %v2170 = vpack.c.b16 %v1786, %v1778
    %v2171 = vpack.c.b16 %v1787, %v1779
    %v2172 = vpack.c.b16 %v1788, %v1780
    %v2173 = vpack.c.b16 %v1789, %v1781
    %2558 = vmatprep.subr.bf16.mxu0 %v1791
    %2559 = vmatpush1.bf16.msra.mxu0 %v1790
    %2560 = vmatprep.subr.bf16.mxu0 %v1799
    %2561 = vmatpush1.bf16.msra.mxu0 %v1798
    %2562 = vmatprep.subr.bf16.mxu0 %v1807
    %2563 = vmatpush1.bf16.msra.mxu0 %v1806
    %2564 = vmatprep.subr.bf16.mxu0 %v1815
    %2565 = vmatpush1.bf16.msra.mxu0 %v1814
    %2566 = vmatprep.subr.bf16.mxu0 %v1823
    %2567 = vmatpush1.bf16.msra.mxu0 %v1822
    %2568 = vmatprep.subr.bf16.mxu0 %v1831
    %2569 = vmatpush1.bf16.msra.mxu0 %v1830
    %2570 = vmatprep.subr.bf16.mxu0 %v1839
    %2571 = vmatpush1.bf16.msra.mxu0 %v1838
    %2572 = vmatprep.subr.bf16.mxu0 %v1847
    %2573 = vmatpush1.bf16.msra.mxu0 %v1846
    %2574 = vmatprep.subr.bf16.mxu0 %v1855
    %2575 = vmatpush1.bf16.msra.mxu0 %v1854
    %2576 = vmatprep.subr.bf16.mxu0 %v1863
    %2577 = vmatpush1.bf16.msra.mxu0 %v1862
    %2578 = vmatprep.subr.bf16.mxu0 %v1871
    %2579 = vmatpush1.bf16.msra.mxu0 %v1870
    %2580 = vmatprep.subr.bf16.mxu0 %v1879
    %2581 = vmatpush1.bf16.msra.mxu0 %v1878
    %2582 = vmatprep.subr.bf16.mxu0 %v1887
    %2583 = vmatpush1.bf16.msra.mxu0 %v1886
    %2584 = vmatprep.subr.bf16.mxu0 %v1895
    %2585 = vmatpush1.bf16.msra.mxu0 %v1894
    %2586 = vmatprep.subr.bf16.mxu0 %v1903
    %2587 = vmatpush1.bf16.msra.mxu0 %v1902
    %2588 = vmatprep.subr.bf16.mxu0 %v1911
    %2589 = vmatpush1.bf16.msra.mxu0 %v1910
    %2590 = vmatprep.mubr.bf16.mxu0 %v207
    %2591 = vmatmul.mubr.bf16.gmra.mrb[0].mxu0 %v206
    %v2592 = vpop.f32.mrb[0].mxu0
    %v2593 = vadd.f32 %v601, %v2592
    %v2594 = vpop.f32.mrb[0].mxu0
    %v2595 = vadd.f32 %v605, %v2594
    %v2596 = vpop.f32.mrb[0].mxu0
    %v2597 = vpop.f32.mrb[0].mxu0
    %2598 = vdwg.mxu0
    %2599 = vmatprep.subr.bf16.mxu0 %v1919
    %2600 = vmatpush1.bf16.msra.mxu0 %v1918
    %2601 = vmatprep.subr.bf16.mxu0 %v1927
    %2602 = vmatpush1.bf16.msra.mxu0 %v1926
    %2603 = vmatprep.subr.bf16.mxu0 %v1935
    %2604 = vmatpush1.bf16.msra.mxu0 %v1934
    %2605 = vmatprep.subr.bf16.mxu0 %v1943
    %2606 = vmatpush1.bf16.msra.mxu0 %v1942
    %2607 = vmatprep.subr.bf16.mxu0 %v1951
    %2608 = vmatpush1.bf16.msra.mxu0 %v1950
    %2609 = vmatprep.subr.bf16.mxu0 %v1959
    %2610 = vmatpush1.bf16.msra.mxu0 %v1958
    %2611 = vmatprep.subr.bf16.mxu0 %v1967
    %2612 = vmatpush1.bf16.msra.mxu0 %v1966
    %2613 = vmatprep.subr.bf16.mxu0 %v1975
    %2614 = vmatpush1.bf16.msra.mxu0 %v1974
    %2615 = vmatprep.subr.bf16.mxu0 %v1983
    %2616 = vmatpush1.bf16.msra.mxu0 %v1982
    %2617 = vmatprep.subr.bf16.mxu0 %v1991
    %2618 = vmatpush1.bf16.msra.mxu0 %v1990
    %2619 = vmatprep.subr.bf16.mxu0 %v1999
    %2620 = vmatpush1.bf16.msra.mxu0 %v1998
    %2621 = vmatprep.subr.bf16.mxu0 %v2007
    %2622 = vmatpush1.bf16.msra.mxu0 %v2006
    %2623 = vmatprep.subr.bf16.mxu0 %v2015
    %2624 = vmatpush1.bf16.msra.mxu0 %v2014
    %2625 = vmatprep.subr.bf16.mxu0 %v2023
    %2626 = vmatpush1.bf16.msra.mxu0 %v2022
    %2627 = vmatprep.subr.bf16.mxu0 %v2031
    %2628 = vmatpush1.bf16.msra.mxu0 %v2030
    %2629 = vmatprep.subr.bf16.mxu0 %v2039
    %2630 = vmatpush1.bf16.msra.mxu0 %v2038
    %2631 = vmatprep.mubr.bf16.mxu0 %v209
    %2632 = vmatmul.mubr.bf16.gmra.mrb[0].mxu0 %v208
    %v2633 = vpop.f32.mrb[0].mxu0
    %v2634 = vadd.f32 %v2593, %v2633
    %v2635 = vpop.f32.mrb[0].mxu0
    %v2636 = vadd.f32 %v2595, %v2635
    %v2637 = vpop.f32.mrb[0].mxu0
    %v2638 = vpop.f32.mrb[0].mxu0
    %2639 = vdwg.mxu0
    %2640 = vmatprep.subr.bf16.mxu0 %v2047
    %2641 = vmatpush1.bf16.msra.mxu0 %v2046
    %2642 = vmatprep.subr.bf16.mxu0 %v2055
    %2643 = vmatpush1.bf16.msra.mxu0 %v2054
    %2644 = vmatprep.subr.bf16.mxu0 %v2063
    %2645 = vmatpush1.bf16.msra.mxu0 %v2062
    %2646 = vmatprep.subr.bf16.mxu0 %v2071
    %2647 = vmatpush1.bf16.msra.mxu0 %v2070
    %2648 = vmatprep.subr.bf16.mxu0 %v2079
    %2649 = vmatpush1.bf16.msra.mxu0 %v2078
    %2650 = vmatprep.subr.bf16.mxu0 %v2087
    %2651 = vmatpush1.bf16.msra.mxu0 %v2086
    %2652 = vmatprep.subr.bf16.mxu0 %v2095
    %2653 = vmatpush1.bf16.msra.mxu0 %v2094
    %2654 = vmatprep.subr.bf16.mxu0 %v2103
    %2655 = vmatpush1.bf16.msra.mxu0 %v2102
    %2656 = vmatprep.subr.bf16.mxu0 %v2111
    %2657 = vmatpush1.bf16.msra.mxu0 %v2110
    %2658 = vmatprep.subr.bf16.mxu0 %v2119
    %2659 = vmatpush1.bf16.msra.mxu0 %v2118
    %2660 = vmatprep.subr.bf16.mxu0 %v2127
    %2661 = vmatpush1.bf16.msra.mxu0 %v2126
    %2662 = vmatprep.subr.bf16.mxu0 %v2135
    %2663 = vmatpush1.bf16.msra.mxu0 %v2134
    %2664 = vmatprep.subr.bf16.mxu0 %v2143
    %2665 = vmatpush1.bf16.msra.mxu0 %v2142
    %2666 = vmatprep.subr.bf16.mxu0 %v2151
    %2667 = vmatpush1.bf16.msra.mxu0 %v2150
    %2668 = vmatprep.subr.bf16.mxu0 %v2159
    %2669 = vmatpush1.bf16.msra.mxu0 %v2158
    %2670 = vmatprep.subr.bf16.mxu0 %v2167
    %2671 = vmatpush1.bf16.msra.mxu0 %v2166
    %2672 = vmatprep.mubr.bf16.mxu0 %v211
    %2673 = vmatmul.mubr.bf16.gmra.mrb[0].mxu0 %v210
    %v2674 = vpop.f32.mrb[0].mxu0
    %v2675 = vadd.f32 %v2634, %v2674
    %v2676 = vpop.f32.mrb[0].mxu0
    %v2677 = vadd.f32 %v2636, %v2676
    %v2678 = vpop.f32.mrb[0].mxu0
    %v2679 = vpop.f32.mrb[0].mxu0
    %2680 = vdwg.mxu0
    %2681 = vmatprep.subr.bf16.mxu0 %v1793
    %2682 = vmatpush1.bf16.msra.mxu0 %v1792
    %2683 = vmatprep.subr.bf16.mxu0 %v1801
    %2684 = vmatpush1.bf16.msra.mxu0 %v1800
    %2685 = vmatprep.subr.bf16.mxu0 %v1809
    %2686 = vmatpush1.bf16.msra.mxu0 %v1808
    %2687 = vmatprep.subr.bf16.mxu0 %v1817
    %2688 = vmatpush1.bf16.msra.mxu0 %v1816
    %2689 = vmatprep.subr.bf16.mxu0 %v1825
    %2690 = vmatpush1.bf16.msra.mxu0 %v1824
    %2691 = vmatprep.subr.bf16.mxu0 %v1833
    %2692 = vmatpush1.bf16.msra.mxu0 %v1832
    %2693 = vmatprep.subr.bf16.mxu0 %v1841
    %2694 = vmatpush1.bf16.msra.mxu0 %v1840
    %2695 = vmatprep.subr.bf16.mxu0 %v1849
    %2696 = vmatpush1.bf16.msra.mxu0 %v1848
    %2697 = vmatprep.subr.bf16.mxu0 %v1857
    %2698 = vmatpush1.bf16.msra.mxu0 %v1856
    %2699 = vmatprep.subr.bf16.mxu0 %v1865
    %2700 = vmatpush1.bf16.msra.mxu0 %v1864
    %2701 = vmatprep.subr.bf16.mxu0 %v1873
    %2702 = vmatpush1.bf16.msra.mxu0 %v1872
    %2703 = vmatprep.subr.bf16.mxu0 %v1881
    %2704 = vmatpush1.bf16.msra.mxu0 %v1880
    %2705 = vmatprep.subr.bf16.mxu0 %v1889
    %2706 = vmatpush1.bf16.msra.mxu0 %v1888
    %2707 = vmatprep.subr.bf16.mxu0 %v1897
    %2708 = vmatpush1.bf16.msra.mxu0 %v1896
    %2709 = vmatprep.subr.bf16.mxu0 %v1905
    %2710 = vmatpush1.bf16.msra.mxu0 %v1904
    %2711 = vmatprep.subr.bf16.mxu0 %v1913
    %2712 = vmatpush1.bf16.msra.mxu0 %v1912
    %2713 = vmatprep.mubr.bf16.mxu0 %v207
    %2714 = vmatmul.mubr.bf16.gmra.mrb[0].mxu0 %v206
    %v2715 = vpop.f32.mrb[0].mxu0
    %v2716 = vadd.f32 %v609, %v2715
    %v2717 = vpop.f32.mrb[0].mxu0
    %v2718 = vadd.f32 %v613, %v2717
    %v2719 = vpop.f32.mrb[0].mxu0
    %v2720 = vpop.f32.mrb[0].mxu0
    %2721 = vdwg.mxu0
    %2722 = vmatprep.subr.bf16.mxu0 %v1921
    %2723 = vmatpush1.bf16.msra.mxu0 %v1920
    %2724 = vmatprep.subr.bf16.mxu0 %v1929
    %2725 = vmatpush1.bf16.msra.mxu0 %v1928
    %2726 = vmatprep.subr.bf16.mxu0 %v1937
    %2727 = vmatpush1.bf16.msra.mxu0 %v1936
    %2728 = vmatprep.subr.bf16.mxu0 %v1945
    %2729 = vmatpush1.bf16.msra.mxu0 %v1944
    %2730 = vmatprep.subr.bf16.mxu0 %v1953
    %2731 = vmatpush1.bf16.msra.mxu0 %v1952
    %2732 = vmatprep.subr.bf16.mxu0 %v1961
    %2733 = vmatpush1.bf16.msra.mxu0 %v1960
    %2734 = vmatprep.subr.bf16.mxu0 %v1969
    %2735 = vmatpush1.bf16.msra.mxu0 %v1968
    %2736 = vmatprep.subr.bf16.mxu0 %v1977
    %2737 = vmatpush1.bf16.msra.mxu0 %v1976
    %2738 = vmatprep.subr.bf16.mxu0 %v1985
    %2739 = vmatpush1.bf16.msra.mxu0 %v1984
    %2740 = vmatprep.subr.bf16.mxu0 %v1993
    %2741 = vmatpush1.bf16.msra.mxu0 %v1992
    %2742 = vmatprep.subr.bf16.mxu0 %v2001
    %2743 = vmatpush1.bf16.msra.mxu0 %v2000
    %2744 = vmatprep.subr.bf16.mxu0 %v2009
    %2745 = vmatpush1.bf16.msra.mxu0 %v2008
    %2746 = vmatprep.subr.bf16.mxu0 %v2017
    %2747 = vmatpush1.bf16.msra.mxu0 %v2016
    %2748 = vmatprep.subr.bf16.mxu0 %v2025
    %2749 = vmatpush1.bf16.msra.mxu0 %v2024
    %2750 = vmatprep.subr.bf16.mxu0 %v2033
    %2751 = vmatpush1.bf16.msra.mxu0 %v2032
    %2752 = vmatprep.subr.bf16.mxu0 %v2041
    %2753 = vmatpush1.bf16.msra.mxu0 %v2040
    %2754 = vmatprep.mubr.bf16.mxu0 %v209
    %2755 = vmatmul.mubr.bf16.gmra.mrb[0].mxu0 %v208
    %v2756 = vpop.f32.mrb[0].mxu0
    %v2757 = vadd.f32 %v2716, %v2756
    %v2758 = vpop.f32.mrb[0].mxu0
    %v2759 = vadd.f32 %v2718, %v2758
    %v2760 = vpop.f32.mrb[0].mxu0
    %v2761 = vpop.f32.mrb[0].mxu0
    %2762 = vdwg.mxu0
    %2763 = vmatprep.subr.bf16.mxu0 %v2049
    %2764 = vmatpush1.bf16.msra.mxu0 %v2048
    %2765 = vmatprep.subr.bf16.mxu0 %v2057
    %2766 = vmatpush1.bf16.msra.mxu0 %v2056
    %2767 = vmatprep.subr.bf16.mxu0 %v2065
    %2768 = vmatpush1.bf16.msra.mxu0 %v2064
    %2769 = vmatprep.subr.bf16.mxu0 %v2073
    %2770 = vmatpush1.bf16.msra.mxu0 %v2072
    %2771 = vmatprep.subr.bf16.mxu0 %v2081
    %2772 = vmatpush1.bf16.msra.mxu0 %v2080
    %2773 = vmatprep.subr.bf16.mxu0 %v2089
    %2774 = vmatpush1.bf16.msra.mxu0 %v2088
    %2775 = vmatprep.subr.bf16.mxu0 %v2097
    %2776 = vmatpush1.bf16.msra.mxu0 %v2096
    %2777 = vmatprep.subr.bf16.mxu0 %v2105
    %2778 = vmatpush1.bf16.msra.mxu0 %v2104
    %2779 = vmatprep.subr.bf16.mxu0 %v2113
    %2780 = vmatpush1.bf16.msra.mxu0 %v2112
    %2781 = vmatprep.subr.bf16.mxu0 %v2121
    %2782 = vmatpush1.bf16.msra.mxu0 %v2120
    %2783 = vmatprep.subr.bf16.mxu0 %v2129
    %2784 = vmatpush1.bf16.msra.mxu0 %v2128
    %2785 = vmatprep.subr.bf16.mxu0 %v2137
    %2786 = vmatpush1.bf16.msra.mxu0 %v2136
    %2787 = vmatprep.subr.bf16.mxu0 %v2145
    %2788 = vmatpush1.bf16.msra.mxu0 %v2144
    %2789 = vmatprep.subr.bf16.mxu0 %v2153
    %2790 = vmatpush1.bf16.msra.mxu0 %v2152
    %2791 = vmatprep.subr.bf16.mxu0 %v2161
    %2792 = vmatpush1.bf16.msra.mxu0 %v2160
    %2793 = vmatprep.subr.bf16.mxu0 %v2169
    %2794 = vmatpush1.bf16.msra.mxu0 %v2168
    %2795 = vmatprep.mubr.bf16.mxu0 %v211
    %2796 = vmatmul.mubr.bf16.gmra.mrb[0].mxu0 %v210
    %v2797 = vpop.f32.mrb[0].mxu0
    %v2798 = vadd.f32 %v2757, %v2797
    %v2799 = vpop.f32.mrb[0].mxu0
    %v2800 = vadd.f32 %v2759, %v2799
    %v2801 = vpop.f32.mrb[0].mxu0
    %v2802 = vpop.f32.mrb[0].mxu0
    %2803 = vdwg.mxu0
    %2804 = vmatprep.subr.bf16.mxu0 %v1795
    %2805 = vmatpush1.bf16.msra.mxu0 %v1794
    %2806 = vmatprep.subr.bf16.mxu0 %v1803
    %2807 = vmatpush1.bf16.msra.mxu0 %v1802
    %2808 = vmatprep.subr.bf16.mxu0 %v1811
    %2809 = vmatpush1.bf16.msra.mxu0 %v1810
    %2810 = vmatprep.subr.bf16.mxu0 %v1819
    %2811 = vmatpush1.bf16.msra.mxu0 %v1818
    %2812 = vmatprep.subr.bf16.mxu0 %v1827
    %2813 = vmatpush1.bf16.msra.mxu0 %v1826
    %2814 = vmatprep.subr.bf16.mxu0 %v1835
    %2815 = vmatpush1.bf16.msra.mxu0 %v1834
    %2816 = vmatprep.subr.bf16.mxu0 %v1843
    %2817 = vmatpush1.bf16.msra.mxu0 %v1842
    %2818 = vmatprep.subr.bf16.mxu0 %v1851
    %2819 = vmatpush1.bf16.msra.mxu0 %v1850
    %2820 = vmatprep.subr.bf16.mxu0 %v1859
    %2821 = vmatpush1.bf16.msra.mxu0 %v1858
    %2822 = vmatprep.subr.bf16.mxu0 %v1867
    %2823 = vmatpush1.bf16.msra.mxu0 %v1866
    %2824 = vmatprep.subr.bf16.mxu0 %v1875
    %2825 = vmatpush1.bf16.msra.mxu0 %v1874
    %2826 = vmatprep.subr.bf16.mxu0 %v1883
    %2827 = vmatpush1.bf16.msra.mxu0 %v1882
    %2828 = vmatprep.subr.bf16.mxu0 %v1891
    %2829 = vmatpush1.bf16.msra.mxu0 %v1890
    %2830 = vmatprep.subr.bf16.mxu0 %v1899
    %2831 = vmatpush1.bf16.msra.mxu0 %v1898
    %2832 = vmatprep.subr.bf16.mxu0 %v1907
    %2833 = vmatpush1.bf16.msra.mxu0 %v1906
    %2834 = vmatprep.subr.bf16.mxu0 %v1915
    %2835 = vmatpush1.bf16.msra.mxu0 %v1914
    %2836 = vmatprep.mubr.bf16.mxu0 %v207
    %2837 = vmatmul.mubr.bf16.gmra.mrb[0].mxu0 %v206
    %v2838 = vpop.f32.mrb[0].mxu0
    %v2839 = vadd.f32 %v617, %v2838
    %v2840 = vpop.f32.mrb[0].mxu0
    %v2841 = vadd.f32 %v621, %v2840
    %v2842 = vpop.f32.mrb[0].mxu0
    %v2843 = vpop.f32.mrb[0].mxu0
    %2844 = vdwg.mxu0
    %2845 = vmatprep.subr.bf16.mxu0 %v1923
    %2846 = vmatpush1.bf16.msra.mxu0 %v1922
    %2847 = vmatprep.subr.bf16.mxu0 %v1931
    %2848 = vmatpush1.bf16.msra.mxu0 %v1930
    %2849 = vmatprep.subr.bf16.mxu0 %v1939
    %2850 = vmatpush1.bf16.msra.mxu0 %v1938
    %2851 = vmatprep.subr.bf16.mxu0 %v1947
    %2852 = vmatpush1.bf16.msra.mxu0 %v1946
    %2853 = vmatprep.subr.bf16.mxu0 %v1955
    %2854 = vmatpush1.bf16.msra.mxu0 %v1954
    %2855 = vmatprep.subr.bf16.mxu0 %v1963
    %2856 = vmatpush1.bf16.msra.mxu0 %v1962
    %2857 = vmatprep.subr.bf16.mxu0 %v1971
    %2858 = vmatpush1.bf16.msra.mxu0 %v1970
    %2859 = vmatprep.subr.bf16.mxu0 %v1979
    %2860 = vmatpush1.bf16.msra.mxu0 %v1978
    %2861 = vmatprep.subr.bf16.mxu0 %v1987
    %2862 = vmatpush1.bf16.msra.mxu0 %v1986
    %2863 = vmatprep.subr.bf16.mxu0 %v1995
    %2864 = vmatpush1.bf16.msra.mxu0 %v1994
    %2865 = vmatprep.subr.bf16.mxu0 %v2003
    %2866 = vmatpush1.bf16.msra.mxu0 %v2002
    %2867 = vmatprep.subr.bf16.mxu0 %v2011
    %2868 = vmatpush1.bf16.msra.mxu0 %v2010
    %2869 = vmatprep.subr.bf16.mxu0 %v2019
    %2870 = vmatpush1.bf16.msra.mxu0 %v2018
    %2871 = vmatprep.subr.bf16.mxu0 %v2027
    %2872 = vmatpush1.bf16.msra.mxu0 %v2026
    %2873 = vmatprep.subr.bf16.mxu0 %v2035
    %2874 = vmatpush1.bf16.msra.mxu0 %v2034
    %2875 = vmatprep.subr.bf16.mxu0 %v2043
    %2876 = vmatpush1.bf16.msra.mxu0 %v2042
    %2877 = vmatprep.mubr.bf16.mxu0 %v209
    %2878 = vmatmul.mubr.bf16.gmra.mrb[0].mxu0 %v208
    %v2879 = vpop.f32.mrb[0].mxu0
    %v2880 = vadd.f32 %v2839, %v2879
    %v2881 = vpop.f32.mrb[0].mxu0
    %v2882 = vadd.f32 %v2841, %v2881
    %v2883 = vpop.f32.mrb[0].mxu0
    %v2884 = vpop.f32.mrb[0].mxu0
    %2885 = vdwg.mxu0
    %2886 = vmatprep.subr.bf16.mxu0 %v2051
    %2887 = vmatpush1.bf16.msra.mxu0 %v2050
    %2888 = vmatprep.subr.bf16.mxu0 %v2059
    %2889 = vmatpush1.bf16.msra.mxu0 %v2058
    %2890 = vmatprep.subr.bf16.mxu0 %v2067
    %2891 = vmatpush1.bf16.msra.mxu0 %v2066
    %2892 = vmatprep.subr.bf16.mxu0 %v2075
    %2893 = vmatpush1.bf16.msra.mxu0 %v2074
    %2894 = vmatprep.subr.bf16.mxu0 %v2083
    %2895 = vmatpush1.bf16.msra.mxu0 %v2082
    %2896 = vmatprep.subr.bf16.mxu0 %v2091
    %2897 = vmatpush1.bf16.msra.mxu0 %v2090
    %2898 = vmatprep.subr.bf16.mxu0 %v2099
    %2899 = vmatpush1.bf16.msra.mxu0 %v2098
    %2900 = vmatprep.subr.bf16.mxu0 %v2107
    %2901 = vmatpush1.bf16.msra.mxu0 %v2106
    %2902 = vmatprep.subr.bf16.mxu0 %v2115
    %2903 = vmatpush1.bf16.msra.mxu0 %v2114
    %2904 = vmatprep.subr.bf16.mxu0 %v2123
    %2905 = vmatpush1.bf16.msra.mxu0 %v2122
    %2906 = vmatprep.subr.bf16.mxu0 %v2131
    %2907 = vmatpush1.bf16.msra.mxu0 %v2130
    %2908 = vmatprep.subr.bf16.mxu0 %v2139
    %2909 = vmatpush1.bf16.msra.mxu0 %v2138
    %2910 = vmatprep.subr.bf16.mxu0 %v2147
    %2911 = vmatpush1.bf16.msra.mxu0 %v2146
    %2912 = vmatprep.subr.bf16.mxu0 %v2155
    %2913 = vmatpush1.bf16.msra.mxu0 %v2154
    %2914 = vmatprep.subr.bf16.mxu0 %v2163
    %2915 = vmatpush1.bf16.msra.mxu0 %v2162
    %2916 = vmatprep.subr.bf16.mxu0 %v2171
    %2917 = vmatpush1.bf16.msra.mxu0 %v2170
    %2918 = vmatprep.mubr.bf16.mxu0 %v211
    %2919 = vmatmul.mubr.bf16.gmra.mrb[0].mxu0 %v210
    %v2920 = vpop.f32.mrb[0].mxu0
    %v2921 = vadd.f32 %v2880, %v2920
    %v2922 = vpop.f32.mrb[0].mxu0
    %v2923 = vadd.f32 %v2882, %v2922
    %v2924 = vpop.f32.mrb[0].mxu0
    %v2925 = vpop.f32.mrb[0].mxu0
    %2926 = vdwg.mxu0
    %2927 = vmatprep.subr.bf16.mxu0 %v1797
    %2928 = vmatpush1.bf16.msra.mxu0 %v1796
    %2929 = vmatprep.subr.bf16.mxu0 %v1805
    %2930 = vmatpush1.bf16.msra.mxu0 %v1804
    %2931 = vmatprep.subr.bf16.mxu0 %v1813
    %2932 = vmatpush1.bf16.msra.mxu0 %v1812
    %2933 = vmatprep.subr.bf16.mxu0 %v1821
    %2934 = vmatpush1.bf16.msra.mxu0 %v1820
    %2935 = vmatprep.subr.bf16.mxu0 %v1829
    %2936 = vmatpush1.bf16.msra.mxu0 %v1828
    %2937 = vmatprep.subr.bf16.mxu0 %v1837
    %2938 = vmatpush1.bf16.msra.mxu0 %v1836
    %2939 = vmatprep.subr.bf16.mxu0 %v1845
    %2940 = vmatpush1.bf16.msra.mxu0 %v1844
    %2941 = vmatprep.subr.bf16.mxu0 %v1853
    %2942 = vmatpush1.bf16.msra.mxu0 %v1852
    %2943 = vmatprep.subr.bf16.mxu0 %v1861
    %2944 = vmatpush1.bf16.msra.mxu0 %v1860
    %2945 = vmatprep.subr.bf16.mxu0 %v1869
    %2946 = vmatpush1.bf16.msra.mxu0 %v1868
    %2947 = vmatprep.subr.bf16.mxu0 %v1877
    %2948 = vmatpush1.bf16.msra.mxu0 %v1876
    %2949 = vmatprep.subr.bf16.mxu0 %v1885
    %2950 = vmatpush1.bf16.msra.mxu0 %v1884
    %2951 = vmatprep.subr.bf16.mxu0 %v1893
    %2952 = vmatpush1.bf16.msra.mxu0 %v1892
    %2953 = vmatprep.subr.bf16.mxu0 %v1901
    %2954 = vmatpush1.bf16.msra.mxu0 %v1900
    %2955 = vmatprep.subr.bf16.mxu0 %v1909
    %2956 = vmatpush1.bf16.msra.mxu0 %v1908
    %2957 = vmatprep.subr.bf16.mxu0 %v1917
    %2958 = vmatpush1.bf16.msra.mxu0 %v1916
    %2959 = vmatprep.mubr.bf16.mxu0 %v207
    %2960 = vmatmul.mubr.bf16.gmra.mrb[0].mxu0 %v206
    %v2961 = vpop.f32.mrb[0].mxu0
    %v2962 = vadd.f32 %v625, %v2961
    %v2963 = vpop.f32.mrb[0].mxu0
    %v2964 = vadd.f32 %v629, %v2963
    %v2965 = vpop.f32.mrb[0].mxu0
    %v2966 = vpop.f32.mrb[0].mxu0
    %2967 = vdwg.mxu0
    %2968 = vmatprep.subr.bf16.mxu0 %v1925
    %2969 = vmatpush1.bf16.msra.mxu0 %v1924
    %2970 = vmatprep.subr.bf16.mxu0 %v1933
    %2971 = vmatpush1.bf16.msra.mxu0 %v1932
    %2972 = vmatprep.subr.bf16.mxu0 %v1941
    %2973 = vmatpush1.bf16.msra.mxu0 %v1940
    %2974 = vmatprep.subr.bf16.mxu0 %v1949
    %2975 = vmatpush1.bf16.msra.mxu0 %v1948
    %2976 = vmatprep.subr.bf16.mxu0 %v1957
    %2977 = vmatpush1.bf16.msra.mxu0 %v1956
    %2978 = vmatprep.subr.bf16.mxu0 %v1965
    %2979 = vmatpush1.bf16.msra.mxu0 %v1964
    %2980 = vmatprep.subr.bf16.mxu0 %v1973
    %2981 = vmatpush1.bf16.msra.mxu0 %v1972
    %2982 = vmatprep.subr.bf16.mxu0 %v1981
    %2983 = vmatpush1.bf16.msra.mxu0 %v1980
    %2984 = vmatprep.subr.bf16.mxu0 %v1989
    %2985 = vmatpush1.bf16.msra.mxu0 %v1988
    %2986 = vmatprep.subr.bf16.mxu0 %v1997
    %2987 = vmatpush1.bf16.msra.mxu0 %v1996
    %2988 = vmatprep.subr.bf16.mxu0 %v2005
    %2989 = vmatpush1.bf16.msra.mxu0 %v2004
    %2990 = vmatprep.subr.bf16.mxu0 %v2013
    %2991 = vmatpush1.bf16.msra.mxu0 %v2012
    %2992 = vmatprep.subr.bf16.mxu0 %v2021
    %2993 = vmatpush1.bf16.msra.mxu0 %v2020
    %2994 = vmatprep.subr.bf16.mxu0 %v2029
    %2995 = vmatpush1.bf16.msra.mxu0 %v2028
    %2996 = vmatprep.subr.bf16.mxu0 %v2037
    %2997 = vmatpush1.bf16.msra.mxu0 %v2036
    %2998 = vmatprep.subr.bf16.mxu0 %v2045
    %2999 = vmatpush1.bf16.msra.mxu0 %v2044
    %3000 = vmatprep.mubr.bf16.mxu0 %v209
    %3001 = vmatmul.mubr.bf16.gmra.mrb[0].mxu0 %v208
    %v3002 = vpop.f32.mrb[0].mxu0
    %v3003 = vadd.f32 %v2962, %v3002
    %v3004 = vpop.f32.mrb[0].mxu0
    %v3005 = vadd.f32 %v2964, %v3004
    %v3006 = vpop.f32.mrb[0].mxu0
    %v3007 = vpop.f32.mrb[0].mxu0
    %3008 = vdwg.mxu0
    %3009 = vmatprep.subr.bf16.mxu0 %v2053
    %3010 = vmatpush1.bf16.msra.mxu0 %v2052
    %3011 = vmatprep.subr.bf16.mxu0 %v2061
    %3012 = vmatpush1.bf16.msra.mxu0 %v2060
    %3013 = vmatprep.subr.bf16.mxu0 %v2069
    %3014 = vmatpush1.bf16.msra.mxu0 %v2068
    %3015 = vmatprep.subr.bf16.mxu0 %v2077
    %3016 = vmatpush1.bf16.msra.mxu0 %v2076
    %3017 = vmatprep.subr.bf16.mxu0 %v2085
    %3018 = vmatpush1.bf16.msra.mxu0 %v2084
    %3019 = vmatprep.subr.bf16.mxu0 %v2093
    %3020 = vmatpush1.bf16.msra.mxu0 %v2092
    %3021 = vmatprep.subr.bf16.mxu0 %v2101
    %3022 = vmatpush1.bf16.msra.mxu0 %v2100
    %3023 = vmatprep.subr.bf16.mxu0 %v2109
    %3024 = vmatpush1.bf16.msra.mxu0 %v2108
    %3025 = vmatprep.subr.bf16.mxu0 %v2117
    %3026 = vmatpush1.bf16.msra.mxu0 %v2116
    %3027 = vmatprep.subr.bf16.mxu0 %v2125
    %3028 = vmatpush1.bf16.msra.mxu0 %v2124
    %3029 = vmatprep.subr.bf16.mxu0 %v2133
    %3030 = vmatpush1.bf16.msra.mxu0 %v2132
    %3031 = vmatprep.subr.bf16.mxu0 %v2141
    %3032 = vmatpush1.bf16.msra.mxu0 %v2140
    %3033 = vmatprep.subr.bf16.mxu0 %v2149
    %3034 = vmatpush1.bf16.msra.mxu0 %v2148
    %3035 = vmatprep.subr.bf16.mxu0 %v2157
    %3036 = vmatpush1.bf16.msra.mxu0 %v2156
    %3037 = vmatprep.subr.bf16.mxu0 %v2165
    %3038 = vmatpush1.bf16.msra.mxu0 %v2164
    %3039 = vmatprep.subr.bf16.mxu0 %v2173
    %3040 = vmatpush1.bf16.msra.mxu0 %v2172
    %3041 = vmatprep.mubr.bf16.mxu0 %v211
    %3042 = vmatmul.mubr.bf16.gmra.mrb[0].mxu0 %v210
    %v3043 = vpop.f32.mrb[0].mxu0
    %v3044 = vadd.f32 %v3003, %v3043
    %v3045 = vpop.f32.mrb[0].mxu0
    %v3046 = vadd.f32 %v3005, %v3045
    %v3047 = vpop.f32.mrb[0].mxu0
    %v3048 = vpop.f32.mrb[0].mxu0
    %3049 = vdwg.mxu0
    %v3050 = vpack.c.bf16 %v2675, %v2675
    %v3051 = vpack.c.bf16 %v2677, %v2677
    %v3052 = vpack.c.bf16 %v2798, %v2798
    %v3053 = vpack.c.bf16 %v2800, %v2800
    %v3054 = vpack.c.bf16 %v2921, %v2921
    %v3055 = vpack.c.bf16 %v2923, %v2923
    %v3056 = vpack.c.bf16 %v3044, %v3044
    %v3057 = vpack.c.bf16 %v3046, %v3046
    %v3058 = vmul.bf16 %v3050, 1056980736
    %v3059 = vmul.bf16 %v3051, 1056980736
    %v3060 = vmul.bf16 %v3052, 1056980736
    %v3061 = vmul.bf16 %v3053, 1056980736
    %v3062 = vmul.bf16 %v3054, 1056980736
    %v3063 = vmul.bf16 %v3055, 1056980736
    %v3064 = vmul.bf16 %v3056, 1056980736
    %v3065 = vmul.bf16 %v3057, 1056980736
    %v3066 = vmul.bf16 %v3050, 1027030327
    %v3067 = vmul.bf16 %v3051, 1027030327
    %v3068 = vmul.bf16 %v3052, 1027030327
    %v3069 = vmul.bf16 %v3053, 1027030327
    %v3070 = vmul.bf16 %v3054, 1027030327
    %v3071 = vmul.bf16 %v3055, 1027030327
    %v3072 = vmul.bf16 %v3056, 1027030327
    %v3073 = vmul.bf16 %v3057, 1027030327
    %v3074 = vmul.bf16 %v3066, %v3050
    %v3075 = vmul.bf16 %v3067, %v3051
    %v3076 = vmul.bf16 %v3068, %v3052
    %v3077 = vmul.bf16 %v3069, %v3053
    %v3078 = vmul.bf16 %v3070, %v3054
    %v3079 = vmul.bf16 %v3071, %v3055
    %v3080 = vmul.bf16 %v3072, %v3056
    %v3081 = vmul.bf16 %v3073, %v3057
    %v3082 = vmul.bf16 %v3074, %v3050
    %v3083 = vmul.bf16 %v3075, %v3051
    %v3084 = vmul.bf16 %v3076, %v3052
    %v3085 = vmul.bf16 %v3077, %v3053
    %v3086 = vmul.bf16 %v3078, %v3054
    %v3087 = vmul.bf16 %v3079, %v3055
    %v3088 = vmul.bf16 %v3080, %v3056
    %v3089 = vmul.bf16 %v3081, %v3057
    %v3090 = vadd.bf16 %v3050, %v3082
    %v3091 = vadd.bf16 %v3051, %v3083
    %v3092 = vadd.bf16 %v3052, %v3084
    %v3093 = vadd.bf16 %v3053, %v3085
    %v3094 = vadd.bf16 %v3054, %v3086
    %v3095 = vadd.bf16 %v3055, %v3087
    %v3096 = vadd.bf16 %v3056, %v3088
    %v3097 = vadd.bf16 %v3057, %v3089
    %v3098 = vmul.bf16 %v3090, 1061961548
    %v3099 = vmul.bf16 %v3091, 1061961548
    %v3100 = vmul.bf16 %v3092, 1061961548
    %v3101 = vmul.bf16 %v3093, 1061961548
    %v3102 = vmul.bf16 %v3094, 1061961548
    %v3103 = vmul.bf16 %v3095, 1061961548
    %v3104 = vmul.bf16 %v3096, 1061961548
    %v3105 = vmul.bf16 %v3097, 1061961548
    %v3106 = vtanh.bf16.pop %v3098
    %v3107 = vtanh.bf16.pop %v3099
    %v3108 = vtanh.bf16.pop %v3100
    %v3109 = vtanh.bf16.pop %v3101
    %v3110 = vtanh.bf16.pop %v3102
    %v3111 = vtanh.bf16.pop %v3103
    %v3112 = vtanh.bf16.pop %v3104
    %v3113 = vtanh.bf16.pop %v3105
    %v3114 = vadd.bf16 %v3106, 1065369472
    %v3115 = vadd.bf16 %v3107, 1065369472
    %v3116 = vadd.bf16 %v3108, 1065369472
    %v3117 = vadd.bf16 %v3109, 1065369472
    %v3118 = vadd.bf16 %v3110, 1065369472
    %v3119 = vadd.bf16 %v3111, 1065369472
    %v3120 = vadd.bf16 %v3112, 1065369472
    %v3121 = vadd.bf16 %v3113, 1065369472
    %v3122 = vmul.bf16 %v3058, %v3114
    %v3123 = vmul.bf16 %v3059, %v3115
    %v3124 = vmul.bf16 %v3060, %v3116
    %v3125 = vmul.bf16 %v3061, %v3117
    %v3126 = vmul.bf16 %v3062, %v3118
    %v3127 = vmul.bf16 %v3063, %v3119
    %v3128 = vmul.bf16 %v3064, %v3120
    %v3129 = vmul.bf16 %v3065, %v3121
    %v3130 = vld [vmem:[#allocation8] sm:$0xff]
    %v3131 = vld [vmem:[#allocation8 + $0x8] sm:$0xff]
    %v3132 = vld [vmem:[#allocation8 + $0x10] sm:$0xff]
    %v3133 = vld [vmem:[#allocation8 + $0x18] sm:$0xff]
    %v3134 = vld [vmem:[#allocation8 + $0x20] sm:$0xff]
    %v3135 = vld [vmem:[#allocation8 + $0x28] sm:$0xff]
    %v3136 = vld [vmem:[#allocation8 + $0x30] sm:$0xff]
    %v3137 = vld [vmem:[#allocation8 + $0x38] sm:$0xff]
    %v3138 = vld [vmem:[#allocation8 + $0x40] sm:$0xff]
    %v3139 = vld [vmem:[#allocation8 + $0x48] sm:$0xff]
    %v3140 = vld [vmem:[#allocation8 + $0x50] sm:$0xff]
    %v3141 = vld [vmem:[#allocation8 + $0x58] sm:$0xff]
    %v3142 = vld [vmem:[#allocation8 + $0x60] sm:$0xff]
    %v3143 = vld [vmem:[#allocation8 + $0x68] sm:$0xff]
    %v3144 = vld [vmem:[#allocation8 + $0x70] sm:$0xff]
    %v3145 = vld [vmem:[#allocation8 + $0x78] sm:$0xff]
    %v3146 = vld [vmem:[#allocation8 + $0x80] sm:$0xff]
    %v3147 = vld [vmem:[#allocation8 + $0x88] sm:$0xff]
    %v3148 = vld [vmem:[#allocation8 + $0x90] sm:$0xff]
    %v3149 = vld [vmem:[#allocation8 + $0x98] sm:$0xff]
    %v3150 = vld [vmem:[#allocation8 + $0xa0] sm:$0xff]
    %v3151 = vld [vmem:[#allocation8 + $0xa8] sm:$0xff]
    %v3152 = vld [vmem:[#allocation8 + $0xb0] sm:$0xff]
    %v3153 = vld [vmem:[#allocation8 + $0xb8] sm:$0xff]
    %v3154 = vld [vmem:[#allocation8 + $0xc0] sm:$0xff]
    %v3155 = vld [vmem:[#allocation8 + $0xc8] sm:$0xff]
    %v3156 = vld [vmem:[#allocation8 + $0xd0] sm:$0xff]
    %v3157 = vld [vmem:[#allocation8 + $0xd8] sm:$0xff]
    %v3158 = vld [vmem:[#allocation8 + $0xe0] sm:$0xff]
    %v3159 = vld [vmem:[#allocation8 + $0xe8] sm:$0xff]
    %v3160 = vld [vmem:[#allocation8 + $0xf0] sm:$0xff]
    %v3161 = vld [vmem:[#allocation8 + $0xf8] sm:$0xff]
    %v3162 = vld [vmem:[#allocation8 + $0x100] sm:$0xff]
    %v3163 = vld [vmem:[#allocation8 + $0x108] sm:$0xff]
    %v3164 = vld [vmem:[#allocation8 + $0x110] sm:$0xff]
    %v3165 = vld [vmem:[#allocation8 + $0x118] sm:$0xff]
    %v3166 = vld [vmem:[#allocation8 + $0x120] sm:$0xff]
    %v3167 = vld [vmem:[#allocation8 + $0x128] sm:$0xff]
    %v3168 = vld [vmem:[#allocation8 + $0x130] sm:$0xff]
    %v3169 = vld [vmem:[#allocation8 + $0x138] sm:$0xff]
    %v3170 = vld [vmem:[#allocation8 + $0x140] sm:$0xff]
    %v3171 = vld [vmem:[#allocation8 + $0x148] sm:$0xff]
    %v3172 = vld [vmem:[#allocation8 + $0x150] sm:$0xff]
    %v3173 = vld [vmem:[#allocation8 + $0x158] sm:$0xff]
    %v3174 = vld [vmem:[#allocation8 + $0x160] sm:$0xff]
    %v3175 = vld [vmem:[#allocation8 + $0x168] sm:$0xff]
    %v3176 = vld [vmem:[#allocation8 + $0x170] sm:$0xff]
    %v3177 = vld [vmem:[#allocation8 + $0x178] sm:$0xff]
    %v3178 = vld [vmem:[#allocation8 + $0x180] sm:$0xff]
    %v3179 = vld [vmem:[#allocation8 + $0x188] sm:$0xff]
    %v3180 = vld [vmem:[#allocation8 + $0x190] sm:$0xff]
    %v3181 = vld [vmem:[#allocation8 + $0x198] sm:$0xff]
    %v3182 = vld [vmem:[#allocation8 + $0x1a0] sm:$0xff]
    %v3183 = vld [vmem:[#allocation8 + $0x1a8] sm:$0xff]
    %v3184 = vld [vmem:[#allocation8 + $0x1b0] sm:$0xff]
    %v3185 = vld [vmem:[#allocation8 + $0x1b8] sm:$0xff]
    %v3186 = vld [vmem:[#allocation8 + $0x1c0] sm:$0xff]
    %v3187 = vld [vmem:[#allocation8 + $0x1c8] sm:$0xff]
    %v3188 = vld [vmem:[#allocation8 + $0x1d0] sm:$0xff]
    %v3189 = vld [vmem:[#allocation8 + $0x1d8] sm:$0xff]
    %v3190 = vld [vmem:[#allocation8 + $0x1e0] sm:$0xff]
    %v3191 = vld [vmem:[#allocation8 + $0x1e8] sm:$0xff]
    %v3192 = vld [vmem:[#allocation8 + $0x1f0] sm:$0xff]
    %v3193 = vld [vmem:[#allocation8 + $0x1f8] sm:$0xff]
    %v3194 = vld [vmem:[#allocation9] sm:$0x3]
    %v3196 = vlaneseq
    %v3197 = vshrl.u32 %v3196, 7
    %v3198 = vsub.s32 0, %v3197
    %v3199 = vrot.slane %v3194, %v3198
    %v3200 = vlaneseq
    %v3201 = vshrl.u32 %v3200, 7
    %v3202 = vsub.s32 1, %v3201
    %v3203 = vrot.slane %v3194, %v3202
    %v3270 = vunpack.c.l.b16 %v3130
    %v3271 = vunpack.c.h.b16 %v3130
    %v3272 = vunpack.c.l.b16 %v3131
    %v3273 = vunpack.c.h.b16 %v3131
    %v3274 = vunpack.c.l.b16 %v3132
    %v3275 = vunpack.c.h.b16 %v3132
    %v3276 = vunpack.c.l.b16 %v3133
    %v3277 = vunpack.c.h.b16 %v3133
    %v3278 = vunpack.c.l.b16 %v3134
    %v3279 = vunpack.c.h.b16 %v3134
    %v3280 = vunpack.c.l.b16 %v3135
    %v3281 = vunpack.c.h.b16 %v3135
    %v3282 = vunpack.c.l.b16 %v3136
    %v3283 = vunpack.c.h.b16 %v3136
    %v3284 = vunpack.c.l.b16 %v3137
    %v3285 = vunpack.c.h.b16 %v3137
    %v3286 = vunpack.c.l.b16 %v3138
    %v3287 = vunpack.c.h.b16 %v3138
    %v3288 = vunpack.c.l.b16 %v3139
    %v3289 = vunpack.c.h.b16 %v3139
    %v3290 = vunpack.c.l.b16 %v3140
    %v3291 = vunpack.c.h.b16 %v3140
    %v3292 = vunpack.c.l.b16 %v3141
    %v3293 = vunpack.c.h.b16 %v3141
    %v3294 = vunpack.c.l.b16 %v3142
    %v3295 = vunpack.c.h.b16 %v3142
    %v3296 = vunpack.c.l.b16 %v3143
    %v3297 = vunpack.c.h.b16 %v3143
    %v3298 = vunpack.c.l.b16 %v3144
    %v3299 = vunpack.c.h.b16 %v3144
    %v3300 = vunpack.c.l.b16 %v3145
    %v3301 = vunpack.c.h.b16 %v3145
    %v3302 = vunpack.c.l.b16 %v3146
    %v3303 = vunpack.c.h.b16 %v3146
    %v3304 = vunpack.c.l.b16 %v3147
    %v3305 = vunpack.c.h.b16 %v3147
    %v3306 = vunpack.c.l.b16 %v3148
    %v3307 = vunpack.c.h.b16 %v3148
    %v3308 = vunpack.c.l.b16 %v3149
    %v3309 = vunpack.c.h.b16 %v3149
    %v3310 = vunpack.c.l.b16 %v3150
    %v3311 = vunpack.c.h.b16 %v3150
    %v3312 = vunpack.c.l.b16 %v3151
    %v3313 = vunpack.c.h.b16 %v3151
    %v3314 = vunpack.c.l.b16 %v3152
    %v3315 = vunpack.c.h.b16 %v3152
    %v3316 = vunpack.c.l.b16 %v3153
    %v3317 = vunpack.c.h.b16 %v3153
    %v3318 = vunpack.c.l.b16 %v3154
    %v3319 = vunpack.c.h.b16 %v3154
    %v3320 = vunpack.c.l.b16 %v3155
    %v3321 = vunpack.c.h.b16 %v3155
    %v3322 = vunpack.c.l.b16 %v3156
    %v3323 = vunpack.c.h.b16 %v3156
    %v3324 = vunpack.c.l.b16 %v3157
    %v3325 = vunpack.c.h.b16 %v3157
    %v3326 = vunpack.c.l.b16 %v3158
    %v3327 = vunpack.c.h.b16 %v3158
    %v3328 = vunpack.c.l.b16 %v3159
    %v3329 = vunpack.c.h.b16 %v3159
    %v3330 = vunpack.c.l.b16 %v3160
    %v3331 = vunpack.c.h.b16 %v3160
    %v3332 = vunpack.c.l.b16 %v3161
    %v3333 = vunpack.c.h.b16 %v3161
    %v3334 = vunpack.c.l.b16 %v3162
    %v3335 = vunpack.c.h.b16 %v3162
    %v3336 = vunpack.c.l.b16 %v3163
    %v3337 = vunpack.c.h.b16 %v3163
    %v3338 = vunpack.c.l.b16 %v3164
    %v3339 = vunpack.c.h.b16 %v3164
    %v3340 = vunpack.c.l.b16 %v3165
    %v3341 = vunpack.c.h.b16 %v3165
    %v3342 = vunpack.c.l.b16 %v3166
    %v3343 = vunpack.c.h.b16 %v3166
    %v3344 = vunpack.c.l.b16 %v3167
    %v3345 = vunpack.c.h.b16 %v3167
    %v3346 = vunpack.c.l.b16 %v3168
    %v3347 = vunpack.c.h.b16 %v3168
    %v3348 = vunpack.c.l.b16 %v3169
    %v3349 = vunpack.c.h.b16 %v3169
    %v3350 = vunpack.c.l.b16 %v3170
    %v3351 = vunpack.c.h.b16 %v3170
    %v3352 = vunpack.c.l.b16 %v3171
    %v3353 = vunpack.c.h.b16 %v3171
    %v3354 = vunpack.c.l.b16 %v3172
    %v3355 = vunpack.c.h.b16 %v3172
    %v3356 = vunpack.c.l.b16 %v3173
    %v3357 = vunpack.c.h.b16 %v3173
    %v3358 = vunpack.c.l.b16 %v3174
    %v3359 = vunpack.c.h.b16 %v3174
    %v3360 = vunpack.c.l.b16 %v3175
    %v3361 = vunpack.c.h.b16 %v3175
    %v3362 = vunpack.c.l.b16 %v3176
    %v3363 = vunpack.c.h.b16 %v3176
    %v3364 = vunpack.c.l.b16 %v3177
    %v3365 = vunpack.c.h.b16 %v3177
    %v3366 = vunpack.c.l.b16 %v3178
    %v3367 = vunpack.c.h.b16 %v3178
    %v3368 = vunpack.c.l.b16 %v3179
    %v3369 = vunpack.c.h.b16 %v3179
    %v3370 = vunpack.c.l.b16 %v3180
    %v3371 = vunpack.c.h.b16 %v3180
    %v3372 = vunpack.c.l.b16 %v3181
    %v3373 = vunpack.c.h.b16 %v3181
    %v3374 = vunpack.c.l.b16 %v3182
    %v3375 = vunpack.c.h.b16 %v3182
    %v3376 = vunpack.c.l.b16 %v3183
    %v3377 = vunpack.c.h.b16 %v3183
    %v3378 = vunpack.c.l.b16 %v3184
    %v3379 = vunpack.c.h.b16 %v3184
    %v3380 = vunpack.c.l.b16 %v3185
    %v3381 = vunpack.c.h.b16 %v3185
    %v3382 = vunpack.c.l.b16 %v3186
    %v3383 = vunpack.c.h.b16 %v3186
    %v3384 = vunpack.c.l.b16 %v3187
    %v3385 = vunpack.c.h.b16 %v3187
    %v3386 = vunpack.c.l.b16 %v3188
    %v3387 = vunpack.c.h.b16 %v3188
    %v3388 = vunpack.c.l.b16 %v3189
    %v3389 = vunpack.c.h.b16 %v3189
    %v3390 = vunpack.c.l.b16 %v3190
    %v3391 = vunpack.c.h.b16 %v3190
    %v3392 = vunpack.c.l.b16 %v3191
    %v3393 = vunpack.c.h.b16 %v3191
    %v3394 = vunpack.c.l.b16 %v3192
    %v3395 = vunpack.c.h.b16 %v3192
    %v3396 = vunpack.c.l.b16 %v3193
    %v3397 = vunpack.c.h.b16 %v3193
    %v3398 = vpack.c.b16 %v3272, %v3270
    %v3399 = vpack.c.b16 %v3273, %v3271
    %v3400 = vpack.c.b16 %v3276, %v3274
    %v3401 = vpack.c.b16 %v3277, %v3275
    %v3402 = vpack.c.b16 %v3280, %v3278
    %v3403 = vpack.c.b16 %v3281, %v3279
    %v3404 = vpack.c.b16 %v3284, %v3282
    %v3405 = vpack.c.b16 %v3285, %v3283
    %v3406 = vpack.c.b16 %v3288, %v3286
    %v3407 = vpack.c.b16 %v3289, %v3287
    %v3408 = vpack.c.b16 %v3292, %v3290
    %v3409 = vpack.c.b16 %v3293, %v3291
    %v3410 = vpack.c.b16 %v3296, %v3294
    %v3411 = vpack.c.b16 %v3297, %v3295
    %v3412 = vpack.c.b16 %v3300, %v3298
    %v3413 = vpack.c.b16 %v3301, %v3299
    %v3414 = vpack.c.b16 %v3304, %v3302
    %v3415 = vpack.c.b16 %v3305, %v3303
    %v3416 = vpack.c.b16 %v3308, %v3306
    %v3417 = vpack.c.b16 %v3309, %v3307
    %v3418 = vpack.c.b16 %v3312, %v3310
    %v3419 = vpack.c.b16 %v3313, %v3311
    %v3420 = vpack.c.b16 %v3316, %v3314
    %v3421 = vpack.c.b16 %v3317, %v3315
    %v3422 = vpack.c.b16 %v3320, %v3318
    %v3423 = vpack.c.b16 %v3321, %v3319
    %v3424 = vpack.c.b16 %v3324, %v3322
    %v3425 = vpack.c.b16 %v3325, %v3323
    %v3426 = vpack.c.b16 %v3328, %v3326
    %v3427 = vpack.c.b16 %v3329, %v3327
    %v3428 = vpack.c.b16 %v3332, %v3330
    %v3429 = vpack.c.b16 %v3333, %v3331
    %v3430 = vpack.c.b16 %v3336, %v3334
    %v3431 = vpack.c.b16 %v3337, %v3335
    %v3432 = vpack.c.b16 %v3340, %v3338
    %v3433 = vpack.c.b16 %v3341, %v3339
    %v3434 = vpack.c.b16 %v3344, %v3342
    %v3435 = vpack.c.b16 %v3345, %v3343
    %v3436 = vpack.c.b16 %v3348, %v3346
    %v3437 = vpack.c.b16 %v3349, %v3347
    %v3438 = vpack.c.b16 %v3352, %v3350
    %v3439 = vpack.c.b16 %v3353, %v3351
    %v3440 = vpack.c.b16 %v3356, %v3354
    %v3441 = vpack.c.b16 %v3357, %v3355
    %v3442 = vpack.c.b16 %v3360, %v3358
    %v3443 = vpack.c.b16 %v3361, %v3359
    %v3444 = vpack.c.b16 %v3364, %v3362
    %v3445 = vpack.c.b16 %v3365, %v3363
    %v3446 = vpack.c.b16 %v3368, %v3366
    %v3447 = vpack.c.b16 %v3369, %v3367
    %v3448 = vpack.c.b16 %v3372, %v3370
    %v3449 = vpack.c.b16 %v3373, %v3371
    %v3450 = vpack.c.b16 %v3376, %v3374
    %v3451 = vpack.c.b16 %v3377, %v3375
    %v3452 = vpack.c.b16 %v3380, %v3378
    %v3453 = vpack.c.b16 %v3381, %v3379
    %v3454 = vpack.c.b16 %v3384, %v3382
    %v3455 = vpack.c.b16 %v3385, %v3383
    %v3456 = vpack.c.b16 %v3388, %v3386
    %v3457 = vpack.c.b16 %v3389, %v3387
    %v3458 = vpack.c.b16 %v3392, %v3390
    %v3459 = vpack.c.b16 %v3393, %v3391
    %v3460 = vpack.c.b16 %v3396, %v3394
    %v3461 = vpack.c.b16 %v3397, %v3395
    %3526 = vmatprep.subr.bf16.mxu0 %v3399
    %3527 = vmatpush1.bf16.msra.mxu0 %v3398
    %3528 = vmatprep.subr.bf16.mxu0 %v3401
    %3529 = vmatpush1.bf16.msra.mxu0 %v3400
    %3530 = vmatprep.subr.bf16.mxu0 %v3403
    %3531 = vmatpush1.bf16.msra.mxu0 %v3402
    %3532 = vmatprep.subr.bf16.mxu0 %v3405
    %3533 = vmatpush1.bf16.msra.mxu0 %v3404
    %3534 = vmatprep.subr.bf16.mxu0 %v3407
    %3535 = vmatpush1.bf16.msra.mxu0 %v3406
    %3536 = vmatprep.subr.bf16.mxu0 %v3409
    %3537 = vmatpush1.bf16.msra.mxu0 %v3408
    %3538 = vmatprep.subr.bf16.mxu0 %v3411
    %3539 = vmatpush1.bf16.msra.mxu0 %v3410
    %3540 = vmatprep.subr.bf16.mxu0 %v3413
    %3541 = vmatpush1.bf16.msra.mxu0 %v3412
    %3542 = vmatprep.subr.bf16.mxu0 %v3415
    %3543 = vmatpush1.bf16.msra.mxu0 %v3414
    %3544 = vmatprep.subr.bf16.mxu0 %v3417
    %3545 = vmatpush1.bf16.msra.mxu0 %v3416
    %3546 = vmatprep.subr.bf16.mxu0 %v3419
    %3547 = vmatpush1.bf16.msra.mxu0 %v3418
    %3548 = vmatprep.subr.bf16.mxu0 %v3421
    %3549 = vmatpush1.bf16.msra.mxu0 %v3420
    %3550 = vmatprep.subr.bf16.mxu0 %v3423
    %3551 = vmatpush1.bf16.msra.mxu0 %v3422
    %3552 = vmatprep.subr.bf16.mxu0 %v3425
    %3553 = vmatpush1.bf16.msra.mxu0 %v3424
    %3554 = vmatprep.subr.bf16.mxu0 %v3427
    %3555 = vmatpush1.bf16.msra.mxu0 %v3426
    %3556 = vmatprep.subr.bf16.mxu0 %v3429
    %3557 = vmatpush1.bf16.msra.mxu0 %v3428
    %3558 = vmatprep.mubr.bf16.mxu0 %v3123
    %3559 = vmatmul.mubr.bf16.gmra.mrb[0].mxu0 %v3122
    %v3560 = vpop.f32.mrb[0].mxu0
    %v3561 = vadd.f32 %v3199, %v3560
    %v3562 = vpop.f32.mrb[0].mxu0
    %v3563 = vadd.f32 %v3203, %v3562
    %v3564 = vpop.f32.mrb[0].mxu0
    %v3565 = vpop.f32.mrb[0].mxu0
    %3566 = vdwg.mxu0
    %3567 = vmatprep.subr.bf16.mxu0 %v3431
    %3568 = vmatpush1.bf16.msra.mxu0 %v3430
    %3569 = vmatprep.subr.bf16.mxu0 %v3433
    %3570 = vmatpush1.bf16.msra.mxu0 %v3432
    %3571 = vmatprep.subr.bf16.mxu0 %v3435
    %3572 = vmatpush1.bf16.msra.mxu0 %v3434
    %3573 = vmatprep.subr.bf16.mxu0 %v3437
    %3574 = vmatpush1.bf16.msra.mxu0 %v3436
    %3575 = vmatprep.subr.bf16.mxu0 %v3439
    %3576 = vmatpush1.bf16.msra.mxu0 %v3438
    %3577 = vmatprep.subr.bf16.mxu0 %v3441
    %3578 = vmatpush1.bf16.msra.mxu0 %v3440
    %3579 = vmatprep.subr.bf16.mxu0 %v3443
    %3580 = vmatpush1.bf16.msra.mxu0 %v3442
    %3581 = vmatprep.subr.bf16.mxu0 %v3445
    %3582 = vmatpush1.bf16.msra.mxu0 %v3444
    %3583 = vmatprep.subr.bf16.mxu0 %v3447
    %3584 = vmatpush1.bf16.msra.mxu0 %v3446
    %3585 = vmatprep.subr.bf16.mxu0 %v3449
    %3586 = vmatpush1.bf16.msra.mxu0 %v3448
    %3587 = vmatprep.subr.bf16.mxu0 %v3451
    %3588 = vmatpush1.bf16.msra.mxu0 %v3450
    %3589 = vmatprep.subr.bf16.mxu0 %v3453
    %3590 = vmatpush1.bf16.msra.mxu0 %v3452
    %3591 = vmatprep.subr.bf16.mxu0 %v3455
    %3592 = vmatpush1.bf16.msra.mxu0 %v3454
    %3593 = vmatprep.subr.bf16.mxu0 %v3457
    %3594 = vmatpush1.bf16.msra.mxu0 %v3456
    %3595 = vmatprep.subr.bf16.mxu0 %v3459
    %3596 = vmatpush1.bf16.msra.mxu0 %v3458
    %3597 = vmatprep.subr.bf16.mxu0 %v3461
    %3598 = vmatpush1.bf16.msra.mxu0 %v3460
    %3599 = vmatprep.mubr.bf16.mxu0 %v3125
    %3600 = vmatmul.mubr.bf16.gmra.mrb[0].mxu0 %v3124
    %v3601 = vpop.f32.mrb[0].mxu0
    %v3602 = vadd.f32 %v3561, %v3601
    %v3603 = vpop.f32.mrb[0].mxu0
    %v3604 = vadd.f32 %v3563, %v3603
    %v3605 = vpop.f32.mrb[0].mxu0
    %v3606 = vpop.f32.mrb[0].mxu0
    %3607 = vdwg.mxu0
    %v3608 = vpack.c.bf16 %v3602, %v3602
    %v3609 = vpack.c.bf16 %v3604, %v3604
    %v3610 = vmul.bf16 %v3608, 1056980736
    %v3611 = vmul.bf16 %v3609, 1056980736
    %v3612 = vmul.bf16 %v3608, 1027030327
    %v3613 = vmul.bf16 %v3609, 1027030327
    %v3614 = vmul.bf16 %v3612, %v3608
    %v3615 = vmul.bf16 %v3613, %v3609
    %v3616 = vmul.bf16 %v3614, %v3608
    %v3617 = vmul.bf16 %v3615, %v3609
    %v3618 = vadd.bf16 %v3608, %v3616
    %v3619 = vadd.bf16 %v3609, %v3617
    %v3620 = vmul.bf16 %v3618, 1061961548
    %v3621 = vmul.bf16 %v3619, 1061961548
    %v3622 = vtanh.bf16.pop %v3620
    %v3623 = vtanh.bf16.pop %v3621
    %v3624 = vadd.bf16 %v3622, 1065369472
    %v3625 = vadd.bf16 %v3623, 1065369472
    %v3626 = vmul.bf16 %v3610, %v3624
    %v3627 = vmul.bf16 %v3611, %v3625
    %v3628 = vld [vmem:[#allocation11] sm:$0xf]
    %v3629 = vld [vmem:[#allocation11 + $0x4] sm:$0xf]
    %v3630 = vld [vmem:[#allocation11 + $0x8] sm:$0xf]
    %v3631 = vld [vmem:[#allocation11 + $0xc] sm:$0xf]
    %v3632 = vld [vmem:[#allocation11 + $0x10] sm:$0xf]
    %v3633 = vld [vmem:[#allocation11 + $0x14] sm:$0xf]
    %v3634 = vld [vmem:[#allocation11 + $0x18] sm:$0xf]
    %v3635 = vld [vmem:[#allocation11 + $0x1c] sm:$0xf]
    %v3636 = vld [vmem:[#allocation11 + $0x20] sm:$0xf]
    %v3637 = vld [vmem:[#allocation11 + $0x24] sm:$0xf]
    %v3638 = vld [vmem:[#allocation11 + $0x28] sm:$0xf]
    %v3639 = vld [vmem:[#allocation11 + $0x2c] sm:$0xf]
    %v3640 = vld [vmem:[#allocation11 + $0x30] sm:$0xf]
    %v3641 = vld [vmem:[#allocation11 + $0x34] sm:$0xf]
    %v3642 = vld [vmem:[#allocation11 + $0x38] sm:$0xf]
    %v3643 = vld [vmem:[#allocation11 + $0x3c] sm:$0xf]
    %v3644 = vld [vmem:[#allocation11 + $0x40] sm:$0xf]
    %v3645 = vld [vmem:[#allocation11 + $0x44] sm:$0xf]
    %v3646 = vld [vmem:[#allocation11 + $0x48] sm:$0xf]
    %v3647 = vld [vmem:[#allocation11 + $0x4c] sm:$0xf]
    %v3648 = vld [vmem:[#allocation11 + $0x50] sm:$0xf]
    %v3649 = vld [vmem:[#allocation11 + $0x54] sm:$0xf]
    %v3650 = vld [vmem:[#allocation11 + $0x58] sm:$0xf]
    %v3651 = vld [vmem:[#allocation11 + $0x5c] sm:$0xf]
    %v3652 = vld [vmem:[#allocation11 + $0x60] sm:$0xf]
    %v3653 = vld [vmem:[#allocation11 + $0x64] sm:$0xf]
    %v3654 = vld [vmem:[#allocation11 + $0x68] sm:$0xf]
    %v3655 = vld [vmem:[#allocation11 + $0x6c] sm:$0xf]
    %v3656 = vld [vmem:[#allocation11 + $0x70] sm:$0xf]
    %v3657 = vld [vmem:[#allocation11 + $0x74] sm:$0xf]
    %v3658 = vld [vmem:[#allocation11 + $0x78] sm:$0xf]
    %v3659 = vld [vmem:[#allocation11 + $0x7c] sm:$0xf]
    %v3660 = vld [vmem:[#allocation12] sm:$0x1]
    %v3662 = vlaneseq
    %v3663 = vshrl.u32 %v3662, 7
    %v3664 = vsub.s32 0, %v3663
    %v3665 = vrot.slane %v3660, %v3664
    %v3699 = vunpack.c.l.b16 %v3628
    %v3700 = vunpack.c.l.b16 %v3629
    %v3701 = vunpack.c.l.b16 %v3630
    %v3702 = vunpack.c.l.b16 %v3631
    %v3703 = vunpack.c.l.b16 %v3632
    %v3704 = vunpack.c.l.b16 %v3633
    %v3705 = vunpack.c.l.b16 %v3634
    %v3706 = vunpack.c.l.b16 %v3635
    %v3707 = vunpack.c.l.b16 %v3636
    %v3708 = vunpack.c.l.b16 %v3637
    %v3709 = vunpack.c.l.b16 %v3638
    %v3710 = vunpack.c.l.b16 %v3639
    %v3711 = vunpack.c.l.b16 %v3640
    %v3712 = vunpack.c.l.b16 %v3641
    %v3713 = vunpack.c.l.b16 %v3642
    %v3714 = vunpack.c.l.b16 %v3643
    %v3715 = vunpack.c.l.b16 %v3644
    %v3716 = vunpack.c.l.b16 %v3645
    %v3717 = vunpack.c.l.b16 %v3646
    %v3718 = vunpack.c.l.b16 %v3647
    %v3719 = vunpack.c.l.b16 %v3648
    %v3720 = vunpack.c.l.b16 %v3649
    %v3721 = vunpack.c.l.b16 %v3650
    %v3722 = vunpack.c.l.b16 %v3651
    %v3723 = vunpack.c.l.b16 %v3652
    %v3724 = vunpack.c.l.b16 %v3653
    %v3725 = vunpack.c.l.b16 %v3654
    %v3726 = vunpack.c.l.b16 %v3655
    %v3727 = vunpack.c.l.b16 %v3656
    %v3728 = vunpack.c.l.b16 %v3657
    %v3729 = vunpack.c.l.b16 %v3658
    %v3730 = vunpack.c.l.b16 %v3659
    %v3731 = vpack.c.b16 %v3700, %v3699
    %v3732 = vpack.c.b16 %v3702, %v3701
    %v3733 = vpack.c.b16 %v3704, %v3703
    %v3734 = vpack.c.b16 %v3706, %v3705
    %v3735 = vpack.c.b16 %v3708, %v3707
    %v3736 = vpack.c.b16 %v3710, %v3709
    %v3737 = vpack.c.b16 %v3712, %v3711
    %v3738 = vpack.c.b16 %v3714, %v3713
    %v3739 = vpack.c.b16 %v3716, %v3715
    %v3740 = vpack.c.b16 %v3718, %v3717
    %v3741 = vpack.c.b16 %v3720, %v3719
    %v3742 = vpack.c.b16 %v3722, %v3721
    %v3743 = vpack.c.b16 %v3724, %v3723
    %v3744 = vpack.c.b16 %v3726, %v3725
    %v3745 = vpack.c.b16 %v3728, %v3727
    %v3746 = vpack.c.b16 %v3730, %v3729
    %3763 = vmatprep.subr.bf16.mxu0 0
    %3764 = vmatpush1.bf16.msra.mxu0 %v3731
    %3765 = vmatprep.subr.bf16.mxu0 0
    %3766 = vmatpush1.bf16.msra.mxu0 %v3732
    %3767 = vmatprep.subr.bf16.mxu0 0
    %3768 = vmatpush1.bf16.msra.mxu0 %v3733
    %3769 = vmatprep.subr.bf16.mxu0 0
    %3770 = vmatpush1.bf16.msra.mxu0 %v3734
    %3771 = vmatprep.subr.bf16.mxu0 0
    %3772 = vmatpush1.bf16.msra.mxu0 %v3735
    %3773 = vmatprep.subr.bf16.mxu0 0
    %3774 = vmatpush1.bf16.msra.mxu0 %v3736
    %3775 = vmatprep.subr.bf16.mxu0 0
    %3776 = vmatpush1.bf16.msra.mxu0 %v3737
    %3777 = vmatprep.subr.bf16.mxu0 0
    %3778 = vmatpush1.bf16.msra.mxu0 %v3738
    %3779 = vmatprep.subr.bf16.mxu0 0
    %3780 = vmatpush1.bf16.msra.mxu0 %v3739
    %3781 = vmatprep.subr.bf16.mxu0 0
    %3782 = vmatpush1.bf16.msra.mxu0 %v3740
    %3783 = vmatprep.subr.bf16.mxu0 0
    %3784 = vmatpush1.bf16.msra.mxu0 %v3741
    %3785 = vmatprep.subr.bf16.mxu0 0
    %3786 = vmatpush1.bf16.msra.mxu0 %v3742
    %3787 = vmatprep.subr.bf16.mxu0 0
    %3788 = vmatpush1.bf16.msra.mxu0 %v3743
    %3789 = vmatprep.subr.bf16.mxu0 0
    %3790 = vmatpush1.bf16.msra.mxu0 %v3744
    %3791 = vmatprep.subr.bf16.mxu0 0
    %3792 = vmatpush1.bf16.msra.mxu0 %v3745
    %3793 = vmatprep.subr.bf16.mxu0 0
    %3794 = vmatpush1.bf16.msra.mxu0 %v3746
    %3795 = vmatprep.mubr.bf16.mxu0 %v3627
    %3796 = vmatmul.mubr.bf16.gmra.mrb[0].mxu0 %v3626
    %v3797 = vpop.f32.mrb[0].mxu0
    %v3798 = vadd.f32 %v3665, %v3797
    %v3799 = vpop.f32.mrb[0].mxu0
    %v3800 = vpop.f32.mrb[0].mxu0
    %v3801 = vpop.f32.mrb[0].mxu0
    %3802 = vdwg.mxu0
    %v3803 = vtanh.pop %v3798
    %v3804 = vld [vmem:[#allocation14] sm:$0xff]
    %v3805 = vld [vmem:[#allocation14 + $0x8] sm:$0xff]
    %v3806 = vld [vmem:[#allocation14 + $0x10] sm:$0xff]
    %v3807 = vld [vmem:[#allocation14 + $0x18] sm:$0xff]
    %v3808 = vld [vmem:[#allocation14 + $0x20] sm:$0xff]
    %v3809 = vld [vmem:[#allocation14 + $0x28] sm:$0xff]
    %v3810 = vld [vmem:[#allocation14 + $0x30] sm:$0xff]
    %v3811 = vld [vmem:[#allocation14 + $0x38] sm:$0xff]
    %v3812 = vld [vmem:[#allocation14 + $0x40] sm:$0xff]
    %v3813 = vld [vmem:[#allocation14 + $0x48] sm:$0xff]
    %v3814 = vld [vmem:[#allocation14 + $0x50] sm:$0xff]
    %v3815 = vld [vmem:[#allocation14 + $0x58] sm:$0xff]
    %v3816 = vld [vmem:[#allocation14 + $0x60] sm:$0xff]
    %v3817 = vld [vmem:[#allocation14 + $0x68] sm:$0xff]
    %v3818 = vld [vmem:[#allocation14 + $0x70] sm:$0xff]
    %v3819 = vld [vmem:[#allocation14 + $0x78] sm:$0xff]
    %v3820 = vld [vmem:[#allocation14 + $0x80] sm:$0xff]
    %v3821 = vld [vmem:[#allocation14 + $0x88] sm:$0xff]
    %v3822 = vld [vmem:[#allocation14 + $0x90] sm:$0xff]
    %v3823 = vld [vmem:[#allocation14 + $0x98] sm:$0xff]
    %v3824 = vld [vmem:[#allocation14 + $0xa0] sm:$0xff]
    %v3825 = vld [vmem:[#allocation14 + $0xa8] sm:$0xff]
    %v3826 = vld [vmem:[#allocation14 + $0xb0] sm:$0xff]
    %v3827 = vld [vmem:[#allocation14 + $0xb8] sm:$0xff]
    %v3828 = vld [vmem:[#allocation14 + $0xc0] sm:$0xff]
    %v3829 = vld [vmem:[#allocation14 + $0xc8] sm:$0xff]
    %v3830 = vld [vmem:[#allocation14 + $0xd0] sm:$0xff]
    %v3831 = vld [vmem:[#allocation14 + $0xd8] sm:$0xff]
    %v3832 = vld [vmem:[#allocation14 + $0xe0] sm:$0xff]
    %v3833 = vld [vmem:[#allocation14 + $0xe8] sm:$0xff]
    %v3834 = vld [vmem:[#allocation14 + $0xf0] sm:$0xff]
    %v3835 = vld [vmem:[#allocation14 + $0xf8] sm:$0xff]
    %v3836 = vld [vmem:[#allocation14 + $0x100] sm:$0xff]
    %v3837 = vld [vmem:[#allocation14 + $0x108] sm:$0xff]
    %v3838 = vld [vmem:[#allocation14 + $0x110] sm:$0xff]
    %v3839 = vld [vmem:[#allocation14 + $0x118] sm:$0xff]
    %v3840 = vld [vmem:[#allocation14 + $0x120] sm:$0xff]
    %v3841 = vld [vmem:[#allocation14 + $0x128] sm:$0xff]
    %v3842 = vld [vmem:[#allocation14 + $0x130] sm:$0xff]
    %v3843 = vld [vmem:[#allocation14 + $0x138] sm:$0xff]
    %v3844 = vld [vmem:[#allocation14 + $0x140] sm:$0xff]
    %v3845 = vld [vmem:[#allocation14 + $0x148] sm:$0xff]
    %v3846 = vld [vmem:[#allocation14 + $0x150] sm:$0xff]
    %v3847 = vld [vmem:[#allocation14 + $0x158] sm:$0xff]
    %v3848 = vld [vmem:[#allocation14 + $0x160] sm:$0xff]
    %v3849 = vld [vmem:[#allocation14 + $0x168] sm:$0xff]
    %v3850 = vld [vmem:[#allocation14 + $0x170] sm:$0xff]
    %v3851 = vld [vmem:[#allocation14 + $0x178] sm:$0xff]
    %v3852 = vld [vmem:[#allocation14 + $0x180] sm:$0xff]
    %v3853 = vld [vmem:[#allocation14 + $0x188] sm:$0xff]
    %v3854 = vld [vmem:[#allocation14 + $0x190] sm:$0xff]
    %v3855 = vld [vmem:[#allocation14 + $0x198] sm:$0xff]
    %v3856 = vld [vmem:[#allocation14 + $0x1a0] sm:$0xff]
    %v3857 = vld [vmem:[#allocation14 + $0x1a8] sm:$0xff]
    %v3858 = vld [vmem:[#allocation14 + $0x1b0] sm:$0xff]
    %v3859 = vld [vmem:[#allocation14 + $0x1b8] sm:$0xff]
    %v3860 = vld [vmem:[#allocation14 + $0x1c0] sm:$0xff]
    %v3861 = vld [vmem:[#allocation14 + $0x1c8] sm:$0xff]
    %v3862 = vld [vmem:[#allocation14 + $0x1d0] sm:$0xff]
    %v3863 = vld [vmem:[#allocation14 + $0x1d8] sm:$0xff]
    %v3864 = vld [vmem:[#allocation14 + $0x1e0] sm:$0xff]
    %v3865 = vld [vmem:[#allocation14 + $0x1e8] sm:$0xff]
    %v3866 = vld [vmem:[#allocation14 + $0x1f0] sm:$0xff]
    %v3867 = vld [vmem:[#allocation14 + $0x1f8] sm:$0xff]
    %v3868 = vld [vmem:[#allocation15] sm:$0x3]
    %v3870 = vlaneseq
    %v3871 = vshrl.u32 %v3870, 7
    %v3872 = vsub.s32 0, %v3871
    %v3873 = vrot.slane %v3868, %v3872
    %v3874 = vlaneseq
    %v3875 = vshrl.u32 %v3874, 7
    %v3876 = vsub.s32 1, %v3875
    %v3877 = vrot.slane %v3868, %v3876
    %v3944 = vunpack.c.l.b16 %v3804
    %v3945 = vunpack.c.h.b16 %v3804
    %v3946 = vunpack.c.l.b16 %v3805
    %v3947 = vunpack.c.h.b16 %v3805
    %v3948 = vunpack.c.l.b16 %v3806
    %v3949 = vunpack.c.h.b16 %v3806
    %v3950 = vunpack.c.l.b16 %v3807
    %v3951 = vunpack.c.h.b16 %v3807
    %v3952 = vunpack.c.l.b16 %v3808
    %v3953 = vunpack.c.h.b16 %v3808
    %v3954 = vunpack.c.l.b16 %v3809
    %v3955 = vunpack.c.h.b16 %v3809
    %v3956 = vunpack.c.l.b16 %v3810
    %v3957 = vunpack.c.h.b16 %v3810
    %v3958 = vunpack.c.l.b16 %v3811
    %v3959 = vunpack.c.h.b16 %v3811
    %v3960 = vunpack.c.l.b16 %v3812
    %v3961 = vunpack.c.h.b16 %v3812
    %v3962 = vunpack.c.l.b16 %v3813
    %v3963 = vunpack.c.h.b16 %v3813
    %v3964 = vunpack.c.l.b16 %v3814
    %v3965 = vunpack.c.h.b16 %v3814
    %v3966 = vunpack.c.l.b16 %v3815
    %v3967 = vunpack.c.h.b16 %v3815
    %v3968 = vunpack.c.l.b16 %v3816
    %v3969 = vunpack.c.h.b16 %v3816
    %v3970 = vunpack.c.l.b16 %v3817
    %v3971 = vunpack.c.h.b16 %v3817
    %v3972 = vunpack.c.l.b16 %v3818
    %v3973 = vunpack.c.h.b16 %v3818
    %v3974 = vunpack.c.l.b16 %v3819
    %v3975 = vunpack.c.h.b16 %v3819
    %v3976 = vunpack.c.l.b16 %v3820
    %v3977 = vunpack.c.h.b16 %v3820
    %v3978 = vunpack.c.l.b16 %v3821
    %v3979 = vunpack.c.h.b16 %v3821
    %v3980 = vunpack.c.l.b16 %v3822
    %v3981 = vunpack.c.h.b16 %v3822
    %v3982 = vunpack.c.l.b16 %v3823
    %v3983 = vunpack.c.h.b16 %v3823
    %v3984 = vunpack.c.l.b16 %v3824
    %v3985 = vunpack.c.h.b16 %v3824
    %v3986 = vunpack.c.l.b16 %v3825
    %v3987 = vunpack.c.h.b16 %v3825
    %v3988 = vunpack.c.l.b16 %v3826
    %v3989 = vunpack.c.h.b16 %v3826
    %v3990 = vunpack.c.l.b16 %v3827
    %v3991 = vunpack.c.h.b16 %v3827
    %v3992 = vunpack.c.l.b16 %v3828
    %v3993 = vunpack.c.h.b16 %v3828
    %v3994 = vunpack.c.l.b16 %v3829
    %v3995 = vunpack.c.h.b16 %v3829
    %v3996 = vunpack.c.l.b16 %v3830
    %v3997 = vunpack.c.h.b16 %v3830
    %v3998 = vunpack.c.l.b16 %v3831
    %v3999 = vunpack.c.h.b16 %v3831
    %v4000 = vunpack.c.l.b16 %v3832
    %v4001 = vunpack.c.h.b16 %v3832
    %v4002 = vunpack.c.l.b16 %v3833
    %v4003 = vunpack.c.h.b16 %v3833
    %v4004 = vunpack.c.l.b16 %v3834
    %v4005 = vunpack.c.h.b16 %v3834
    %v4006 = vunpack.c.l.b16 %v3835
    %v4007 = vunpack.c.h.b16 %v3835
    %v4008 = vunpack.c.l.b16 %v3836
    %v4009 = vunpack.c.h.b16 %v3836
    %v4010 = vunpack.c.l.b16 %v3837
    %v4011 = vunpack.c.h.b16 %v3837
    %v4012 = vunpack.c.l.b16 %v3838
    %v4013 = vunpack.c.h.b16 %v3838
    %v4014 = vunpack.c.l.b16 %v3839
    %v4015 = vunpack.c.h.b16 %v3839
    %v4016 = vunpack.c.l.b16 %v3840
    %v4017 = vunpack.c.h.b16 %v3840
    %v4018 = vunpack.c.l.b16 %v3841
    %v4019 = vunpack.c.h.b16 %v3841
    %v4020 = vunpack.c.l.b16 %v3842
    %v4021 = vunpack.c.h.b16 %v3842
    %v4022 = vunpack.c.l.b16 %v3843
    %v4023 = vunpack.c.h.b16 %v3843
    %v4024 = vunpack.c.l.b16 %v3844
    %v4025 = vunpack.c.h.b16 %v3844
    %v4026 = vunpack.c.l.b16 %v3845
    %v4027 = vunpack.c.h.b16 %v3845
    %v4028 = vunpack.c.l.b16 %v3846
    %v4029 = vunpack.c.h.b16 %v3846
    %v4030 = vunpack.c.l.b16 %v3847
    %v4031 = vunpack.c.h.b16 %v3847
    %v4032 = vunpack.c.l.b16 %v3848
    %v4033 = vunpack.c.h.b16 %v3848
    %v4034 = vunpack.c.l.b16 %v3849
    %v4035 = vunpack.c.h.b16 %v3849
    %v4036 = vunpack.c.l.b16 %v3850
    %v4037 = vunpack.c.h.b16 %v3850
    %v4038 = vunpack.c.l.b16 %v3851
    %v4039 = vunpack.c.h.b16 %v3851
    %v4040 = vunpack.c.l.b16 %v3852
    %v4041 = vunpack.c.h.b16 %v3852
    %v4042 = vunpack.c.l.b16 %v3853
    %v4043 = vunpack.c.h.b16 %v3853
    %v4044 = vunpack.c.l.b16 %v3854
    %v4045 = vunpack.c.h.b16 %v3854
    %v4046 = vunpack.c.l.b16 %v3855
    %v4047 = vunpack.c.h.b16 %v3855
    %v4048 = vunpack.c.l.b16 %v3856
    %v4049 = vunpack.c.h.b16 %v3856
    %v4050 = vunpack.c.l.b16 %v3857
    %v4051 = vunpack.c.h.b16 %v3857
    %v4052 = vunpack.c.l.b16 %v3858
    %v4053 = vunpack.c.h.b16 %v3858
    %v4054 = vunpack.c.l.b16 %v3859
    %v4055 = vunpack.c.h.b16 %v3859
    %v4056 = vunpack.c.l.b16 %v3860
    %v4057 = vunpack.c.h.b16 %v3860
    %v4058 = vunpack.c.l.b16 %v3861
    %v4059 = vunpack.c.h.b16 %v3861
    %v4060 = vunpack.c.l.b16 %v3862
    %v4061 = vunpack.c.h.b16 %v3862
    %v4062 = vunpack.c.l.b16 %v3863
    %v4063 = vunpack.c.h.b16 %v3863
    %v4064 = vunpack.c.l.b16 %v3864
    %v4065 = vunpack.c.h.b16 %v3864
    %v4066 = vunpack.c.l.b16 %v3865
    %v4067 = vunpack.c.h.b16 %v3865
    %v4068 = vunpack.c.l.b16 %v3866
    %v4069 = vunpack.c.h.b16 %v3866
    %v4070 = vunpack.c.l.b16 %v3867
    %v4071 = vunpack.c.h.b16 %v3867
    %v4072 = vpack.c.b16 %v3946, %v3944
    %v4073 = vpack.c.b16 %v3947, %v3945
    %v4074 = vpack.c.b16 %v3950, %v3948
    %v4075 = vpack.c.b16 %v3951, %v3949
    %v4076 = vpack.c.b16 %v3954, %v3952
    %v4077 = vpack.c.b16 %v3955, %v3953
    %v4078 = vpack.c.b16 %v3958, %v3956
    %v4079 = vpack.c.b16 %v3959, %v3957
    %v4080 = vpack.c.b16 %v3962, %v3960
    %v4081 = vpack.c.b16 %v3963, %v3961
    %v4082 = vpack.c.b16 %v3966, %v3964
    %v4083 = vpack.c.b16 %v3967, %v3965
    %v4084 = vpack.c.b16 %v3970, %v3968
    %v4085 = vpack.c.b16 %v3971, %v3969
    %v4086 = vpack.c.b16 %v3974, %v3972
    %v4087 = vpack.c.b16 %v3975, %v3973
    %v4088 = vpack.c.b16 %v3978, %v3976
    %v4089 = vpack.c.b16 %v3979, %v3977
    %v4090 = vpack.c.b16 %v3982, %v3980
    %v4091 = vpack.c.b16 %v3983, %v3981
    %v4092 = vpack.c.b16 %v3986, %v3984
    %v4093 = vpack.c.b16 %v3987, %v3985
    %v4094 = vpack.c.b16 %v3990, %v3988
    %v4095 = vpack.c.b16 %v3991, %v3989
    %v4096 = vpack.c.b16 %v3994, %v3992
    %v4097 = vpack.c.b16 %v3995, %v3993
    %v4098 = vpack.c.b16 %v3998, %v3996
    %v4099 = vpack.c.b16 %v3999, %v3997
    %v4100 = vpack.c.b16 %v4002, %v4000
    %v4101 = vpack.c.b16 %v4003, %v4001
    %v4102 = vpack.c.b16 %v4006, %v4004
    %v4103 = vpack.c.b16 %v4007, %v4005
    %v4104 = vpack.c.b16 %v4010, %v4008
    %v4105 = vpack.c.b16 %v4011, %v4009
    %v4106 = vpack.c.b16 %v4014, %v4012
    %v4107 = vpack.c.b16 %v4015, %v4013
    %v4108 = vpack.c.b16 %v4018, %v4016
    %v4109 = vpack.c.b16 %v4019, %v4017
    %v4110 = vpack.c.b16 %v4022, %v4020
    %v4111 = vpack.c.b16 %v4023, %v4021
    %v4112 = vpack.c.b16 %v4026, %v4024
    %v4113 = vpack.c.b16 %v4027, %v4025
    %v4114 = vpack.c.b16 %v4030, %v4028
    %v4115 = vpack.c.b16 %v4031, %v4029
    %v4116 = vpack.c.b16 %v4034, %v4032
    %v4117 = vpack.c.b16 %v4035, %v4033
    %v4118 = vpack.c.b16 %v4038, %v4036
    %v4119 = vpack.c.b16 %v4039, %v4037
    %v4120 = vpack.c.b16 %v4042, %v4040
    %v4121 = vpack.c.b16 %v4043, %v4041
    %v4122 = vpack.c.b16 %v4046, %v4044
    %v4123 = vpack.c.b16 %v4047, %v4045
    %v4124 = vpack.c.b16 %v4050, %v4048
    %v4125 = vpack.c.b16 %v4051, %v4049
    %v4126 = vpack.c.b16 %v4054, %v4052
    %v4127 = vpack.c.b16 %v4055, %v4053
    %v4128 = vpack.c.b16 %v4058, %v4056
    %v4129 = vpack.c.b16 %v4059, %v4057
    %v4130 = vpack.c.b16 %v4062, %v4060
    %v4131 = vpack.c.b16 %v4063, %v4061
    %v4132 = vpack.c.b16 %v4066, %v4064
    %v4133 = vpack.c.b16 %v4067, %v4065
    %v4134 = vpack.c.b16 %v4070, %v4068
    %v4135 = vpack.c.b16 %v4071, %v4069
    %4200 = vmatprep.subr.bf16.mxu0 %v4073
    %4201 = vmatpush1.bf16.msra.mxu0 %v4072
    %4202 = vmatprep.subr.bf16.mxu0 %v4075
    %4203 = vmatpush1.bf16.msra.mxu0 %v4074
    %4204 = vmatprep.subr.bf16.mxu0 %v4077
    %4205 = vmatpush1.bf16.msra.mxu0 %v4076
    %4206 = vmatprep.subr.bf16.mxu0 %v4079
    %4207 = vmatpush1.bf16.msra.mxu0 %v4078
    %4208 = vmatprep.subr.bf16.mxu0 %v4081
    %4209 = vmatpush1.bf16.msra.mxu0 %v4080
    %4210 = vmatprep.subr.bf16.mxu0 %v4083
    %4211 = vmatpush1.bf16.msra.mxu0 %v4082
    %4212 = vmatprep.subr.bf16.mxu0 %v4085
    %4213 = vmatpush1.bf16.msra.mxu0 %v4084
    %4214 = vmatprep.subr.bf16.mxu0 %v4087
    %4215 = vmatpush1.bf16.msra.mxu0 %v4086
    %4216 = vmatprep.subr.bf16.mxu0 %v4089
    %4217 = vmatpush1.bf16.msra.mxu0 %v4088
    %4218 = vmatprep.subr.bf16.mxu0 %v4091
    %4219 = vmatpush1.bf16.msra.mxu0 %v4090
    %4220 = vmatprep.subr.bf16.mxu0 %v4093
    %4221 = vmatpush1.bf16.msra.mxu0 %v4092
    %4222 = vmatprep.subr.bf16.mxu0 %v4095
    %4223 = vmatpush1.bf16.msra.mxu0 %v4094
    %4224 = vmatprep.subr.bf16.mxu0 %v4097
    %4225 = vmatpush1.bf16.msra.mxu0 %v4096
    %4226 = vmatprep.subr.bf16.mxu0 %v4099
    %4227 = vmatpush1.bf16.msra.mxu0 %v4098
    %4228 = vmatprep.subr.bf16.mxu0 %v4101
    %4229 = vmatpush1.bf16.msra.mxu0 %v4100
    %4230 = vmatprep.subr.bf16.mxu0 %v4103
    %4231 = vmatpush1.bf16.msra.mxu0 %v4102
    %4232 = vmatprep.mubr.bf16.mxu0 %v3127
    %4233 = vmatmul.mubr.bf16.gmra.mrb[0].mxu0 %v3126
    %v4234 = vpop.f32.mrb[0].mxu0
    %v4235 = vadd.f32 %v3873, %v4234
    %v4236 = vpop.f32.mrb[0].mxu0
    %v4237 = vadd.f32 %v3877, %v4236
    %v4238 = vpop.f32.mrb[0].mxu0
    %v4239 = vpop.f32.mrb[0].mxu0
    %4240 = vdwg.mxu0
    %4241 = vmatprep.subr.bf16.mxu0 %v4105
    %4242 = vmatpush1.bf16.msra.mxu0 %v4104
    %4243 = vmatprep.subr.bf16.mxu0 %v4107
    %4244 = vmatpush1.bf16.msra.mxu0 %v4106
    %4245 = vmatprep.subr.bf16.mxu0 %v4109
    %4246 = vmatpush1.bf16.msra.mxu0 %v4108
    %4247 = vmatprep.subr.bf16.mxu0 %v4111
    %4248 = vmatpush1.bf16.msra.mxu0 %v4110
    %4249 = vmatprep.subr.bf16.mxu0 %v4113
    %4250 = vmatpush1.bf16.msra.mxu0 %v4112
    %4251 = vmatprep.subr.bf16.mxu0 %v4115
    %4252 = vmatpush1.bf16.msra.mxu0 %v4114
    %4253 = vmatprep.subr.bf16.mxu0 %v4117
    %4254 = vmatpush1.bf16.msra.mxu0 %v4116
    %4255 = vmatprep.subr.bf16.mxu0 %v4119
    %4256 = vmatpush1.bf16.msra.mxu0 %v4118
    %4257 = vmatprep.subr.bf16.mxu0 %v4121
    %4258 = vmatpush1.bf16.msra.mxu0 %v4120
    %4259 = vmatprep.subr.bf16.mxu0 %v4123
    %4260 = vmatpush1.bf16.msra.mxu0 %v4122
    %4261 = vmatprep.subr.bf16.mxu0 %v4125
    %4262 = vmatpush1.bf16.msra.mxu0 %v4124
    %4263 = vmatprep.subr.bf16.mxu0 %v4127
    %4264 = vmatpush1.bf16.msra.mxu0 %v4126
    %4265 = vmatprep.subr.bf16.mxu0 %v4129
    %4266 = vmatpush1.bf16.msra.mxu0 %v4128
    %4267 = vmatprep.subr.bf16.mxu0 %v4131
    %4268 = vmatpush1.bf16.msra.mxu0 %v4130
    %4269 = vmatprep.subr.bf16.mxu0 %v4133
    %4270 = vmatpush1.bf16.msra.mxu0 %v4132
    %4271 = vmatprep.subr.bf16.mxu0 %v4135
    %4272 = vmatpush1.bf16.msra.mxu0 %v4134
    %4273 = vmatprep.mubr.bf16.mxu0 %v3129
    %4274 = vmatmul.mubr.bf16.gmra.mrb[0].mxu0 %v3128
    %v4275 = vpop.f32.mrb[0].mxu0
    %v4276 = vadd.f32 %v4235, %v4275
    %v4277 = vpop.f32.mrb[0].mxu0
    %v4278 = vadd.f32 %v4237, %v4277
    %v4279 = vpop.f32.mrb[0].mxu0
    %v4280 = vpop.f32.mrb[0].mxu0
    %4281 = vdwg.mxu0
    %v4282 = vpack.c.bf16 %v4276, %v4276
    %v4283 = vpack.c.bf16 %v4278, %v4278
    %v4284 = vmul.bf16 %v4282, 1056980736
    %v4285 = vmul.bf16 %v4283, 1056980736
    %v4286 = vmul.bf16 %v4282, 1027030327
    %v4287 = vmul.bf16 %v4283, 1027030327
    %v4288 = vmul.bf16 %v4286, %v4282
    %v4289 = vmul.bf16 %v4287, %v4283
    %v4290 = vmul.bf16 %v4288, %v4282
    %v4291 = vmul.bf16 %v4289, %v4283
    %v4292 = vadd.bf16 %v4282, %v4290
    %v4293 = vadd.bf16 %v4283, %v4291
    %v4294 = vmul.bf16 %v4292, 1061961548
    %v4295 = vmul.bf16 %v4293, 1061961548
    %v4296 = vtanh.bf16.pop %v4294
    %v4297 = vtanh.bf16.pop %v4295
    %v4298 = vadd.bf16 %v4296, 1065369472
    %v4299 = vadd.bf16 %v4297, 1065369472
    %v4300 = vmul.bf16 %v4284, %v4298
    %v4301 = vmul.bf16 %v4285, %v4299
    %v4302 = vld [vmem:[#allocation17] sm:$0xf]
    %v4303 = vld [vmem:[#allocation17 + $0x4] sm:$0xf]
    %v4304 = vld [vmem:[#allocation17 + $0x8] sm:$0xf]
    %v4305 = vld [vmem:[#allocation17 + $0xc] sm:$0xf]
    %v4306 = vld [vmem:[#allocation17 + $0x10] sm:$0xf]
    %v4307 = vld [vmem:[#allocation17 + $0x14] sm:$0xf]
    %v4308 = vld [vmem:[#allocation17 + $0x18] sm:$0xf]
    %v4309 = vld [vmem:[#allocation17 + $0x1c] sm:$0xf]
    %v4310 = vld [vmem:[#allocation17 + $0x20] sm:$0xf]
    %v4311 = vld [vmem:[#allocation17 + $0x24] sm:$0xf]
    %v4312 = vld [vmem:[#allocation17 + $0x28] sm:$0xf]
    %v4313 = vld [vmem:[#allocation17 + $0x2c] sm:$0xf]
    %v4314 = vld [vmem:[#allocation17 + $0x30] sm:$0xf]
    %v4315 = vld [vmem:[#allocation17 + $0x34] sm:$0xf]
    %v4316 = vld [vmem:[#allocation17 + $0x38] sm:$0xf]
    %v4317 = vld [vmem:[#allocation17 + $0x3c] sm:$0xf]
    %v4318 = vld [vmem:[#allocation17 + $0x40] sm:$0xf]
    %v4319 = vld [vmem:[#allocation17 + $0x44] sm:$0xf]
    %v4320 = vld [vmem:[#allocation17 + $0x48] sm:$0xf]
    %v4321 = vld [vmem:[#allocation17 + $0x4c] sm:$0xf]
    %v4322 = vld [vmem:[#allocation17 + $0x50] sm:$0xf]
    %v4323 = vld [vmem:[#allocation17 + $0x54] sm:$0xf]
    %v4324 = vld [vmem:[#allocation17 + $0x58] sm:$0xf]
    %v4325 = vld [vmem:[#allocation17 + $0x5c] sm:$0xf]
    %v4326 = vld [vmem:[#allocation17 + $0x60] sm:$0xf]
    %v4327 = vld [vmem:[#allocation17 + $0x64] sm:$0xf]
    %v4328 = vld [vmem:[#allocation17 + $0x68] sm:$0xf]
    %v4329 = vld [vmem:[#allocation17 + $0x6c] sm:$0xf]
    %v4330 = vld [vmem:[#allocation17 + $0x70] sm:$0xf]
    %v4331 = vld [vmem:[#allocation17 + $0x74] sm:$0xf]
    %v4332 = vld [vmem:[#allocation17 + $0x78] sm:$0xf]
    %v4333 = vld [vmem:[#allocation17 + $0x7c] sm:$0xf]
    %v4334 = vld [vmem:[#allocation18] sm:$0x1]
    %v4336 = vlaneseq
    %v4337 = vshrl.u32 %v4336, 7
    %v4338 = vsub.s32 0, %v4337
    %v4339 = vrot.slane %v4334, %v4338
    %v4373 = vunpack.c.l.b16 %v4302
    %v4374 = vunpack.c.l.b16 %v4303
    %v4375 = vunpack.c.l.b16 %v4304
    %v4376 = vunpack.c.l.b16 %v4305
    %v4377 = vunpack.c.l.b16 %v4306
    %v4378 = vunpack.c.l.b16 %v4307
    %v4379 = vunpack.c.l.b16 %v4308
    %v4380 = vunpack.c.l.b16 %v4309
    %v4381 = vunpack.c.l.b16 %v4310
    %v4382 = vunpack.c.l.b16 %v4311
    %v4383 = vunpack.c.l.b16 %v4312
    %v4384 = vunpack.c.l.b16 %v4313
    %v4385 = vunpack.c.l.b16 %v4314
    %v4386 = vunpack.c.l.b16 %v4315
    %v4387 = vunpack.c.l.b16 %v4316
    %v4388 = vunpack.c.l.b16 %v4317
    %v4389 = vunpack.c.l.b16 %v4318
    %v4390 = vunpack.c.l.b16 %v4319
    %v4391 = vunpack.c.l.b16 %v4320
    %v4392 = vunpack.c.l.b16 %v4321
    %v4393 = vunpack.c.l.b16 %v4322
    %v4394 = vunpack.c.l.b16 %v4323
    %v4395 = vunpack.c.l.b16 %v4324
    %v4396 = vunpack.c.l.b16 %v4325
    %v4397 = vunpack.c.l.b16 %v4326
    %v4398 = vunpack.c.l.b16 %v4327
    %v4399 = vunpack.c.l.b16 %v4328
    %v4400 = vunpack.c.l.b16 %v4329
    %v4401 = vunpack.c.l.b16 %v4330
    %v4402 = vunpack.c.l.b16 %v4331
    %v4403 = vunpack.c.l.b16 %v4332
    %v4404 = vunpack.c.l.b16 %v4333
    %v4405 = vpack.c.b16 %v4374, %v4373
    %v4406 = vpack.c.b16 %v4376, %v4375
    %v4407 = vpack.c.b16 %v4378, %v4377
    %v4408 = vpack.c.b16 %v4380, %v4379
    %v4409 = vpack.c.b16 %v4382, %v4381
    %v4410 = vpack.c.b16 %v4384, %v4383
    %v4411 = vpack.c.b16 %v4386, %v4385
    %v4412 = vpack.c.b16 %v4388, %v4387
    %v4413 = vpack.c.b16 %v4390, %v4389
    %v4414 = vpack.c.b16 %v4392, %v4391
    %v4415 = vpack.c.b16 %v4394, %v4393
    %v4416 = vpack.c.b16 %v4396, %v4395
    %v4417 = vpack.c.b16 %v4398, %v4397
    %v4418 = vpack.c.b16 %v4400, %v4399
    %v4419 = vpack.c.b16 %v4402, %v4401
    %v4420 = vpack.c.b16 %v4404, %v4403
    %4437 = vmatprep.subr.bf16.mxu0 0
    %4438 = vmatpush1.bf16.msra.mxu0 %v4405
    %4439 = vmatprep.subr.bf16.mxu0 0
    %4440 = vmatpush1.bf16.msra.mxu0 %v4406
    %4441 = vmatprep.subr.bf16.mxu0 0
    %4442 = vmatpush1.bf16.msra.mxu0 %v4407
    %4443 = vmatprep.subr.bf16.mxu0 0
    %4444 = vmatpush1.bf16.msra.mxu0 %v4408
    %4445 = vmatprep.subr.bf16.mxu0 0
    %4446 = vmatpush1.bf16.msra.mxu0 %v4409
    %4447 = vmatprep.subr.bf16.mxu0 0
    %4448 = vmatpush1.bf16.msra.mxu0 %v4410
    %4449 = vmatprep.subr.bf16.mxu0 0
    %4450 = vmatpush1.bf16.msra.mxu0 %v4411
    %4451 = vmatprep.subr.bf16.mxu0 0
    %4452 = vmatpush1.bf16.msra.mxu0 %v4412
    %4453 = vmatprep.subr.bf16.mxu0 0
    %4454 = vmatpush1.bf16.msra.mxu0 %v4413
    %4455 = vmatprep.subr.bf16.mxu0 0
    %4456 = vmatpush1.bf16.msra.mxu0 %v4414
    %4457 = vmatprep.subr.bf16.mxu0 0
    %4458 = vmatpush1.bf16.msra.mxu0 %v4415
    %4459 = vmatprep.subr.bf16.mxu0 0
    %4460 = vmatpush1.bf16.msra.mxu0 %v4416
    %4461 = vmatprep.subr.bf16.mxu0 0
    %4462 = vmatpush1.bf16.msra.mxu0 %v4417
    %4463 = vmatprep.subr.bf16.mxu0 0
    %4464 = vmatpush1.bf16.msra.mxu0 %v4418
    %4465 = vmatprep.subr.bf16.mxu0 0
    %4466 = vmatpush1.bf16.msra.mxu0 %v4419
    %4467 = vmatprep.subr.bf16.mxu0 0
    %4468 = vmatpush1.bf16.msra.mxu0 %v4420
    %4469 = vmatprep.mubr.bf16.mxu0 %v4301
    %4470 = vmatmul.mubr.bf16.gmra.mrb[0].mxu0 %v4300
    %v4471 = vpop.f32.mrb[0].mxu0
    %v4472 = vadd.f32 %v4339, %v4471
    %v4473 = vpop.f32.mrb[0].mxu0
    %v4474 = vpop.f32.mrb[0].mxu0
    %v4475 = vpop.f32.mrb[0].mxu0
    %4476 = vdwg.mxu0
    %v4477 = vtanh.pop %v4472
    %s4478 = sld [smem:[#allocation21]]
    %s4479 = sld [smem:[#allocation21 + $0x1]]
    %v4480 = vld [vmem:[#allocation20] sm:$0x1]
    %v4481 = vstv %s4478
    %v4482 = vmul.f32 %v4481, %v3803
    %v4484 = vlaneseq
    %v4485 = vshrl.u32 %v4484, 7
    %v4486 = vsub.s32 0, %v4485
    %v4487 = vrot.slane %v4480, %v4486
    %v4489 = vadd.f32 %v4487, %v4482
    %v4490 = vmax.f32 %v4489, 5e-05
    %v4491 = vmin.f32 %v4490, 0.05
    %4492 = vst [vmem:[%s13] sm:$0xff] %v4491
    %v4493 = vstv %s4479
    %v4494 = vmul.f32 %v4493, %v4477
    %v4495 = vadd.f32 %v4494, 7.5
    %v4496 = vmax.f32 %v4495, 3.0
    %v4497 = vmin.f32 %v4496, 15.0
    %4498 = vst [vmem:[%s13 + $0x8] sm:$0xff] %v4497
    %v4499 = vand.u32 2147483647, %v3803
    %v4500 = vadd.f32 %v4499, 1e-08
    %v4501 = vlog2.pop %v4500
    %v4502 = vmul.f32 %v4501, 0.6931472
    %v4503 = vand.u32 2147483647, %v4477
    %v4504 = vadd.f32 %v4503, 1e-08
    %v4505 = vlog2.pop %v4504
    %v4506 = vmul.f32 %v4505, 0.6931472
    %v4507 = vadd.f32 %v4502, %v4506
    %v4508 = vlaneseq
    %v4509 = vand.u32 %v4508, 127
    %vm4510 = vcmp.lt.s32.totalorder %v4509, 20
    %v4511 = vsel %vm4510, %v4507, 0.0
    %4512 = vadd.xlane.f32.xlu0 %v4511
    %v4513 = vpop.xlane.xlu0 %4512
    %v4514 = vrot.slane %v4513, 4
    %v4515 = vadd.f32 %v4513, %v4514
    %v4516 = vrot.slane %v4515, 2
    %v4517 = vadd.f32 %v4515, %v4516
    %v4518 = vrot.slane %v4517, 1
    %v4519 = vadd.f32 %v4517, %v4518
    %s4520 = vtos %v4519
    %s4521 = scalar_lea.smem [#allocation22], 0
    %4522 = sst [smem:[%s4521]] %s4520
    %p4523 = scmp.eq.s32.totalorder 0, 0
    // Predicated region
    $region102: #{scheduler_policy_forward.1} parent=1 // pred_check
      %p4524 = pneg %p4523
    $region103: #{scheduler_policy_forward.1} parent=1 // pred_check_branch
      %4526 = sbr.rel (%p4524) target = $region105
    $region104: #{scheduler_policy_forward.1} parent=1 // pred_region
      %v4527 = vlaneseq
      %v4528 = vshrl.u32 %v4527, 7
      %s4529 = smul.u32 0, 8
      %v4530 = vstv %s4529
      %v4531 = vadd.s32 %v4528, %v4530
      %vm4532 = vcmp.lt.s32.totalorder %v4531, 2
      %v4533 = vsel %vm4532, %v4511, 0.0
      %4534 = vadd.xlane.f32.xlu0 %v4533
      %v4535 = vpop.xlane.xlu0 %4534
      %v4536 = vrot.slane %v4535, 4
      %v4537 = vadd.f32 %v4535, %v4536
      %v4538 = vrot.slane %v4537, 2
      %v4539 = vadd.f32 %v4537, %v4538
      %v4540 = vrot.slane %v4539, 1
      %v4541 = vadd.f32 %v4539, %v4540
      %s4542 = vtos %v4541
      %4543 = sst [smem:[%s4521]] %s4542
    $region105: #{scheduler_policy_forward.1} parent=1 // pred_fallthru
      _
    // Predicated region
    $region106: #{scheduler_policy_forward.1} parent=1 // pred_check
      _
    $region107: #{scheduler_policy_forward.1} parent=1 // pred_check_branch
      %4545 = sbr.rel (0) target = $region109
    $region108: #{scheduler_policy_forward.1} parent=1 // pred_region
      _
    $region109: #{scheduler_policy_forward.1} parent=1 // pred_fallthru
      _
    // Predicated region
    $region110: #{scheduler_policy_forward.1} parent=1 // pred_check
      _
    $region111: #{scheduler_policy_forward.1} parent=1 // pred_check_branch
      %4547 = sbr.rel (0) target = $region113
    $region112: #{scheduler_policy_forward.1} parent=1 // pred_region
      %s4549 = ssub.s32 16, 16
      %4550 = vsyncadd [#allocation5], %s4549
      %4553 = dma.smem_to_hbm [#allocation22], 16, %s14, [#allocation5]
    $region113: #{scheduler_policy_forward.1} parent=1 // pred_fallthru
      _
    // Predicated region
    $region114: #{scheduler_policy_forward.1} parent=1 // pred_check
      _
    $region115: #{scheduler_policy_forward.1} parent=1 // pred_check_branch
      %4555 = sbr.rel (0) target = $region117
    $region116: #{scheduler_policy_forward.1} parent=1 // pred_region
      _
    $region117: #{scheduler_policy_forward.1} parent=1 // pred_fallthru
      _
    // Predicated region
    $region118: #{scheduler_policy_forward.1} parent=1 // pred_check
      _
    $region119: #{scheduler_policy_forward.1} parent=1 // pred_check_branch
      %4557 = sbr.rel (0) target = $region121
    $region120: #{scheduler_policy_forward.1} parent=1 // pred_region
      %4558 = dma.done [#allocation5], 16
    $region121: #{scheduler_policy_forward.1} parent=1 // pred_fallthru
      _
    %4559 = sfence
    %4560 = vsyncpa [#allocation3], 1
    %4561 = vsyncpa [#allocation7], 1
    %4562 = vsyncpa [#allocation10], 1
    %4563 = vsyncpa [#allocation13], 1
    %4564 = vsyncpa [#allocation16], 1
    %4565 = vsyncpa [#allocation19], 1
    %4566 = vsyncpa [#allocation4], 1
    %4567 = vsyncpa [#allocation5], 1

</llo_original>
